<compile_context>
chip_gen: v7x
topology: tpu7x:2x2x1
jax: 0.10.0
libtpu: 0.0.40
codegen_flags: <defaults>
</compile_context>

<pallas_src>
import math
from functools import partial

import jax
import jax.numpy as jnp
from jax.experimental import pallas as pl
from jax.experimental.pallas import tpu as pltpu

PAD_ITEM = 10535


# ----------------------------- config ---------------------------------------
class Cfg:
    batch_size = 2
    seq_len = 4
    basket_size = 3
    embedding_dim = 16            # == in_dim == n_hid (required by cat(ori_emb, gnn_emb))
    n_hid = 16
    dynamic_dim = 8
    hidden_dim = 2 * 16 + 2 * 8   # = 48 : cat(item_emb(2*emb), pos(dyn), freq(dyn))
    num_position = 6
    num_frequency = 6
    num_types = 2
    num_relations = 2
    n_heads = 2                   # HGT heads (d_k = 8)
    n_layers = 2                  # HGT layers
    enc_heads = 4                 # Encoder(hidden_dim, 4, dropout, hidden_dim, 3)
    enc_layers = 3
    rnn_layer_num = 1             # rnn_type == 'GRU', basket_pool_type == 'avg'
    rte_max_len = 240


CFG = Cfg()


# ----------------------------- Pallas: Linear --------------------------------
def _linear_kernel(x_ref, w_ref, b_ref, o_ref):
    o_ref[...] = (jnp.dot(x_ref[...].astype(jnp.bfloat16),
                          w_ref[...].astype(jnp.bfloat16),
                          preferred_element_type=jnp.float32)
                  + b_ref[...]).astype(o_ref.dtype)


def linear_pallas(x, w, b):
    """y = x @ w + b ; x:[M,K], w:[K,N], b:[N]. Single whole-array block (M is tiny)."""
    M, _ = x.shape
    N = w.shape[1]
    return pl.pallas_call(
        _linear_kernel,
        out_shape=jax.ShapeDtypeStruct((M, N), jnp.float32),
    )(x, w, b.reshape(1, N))


# ----------------------------- Pallas: fused encoder layer --------------------
def _ln(x, g, b, eps=1e-5):
    mu = jnp.mean(x, axis=-1, keepdims=True)
    var = jnp.mean((x - mu) ** 2, axis=-1, keepdims=True)
    return (x - mu) * jax.lax.rsqrt(var + eps) * g + b


def _enc_layer_kernel(x_ref, wqkv_ref, bqkv_ref, wo_ref, bo_ref,
                      ln1g_ref, ln1b_ref, w1_ref, b1_ref, w2_ref, b2_ref,
                      ln2g_ref, ln2b_ref, o_ref, *, n_heads):
    # TODO(synk): the `Encoder` class is not provided in the source; a standard
    # post-LN transformer encoder layer (MHA + FFN, no pad masking) is assumed.
    x = x_ref[0].astype(jnp.float32)                              # [T, D]
    T, D = x.shape
    dh = D // n_heads
    scale = 1.0 / math.sqrt(dh)

    # fused QKV projection -> lane-dense [T, 3D]
    qkv = (jnp.dot(x.astype(jnp.bfloat16), wqkv_ref[...].astype(jnp.bfloat16),
                   preferred_element_type=jnp.float32) + bqkv_ref[...])

    heads = []
    for h in range(n_heads):                                      # static unroll (H=4)
        qh = qkv[:, h * dh:(h + 1) * dh]
        kh = qkv[:, D + h * dh:D + (h + 1) * dh]
        vh = qkv[:, 2 * D + h * dh:2 * D + (h + 1) * dh]
        s = jnp.dot(qh.astype(jnp.bfloat16), kh.astype(jnp.bfloat16).T,
                    preferred_element_type=jnp.float32) * scale
        s = s - jnp.max(s, axis=-1, keepdims=True)
        p = jnp.exp(s)
        p = p / jnp.sum(p, axis=-1, keepdims=True)
        heads.append(jnp.dot(p.astype(jnp.bfloat16), vh.astype(jnp.bfloat16),
                             preferred_element_type=jnp.float32))
    attn = jnp.concatenate(heads, axis=-1)                        # [T, D]

    o = (jnp.dot(attn.astype(jnp.bfloat16), wo_ref[...].astype(jnp.bfloat16),
                 preferred_element_type=jnp.float32) + bo_ref[...])
    h1 = _ln(x + o, ln1g_ref[...], ln1b_ref[...])
    f = jnp.maximum(jnp.dot(h1.astype(jnp.bfloat16), w1_ref[...].astype(jnp.bfloat16),
                            preferred_element_type=jnp.float32) + b1_ref[...], 0.0)
    f = (jnp.dot(f.astype(jnp.bfloat16), w2_ref[...].astype(jnp.bfloat16),
                 preferred_element_type=jnp.float32) + b2_ref[...])
    h2 = _ln(h1 + f, ln2g_ref[...], ln2b_ref[...])
    o_ref[0] = h2.astype(o_ref.dtype)


def encoder_layer_pallas(x, ep):
    """x: [NB, T, D]; one grid step per basket, all layer weights VMEM-resident."""
    NB, T, D = x.shape
    H = CFG.enc_heads

    def full(shape):
        return pl.BlockSpec(shape, lambda i: tuple(0 for _ in shape))

    return pl.pallas_call(
        partial(_enc_layer_kernel, n_heads=H),
        out_shape=jax.ShapeDtypeStruct((NB, T, D), jnp.float32),
        grid=(NB,),
        in_specs=[pl.BlockSpec((1, T, D), lambda i: (i, 0, 0)),
                  full((D, 3 * D)), full((1, 3 * D)),
                  full((D, D)), full((1, D)),
                  full((1, D)), full((1, D)),
                  full((D, D)), full((1, D)),
                  full((D, D)), full((1, D)),
                  full((1, D)), full((1, D))],
        out_specs=pl.BlockSpec((1, T, D), lambda i: (i, 0, 0)),
        compiler_params=pltpu.CompilerParams(dimension_semantics=("parallel",)),
    )(x, ep['wqkv'], ep['bqkv'], ep['wo'], ep['bo'],
      ep['ln1_g'], ep['ln1_b'], ep['w1'], ep['b1'], ep['w2'], ep['b2'],
      ep['ln2_g'], ep['ln2_b'])


# ----------------------------- Pallas: GRU ------------------------------------
def _gru_kernel(x_ref, h0_ref, wih_ref, whh_ref, bih_ref, bhh_ref,
                y_ref, hlast_ref, *, seq_len, dim):
    D = dim
    wih = wih_ref[...].astype(jnp.bfloat16)        # [D, 3D]  (gate order r|z|n)
    whh = whh_ref[...].astype(jnp.bfloat16)
    bih = bih_ref[...]                             # [1, 3D]
    bhh = bhh_ref[...]
    h = h0_ref[...].astype(jnp.float32)            # [B, D]
    for t in range(seq_len):                       # fully unrolled (S is small)
        x = x_ref[t].astype(jnp.bfloat16)          # [B, D]
        gi = jnp.dot(x, wih, preferred_element_type=jnp.float32) + bih
        gh = jnp.dot(h.astype(jnp.bfloat16), whh, preferred_element_type=jnp.float32) + bhh
        r = jax.nn.sigmoid(gi[:, :D] + gh[:, :D])
        z = jax.nn.sigmoid(gi[:, D:2 * D] + gh[:, D:2 * D])
        n = jnp.tanh(gi[:, 2 * D:] + r * gh[:, 2 * D:])
        h = (1.0 - z) * n + z * h
        y_ref[t] = h.astype(y_ref.dtype)
    hlast_ref[...] = h.astype(hlast_ref.dtype)


def gru_pallas(x_seq, h0, w_ih, w_hh, b_ih, b_hh):
    """x_seq: [B, S, D] (batch_first), h0: [B, D]. PyTorch GRU gate order (r, z, n)."""
    B, S, D = x_seq.shape
    xt = jnp.transpose(x_seq, (1, 0, 2))           # time-major [S, B, D]
    y, h_last = pl.pallas_call(
        partial(_gru_kernel, seq_len=S, dim=D),
        out_shape=(jax.ShapeDtypeStruct((S, B, D), jnp.float32),
                   jax.ShapeDtypeStruct((B, D), jnp.float32)),
    )(xt, h0, w_ih, w_hh, b_ih, b_hh)
    return jnp.transpose(y, (1, 0, 2)), h_last[None]   # [B,S,D], [1,B,D]


# ----------------------------- model pieces (JAX glue + Pallas) ---------------
def _select_slice(wide, type_ids, n_types, width, base=0):
    """Pick the per-row slice of `wide` corresponding to each row's type."""
    res = wide[:, base:base + width]
    for t in range(1, n_types):
        res = jnp.where((type_ids == t)[:, None],
                        wide[:, base + t * width:base + (t + 1) * width], res)
    return res


def make_rte_table(n_hid, max_len):
    # RelTemporalEncoding embedding table (fixed sin/cos, matches the PyTorch init).
    pos = jnp.arange(max_len, dtype=jnp.float32)[:, None]
    div = 1.0 / (10000.0 ** jnp.arange(0.0, 2 * n_hid, 2.0, dtype=jnp.float32)
                 / n_hid / 2.0)
    tbl = jnp.zeros((max_len, 2 * n_hid), jnp.float32)
    tbl = tbl.at[:, 0::2].set(jnp.sin(pos * div) / math.sqrt(n_hid))
    tbl = tbl.at[:, 1::2].set(jnp.cos(pos * div) / math.sqrt(n_hid))
    return tbl


def hgt_layer(lp, node_inp, node_type, edge_index, edge_type, edge_time):
    cfg = CFG
    src, dst = edge_index[0], edge_index[1]     # source_to_target flow
    N, n_hid = node_inp.shape
    H, dk = cfg.n_heads, n_hid // cfg.n_heads
    E = src.shape[0]
    inp_i, inp_j = node_inp[dst], node_inp[src]
    ti, tj = node_type[dst], node_type[src]

    # RelTemporalEncoding: x_j + lin(emb(t)); lin(emb) precomputed at init, gather only.
    src_vec = inp_j + lp['rte_lin'][edge_time]

    # fused per-type projections (one wide matmul each; per-row type select after)
    q_all = linear_pallas(inp_i, lp['q_w_cat'], lp['q_b_cat'])        # [E, 2*n_hid]
    kv_all = linear_pallas(src_vec, lp['kv_w_cat'], lp['kv_b_cat'])   # [E, 4*n_hid]
    q = _select_slice(q_all, ti, cfg.num_types, n_hid)
    k = _select_slice(kv_all, tj, cfg.num_types, n_hid, base=0)
    v = _select_slice(kv_all, tj, cfg.num_types, n_hid, base=cfg.num_types * n_hid)
    q = q.reshape(E, H, dk)
    k = k.reshape(E, H, dk)
    v = v.reshape(E, H, dk)

    rel_att = lp['relation_att'][edge_type]     # [E,H,dk,dk]
    rel_msg = lp['relation_msg'][edge_type]
    k = jnp.einsum('ehd,ehdk->ehk', k, rel_att)
    msg = jnp.einsum('ehd,ehdk->ehk', v, rel_msg)
    pri = lp['relation_pri'][ti, edge_type, tj]                       # [E,H]
    res_att = (q * k).sum(-1) * pri / math.sqrt(dk)

    # TODO(synk): torch_geometric segment softmax + scatter-add aggregation done
    # with JAX .at[] ops (data-dependent scatter has no clean BlockSpec form).
    m = jnp.full((N, H), -jnp.inf, jnp.float32).at[dst].max(res_att)
    ex = jnp.exp(res_att - m[dst])
    s = jnp.zeros((N, H), jnp.float32).at[dst].add(ex)
    att = ex / (s[dst] + 1e-16)
    res = (msg * att[:, :, None]).reshape(E, n_hid)
    aggr = jnp.zeros((N, n_hid), jnp.float32).at[dst].add(res)

    # update()
    aggr = jax.nn.gelu(aggr, approximate=False)
    a_all = linear_pallas(aggr, lp['a_w_cat'], lp['a_b_cat'])         # [N, 2*n_hid]
    out = jnp.zeros((N, n_hid), jnp.float32)
    for t in range(cfg.num_types):
        alpha = jax.nn.sigmoid(lp['skip'][t])
        trans = a_all[:, t * n_hid:(t + 1) * n_hid] * alpha + node_inp * (1.0 - alpha)
        out = jnp.where((node_type == t)[:, None], trans, out)
    return out                                   # dropout == identity (eval)


def gnn_forward(gp, node_feature, node_type, edge_time, edge_type, edge_index):
    cfg = CFG
    adapt_all = linear_pallas(node_feature, gp['adapt_w_cat'], gp['adapt_b_cat'])
    x = jnp.tanh(_select_slice(adapt_all, node_type, cfg.num_types, cfg.n_hid))
    for lp in gp['layers']:
        x = hgt_layer(lp, x, node_type, edge_index, edge_type, edge_time)
    return x


def hbp_forward(params, items, lengths, positions, frequencies, hidden,
                node_feature, node_type, edge_time, edge_type, edge_index):
    cfg = CFG
    # config.gnn == 'True'
    node_rep = gnn_forward(params['gnn'], node_feature, node_type,
                           edge_time, edge_type, edge_index)
    node_rep = jax.nn.relu(node_rep)

    # basket embedding construction (attributed == 'True', gnn == 'True').
    # TODO(synk): `reindex` dict / per-basket python list plumbing is represented
    # as dense item-id / position / frequency index arrays (reindex == identity).
    is_pad = (items == PAD_ITEM)
    idx = jnp.where(is_pad, 0, items)
    ori = node_feature[idx]                                       # [B,S,T,emb]
    gnn_e = node_rep[idx]                                         # [B,S,T,n_hid]
    item_emb = jnp.where(is_pad[..., None], 0.0,
                         jnp.concatenate([ori, gnn_e], axis=-1))  # [B,S,T,2*emb]
    pos_e = params['pos_emb'][positions]                          # padding_idx row = 0
    freq_e = params['freq_emb'][frequencies]
    baskets = jnp.concatenate([item_emb, pos_e, freq_e], axis=-1)  # [B,S,T,hidden_dim]

    B, S, T, D = baskets.shape
    enc = baskets.reshape(B * S, T, D)
    for ep in params['encoder']:
        enc = encoder_layer_pallas(enc, ep)
    pooled = jnp.mean(enc, axis=1)                # pool_avg over basket items
    ub_seqs = pooled.reshape(B, S, D)

    # config.lstm == 'True': GRU over the basket sequence.
    # TODO(synk): pack_padded_sequence modeled with full lengths (no packing).
    dynamic_user, h_u = gru_pallas(ub_seqs, hidden[0],
                                   params['gru_w_ih'], params['gru_w_hh'],
                                   params['gru_b_ih'], params['gru_b_hh'])
    return node_rep, dynamic_user, h_u


# ----------------------------- parameter init ---------------------------------
def init_params(key):
    cfg = CFG
    keys = iter(jax.random.split(key, 256))
    nk = lambda: next(keys)

    def lin(fan_in, fan_out):
        bound = 1.0 / math.sqrt(fan_in)
        w = jax.random.uniform(nk(), (fan_in, fan_out), jnp.float32, -bound, bound)
        b = jax.random.uniform(nk(), (fan_out,), jnp.float32, -bound, bound)
        return w, b

    def multi_lin(n, fan_in, fan_out):
        ws, bs = zip(*[lin(fan_in, fan_out) for _ in range(n)])
        return list(ws), list(bs)

    cat_w = lambda ws: jnp.concatenate(ws, axis=1)
    cat_b = lambda bs: jnp.concatenate(bs, axis=0)

    p = {}
    # GNN
    gnn = {}
    aw, ab = multi_lin(cfg.num_types, cfg.embedding_dim, cfg.n_hid)
    gnn['adapt_w_cat'], gnn['adapt_b_cat'] = cat_w(aw), cat_b(ab)
    dk = cfg.n_hid // cfg.n_heads
    rte_table = make_rte_table(cfg.n_hid, cfg.rte_max_len)
    layers = []
    for _ in range(cfg.n_layers):
        lp = {}
        kw, kb = multi_lin(cfg.num_types, cfg.n_hid, cfg.n_hid)
        qw, qb = multi_lin(cfg.num_types, cfg.n_hid, cfg.n_hid)
        vw, vb = multi_lin(cfg.num_types, cfg.n_hid, cfg.n_hid)
        aw2, ab2 = multi_lin(cfg.num_types, cfg.n_hid, cfg.n_hid)
        lp['q_w_cat'], lp['q_b_cat'] = cat_w(qw), cat_b(qb)
        lp['kv_w_cat'] = cat_w(kw + vw)           # [n_hid, 4*n_hid] : k(types) | v(types)
        lp['kv_b_cat'] = cat_b(kb + vb)
        lp['a_w_cat'], lp['a_b_cat'] = cat_w(aw2), cat_b(ab2)
        lp['relation_pri'] = jnp.ones((cfg.num_types, cfg.num_relations,
                                       cfg.num_types, cfg.n_heads), jnp.float32)
        g = math.sqrt(6.0 / (dk + dk))
        lp['relation_att'] = jax.random.uniform(
            nk(), (cfg.num_relations, cfg.n_heads, dk, dk), jnp.float32, -g, g)
        lp['relation_msg'] = jax.random.uniform(
            nk(), (cfg.num_relations, cfg.n_heads, dk, dk), jnp.float32, -g, g)
        lp['skip'] = jnp.ones((cfg.num_types,), jnp.float32)
        rte_w, rte_b = lin(2 * cfg.n_hid, cfg.n_hid)
        # precompute lin(emb_table) once: [max_len, n_hid]
        lp['rte_lin'] = rte_table @ rte_w + rte_b
        layers.append(lp)
    gnn['layers'] = layers
    p['gnn'] = gnn

    # position / frequency embeddings (padding_idx row zeroed)
    pe = 0.1 * jax.random.normal(nk(), (cfg.num_position, cfg.dynamic_dim), jnp.float32)
    p['pos_emb'] = pe.at[cfg.num_position - 1].set(0.0)
    fe = 0.1 * jax.random.normal(nk(), (cfg.num_frequency, cfg.dynamic_dim), jnp.float32)
    p['freq_emb'] = fe.at[cfg.num_frequency - 1].set(0.0)

    # Encoder(hidden_dim, 4, dropout, hidden_dim, 3)
    D = cfg.hidden_dim
    enc = []
    for _ in range(cfg.enc_layers):
        ep = {}
        wq, bq = lin(D, D)
        wk, bk = lin(D, D)
        wv, bv = lin(D, D)
        ep['wqkv'] = jnp.concatenate([wq, wk, wv], axis=1)       # [D, 3D] lane-dense
        ep['bqkv'] = jnp.concatenate([bq, bk, bv]).reshape(1, 3 * D)
        wo, bo = lin(D, D)
        ep['wo'], ep['bo'] = wo, bo.reshape(1, D)
        ep['ln1_g'] = jnp.ones((1, D), jnp.float32)
        ep['ln1_b'] = jnp.zeros((1, D), jnp.float32)
        w1, b1 = lin(D, D)
        w2, b2 = lin(D, D)
        ep['w1'], ep['b1'] = w1, b1.reshape(1, D)
        ep['w2'], ep['b2'] = w2, b2.reshape(1, D)
        ep['ln2_g'] = jnp.ones((1, D), jnp.float32)
        ep['ln2_b'] = jnp.zeros((1, D), jnp.float32)
        enc.append(ep)
    p['encoder'] = enc

    # GRU (gate order r, z, n; weights stored transposed and gate-concatenated [D, 3D])
    bound = 1.0 / math.sqrt(D)
    p['gru_w_ih'] = jax.random.uniform(nk(), (D, 3 * D), jnp.float32, -bound, bound)
    p['gru_w_hh'] = jax.random.uniform(nk(), (D, 3 * D), jnp.float32, -bound, bound)
    p['gru_b_ih'] = jax.random.uniform(nk(), (1, 3 * D), jnp.float32, -bound, bound)
    p['gru_b_hh'] = jax.random.uniform(nk(), (1, 3 * D), jnp.float32, -bound, bound)
    return p


# ----------------------------- main -------------------------------------------
if __name__ == "__main__":
    cfg = CFG
    key = jax.random.PRNGKey(0)
    k_par, k_nodes, k_items, k_pos, k_freq, k_edge = jax.random.split(key, 6)
    params = init_params(k_par)

    N_nodes, E = 12, 20
    node_feature = jax.random.normal(k_nodes, (N_nodes, cfg.embedding_dim), jnp.float32)
    node_type = jax.random.randint(jax.random.fold_in(k_nodes, 1), (N_nodes,), 0, cfg.num_types)
    edge_index = jax.random.randint(k_edge, (2, E), 0, N_nodes)
    edge_type = jax.random.randint(jax.random.fold_in(k_edge, 1), (E,), 0, cfg.num_relations)
    edge_time = jax.random.randint(jax.random.fold_in(k_edge, 2), (E,), 0, 50)

    # baskets of item ids (reindex == identity; PAD_ITEM marks padded slots)
    items = jax.random.randint(k_items, (cfg.batch_size, cfg.seq_len, cfg.basket_size),
                               0, N_nodes)
    pad_mask = jax.random.bernoulli(jax.random.fold_in(k_items, 1), 0.25, items.shape)
    items = jnp.where(pad_mask, PAD_ITEM, items)
    positions = jax.random.randint(k_pos, items.shape, 0, cfg.num_position - 1)
    positions = jnp.where(pad_mask, cfg.num_position - 1, positions)
    frequencies = jax.random.randint(k_freq, items.shape, 0, cfg.num_frequency - 1)
    frequencies = jnp.where(pad_mask, cfg.num_frequency - 1, frequencies)

    lengths = jnp.full((cfg.batch_size,), cfg.seq_len, jnp.int32)     # full-length seqs
    hidden = jnp.zeros((cfg.rnn_layer_num, cfg.batch_size, cfg.hidden_dim), jnp.float32)

    fwd = jax.jit(hbp_forward)
    node_rep, dynamic_user, h_u = fwd(params, items, lengths, positions, frequencies,
                                      hidden, node_feature, node_type, edge_time,
                                      edge_type, edge_index)
    jax.block_until_ready((node_rep, dynamic_user, h_u))

    assert node_rep.shape == (N_nodes, cfg.n_hid)
    assert dynamic_user.shape == (cfg.batch_size, cfg.seq_len, cfg.hidden_dim)
    assert h_u.shape == (cfg.rnn_layer_num, cfg.batch_size, cfg.hidden_dim)
    assert jnp.all(jnp.isfinite(node_rep)) and jnp.all(jnp.isfinite(dynamic_user))
    assert jnp.all(jnp.isfinite(h_u))
    print("KERNEL_OK")
</pallas_src>

<mosaic_0001>
module attributes {stable_mosaic.version = 11 : i64} {
  func.func @_linear_kernel(%arg0: memref<12x16xf32, #tpu.memory_space<vmem>>, %arg1: memref<16x32xf32, #tpu.memory_space<vmem>>, %arg2: memref<1x32xf32, #tpu.memory_space<vmem>>, %arg3: memref<12x32xf32, #tpu.memory_space<vmem>>) attributes {dimension_semantics = [], scalar_prefetch = 0 : i64, scratch_operands = 0 : i64, tpu.core_type = #tpu.core_type<tc>} {
    %c0 = arith.constant 0 : index
    %c0_0 = arith.constant 0 : index
    %0 = vector.load %arg0[%c0, %c0_0] : memref<12x16xf32, #tpu.memory_space<vmem>>, vector<12x16xf32>
    %1 = arith.truncf %0 : vector<12x16xf32> to vector<12x16xbf16>
    %c0_1 = arith.constant 0 : index
    %c0_2 = arith.constant 0 : index
    %2 = vector.load %arg1[%c0_1, %c0_2] : memref<16x32xf32, #tpu.memory_space<vmem>>, vector<16x32xf32>
    %3 = arith.truncf %2 : vector<16x32xf32> to vector<16x32xbf16>
    %cst = arith.constant dense<0.000000e+00> : vector<12x32xf32>
    %4 = tpu.matmul %1, %3, %cst {dimension_numbers = #tpu.dot_dimension_numbers<[1], [0], [0], [1], [0, 0, 1, 1], [], []>} : vector<12x16xbf16>, vector<16x32xbf16>, vector<12x32xf32> -> vector<12x32xf32>
    %c0_3 = arith.constant 0 : index
    %c0_4 = arith.constant 0 : index
    %5 = vector.load %arg2[%c0_3, %c0_4] : memref<1x32xf32, #tpu.memory_space<vmem>>, vector<1x32xf32>
    %6 = vector.broadcast %5 : vector<1x32xf32> to vector<12x32xf32>
    %7 = arith.addf %4, %6 : vector<12x32xf32>
    %c0_5 = arith.constant 0 : index
    %c0_6 = arith.constant 0 : index
    %8 = vector.load %arg3[%c0_5, %c0_6] : memref<12x32xf32, #tpu.memory_space<vmem>>, vector<12x32xf32>
    tpu.vector_store %arg3[%c0_5, %c0_6], %7 {strides = array<i32>} : memref<12x32xf32, #tpu.memory_space<vmem>>, vector<12x32xf32>,
    return
  }
}

module attributes {stable_mosaic.version = 11 : i64} {
  func.func @_linear_kernel(%arg0: memref<20x16xf32, #tpu.memory_space<vmem>>, %arg1: memref<16x32xf32, #tpu.memory_space<vmem>>, %arg2: memref<1x32xf32, #tpu.memory_space<vmem>>, %arg3: memref<20x32xf32, #tpu.memory_space<vmem>>) attributes {dimension_semantics = [], scalar_prefetch = 0 : i64, scratch_operands = 0 : i64, tpu.core_type = #tpu.core_type<tc>} {
    %c0 = arith.constant 0 : index
    %c0_0 = arith.constant 0 : index
    %0 = vector.load %arg0[%c0, %c0_0] : memref<20x16xf32, #tpu.memory_space<vmem>>, vector<20x16xf32>
    %1 = arith.truncf %0 : vector<20x16xf32> to vector<20x16xbf16>
    %c0_1 = arith.constant 0 : index
    %c0_2 = arith.constant 0 : index
    %2 = vector.load %arg1[%c0_1, %c0_2] : memref<16x32xf32, #tpu.memory_space<vmem>>, vector<16x32xf32>
    %3 = arith.truncf %2 : vector<16x32xf32> to vector<16x32xbf16>
    %cst = arith.constant dense<0.000000e+00> : vector<20x32xf32>
    %4 = tpu.matmul %1, %3, %cst {dimension_numbers = #tpu.dot_dimension_numbers<[1], [0], [0], [1], [0, 0, 1, 1], [], []>} : vector<20x16xbf16>, vector<16x32xbf16>, vector<20x32xf32> -> vector<20x32xf32>
    %c0_3 = arith.constant 0 : index
    %c0_4 = arith.constant 0 : index
    %5 = vector.load %arg2[%c0_3, %c0_4] : memref<1x32xf32, #tpu.memory_space<vmem>>, vector<1x32xf32>
    %6 = vector.broadcast %5 : vector<1x32xf32> to vector<20x32xf32>
    %7 = arith.addf %4, %6 : vector<20x32xf32>
    %c0_5 = arith.constant 0 : index
    %c0_6 = arith.constant 0 : index
    %8 = vector.load %arg3[%c0_5, %c0_6] : memref<20x32xf32, #tpu.memory_space<vmem>>, vector<20x32xf32>
    tpu.vector_store %arg3[%c0_5, %c0_6], %7 {strides = array<i32>} : memref<20x32xf32, #tpu.memory_space<vmem>>, vector<20x32xf32>,
    return
  }
}

module attributes {stable_mosaic.version = 11 : i64} {
  func.func @_linear_kernel(%arg0: memref<20x16xf32, #tpu.memory_space<vmem>>, %arg1: memref<16x64xf32, #tpu.memory_space<vmem>>, %arg2: memref<1x64xf32, #tpu.memory_space<vmem>>, %arg3: memref<20x64xf32, #tpu.memory_space<vmem>>) attributes {dimension_semantics = [], scalar_prefetch = 0 : i64, scratch_operands = 0 : i64, tpu.core_type = #tpu.core_type<tc>} {
    %c0 = arith.constant 0 : index
    %c0_0 = arith.constant 0 : index
    %0 = vector.load %arg0[%c0, %c0_0] : memref<20x16xf32, #tpu.memory_space<vmem>>, vector<20x16xf32>
    %1 = arith.truncf %0 : vector<20x16xf32> to vector<20x16xbf16>
    %c0_1 = arith.constant 0 : index
    %c0_2 = arith.constant 0 : index
    %2 = vector.load %arg1[%c0_1, %c0_2] : memref<16x64xf32, #tpu.memory_space<vmem>>, vector<16x64xf32>
    %3 = arith.truncf %2 : vector<16x64xf32> to vector<16x64xbf16>
    %cst = arith.constant dense<0.000000e+00> : vector<20x64xf32>
    %4 = tpu.matmul %1, %3, %cst {dimension_numbers = #tpu.dot_dimension_numbers<[1], [0], [0], [1], [0, 0, 1, 1], [], []>} : vector<20x16xbf16>, vector<16x64xbf16>, vector<20x64xf32> -> vector<20x64xf32>
    %c0_3 = arith.constant 0 : index
    %c0_4 = arith.constant 0 : index
    %5 = vector.load %arg2[%c0_3, %c0_4] : memref<1x64xf32, #tpu.memory_space<vmem>>, vector<1x64xf32>
    %6 = vector.broadcast %5 : vector<1x64xf32> to vector<20x64xf32>
    %7 = arith.addf %4, %6 : vector<20x64xf32>
    %c0_5 = arith.constant 0 : index
    %c0_6 = arith.constant 0 : index
    %8 = vector.load %arg3[%c0_5, %c0_6] : memref<20x64xf32, #tpu.memory_space<vmem>>, vector<20x64xf32>
    tpu.vector_store %arg3[%c0_5, %c0_6], %7 {strides = array<i32>} : memref<20x64xf32, #tpu.memory_space<vmem>>, vector<20x64xf32>,
    return
  }
}

module attributes {stable_mosaic.version = 11 : i64} {
  func.func @_enc_layer_kernel(%arg0: i32, %arg1: memref<1x3x48xf32, #tpu.memory_space<vmem>>, %arg2: memref<48x144xf32, #tpu.memory_space<vmem>>, %arg3: memref<1x144xf32, #tpu.memory_space<vmem>>, %arg4: memref<48x48xf32, #tpu.memory_space<vmem>>, %arg5: memref<1x48xf32, #tpu.memory_space<vmem>>, %arg6: memref<1x48xf32, #tpu.memory_space<vmem>>, %arg7: memref<1x48xf32, #tpu.memory_space<vmem>>, %arg8: memref<48x48xf32, #tpu.memory_space<vmem>>, %arg9: memref<1x48xf32, #tpu.memory_space<vmem>>, %arg10: memref<48x48xf32, #tpu.memory_space<vmem>>, %arg11: memref<1x48xf32, #tpu.memory_space<vmem>>, %arg12: memref<1x48xf32, #tpu.memory_space<vmem>>, %arg13: memref<1x48xf32, #tpu.memory_space<vmem>>, %arg14: memref<1x3x48xf32, #tpu.memory_space<vmem>>) attributes {dimension_semantics = [#tpu.dimension_semantics<parallel>], iteration_bounds = array<i64: 8>, scalar_prefetch = 0 : i64, scratch_operands = 0 : i64, tpu.core_type = #tpu.core_type<tc>, window_params = [{transform_indices = @transform_0, window_bounds = array<i64: 1, 3, 48>}, {pipeline_mode = #tpu.pipeline_mode<synchronous>, transform_indices = @transform_1, window_bounds = array<i64: 48, 144>}, {pipeline_mode = #tpu.pipeline_mode<synchronous>, transform_indices = @transform_2, window_bounds = array<i64: 1, 144>}, {pipeline_mode = #tpu.pipeline_mode<synchronous>, transform_indices = @transform_3, window_bounds = array<i64: 48, 48>}, {pipeline_mode = #tpu.pipeline_mode<synchronous>, transform_indices = @transform_4, window_bounds = array<i64: 1, 48>}, {pipeline_mode = #tpu.pipeline_mode<synchronous>, transform_indices = @transform_5, window_bounds = array<i64: 1, 48>}, {pipeline_mode = #tpu.pipeline_mode<synchronous>, transform_indices = @transform_6, window_bounds = array<i64: 1, 48>}, {pipeline_mode = #tpu.pipeline_mode<synchronous>, transform_indices = @transform_7, window_bounds = array<i64: 48, 48>}, {pipeline_mode = #tpu.pipeline_mode<synchronous>, transform_indices = @transform_8, window_bounds = array<i64: 1, 48>}, {pipeline_mode = #tpu.pipeline_mode<synchronous>, transform_indices = @transform_9, window_bounds = array<i64: 48, 48>}, {pipeline_mode = #tpu.pipeline_mode<synchronous>, transform_indices = @transform_10, window_bounds = array<i64: 1, 48>}, {pipeline_mode = #tpu.pipeline_mode<synchronous>, transform_indices = @transform_11, window_bounds = array<i64: 1, 48>}, {pipeline_mode = #tpu.pipeline_mode<synchronous>, transform_indices = @transform_12, window_bounds = array<i64: 1, 48>}, {transform_indices = @transform_13, window_bounds = array<i64: 1, 3, 48>}]} {
    %c0 = arith.constant 0 : index
    %c0_0 = arith.constant 0 : index
    %c0_1 = arith.constant 0 : index
    %0 = vector.load %arg1[%c0, %c0_0, %c0_1] : memref<1x3x48xf32, #tpu.memory_space<vmem>>, vector<1x3x48xf32>
    %1 = vector.shape_cast %0 : vector<1x3x48xf32> to vector<3x48xf32>
    %2 = arith.truncf %1 : vector<3x48xf32> to vector<3x48xbf16>
    %c0_2 = arith.constant 0 : index
    %c0_3 = arith.constant 0 : index
    %3 = vector.load %arg2[%c0_2, %c0_3] : memref<48x144xf32, #tpu.memory_space<vmem>>, vector<48x144xf32>
    %4 = arith.truncf %3 : vector<48x144xf32> to vector<48x144xbf16>
    %cst = arith.constant dense<0.000000e+00> : vector<3x144xf32>
    %5 = tpu.matmul %2, %4, %cst {dimension_numbers = #tpu.dot_dimension_numbers<[1], [0], [0], [1], [0, 0, 1, 1], [], []>} : vector<3x48xbf16>, vector<48x144xbf16>, vector<3x144xf32> -> vector<3x144xf32>
    %c0_4 = arith.constant 0 : index
    %c0_5 = arith.constant 0 : index
    %6 = vector.load %arg3[%c0_4, %c0_5] : memref<1x144xf32, #tpu.memory_space<vmem>>, vector<1x144xf32>
    %7 = vector.broadcast %6 : vector<1x144xf32> to vector<3x144xf32>
    %8 = arith.addf %5, %7 : vector<3x144xf32>
    %9 = vector.extract_strided_slice %8 {offsets = [0, 0], sizes = [3, 12], strides = [1, 1]} : vector<3x144xf32> to vector<3x12xf32>
    %10 = vector.extract_strided_slice %8 {offsets = [0, 48], sizes = [3, 12], strides = [1, 1]} : vector<3x144xf32> to vector<3x12xf32>
    %11 = vector.extract_strided_slice %8 {offsets = [0, 96], sizes = [3, 12], strides = [1, 1]} : vector<3x144xf32> to vector<3x12xf32>
    %12 = arith.truncf %9 : vector<3x12xf32> to vector<3x12xbf16>
    %13 = arith.truncf %10 : vector<3x12xf32> to vector<3x12xbf16>
    %14 = tpu.transpose %13, [1, 0] : vector<3x12xbf16> -> vector<12x3xbf16>
    %cst_6 = arith.constant dense<0.000000e+00> : vector<3x3xf32>
    %15 = tpu.matmul %12, %14, %cst_6 {dimension_numbers = #tpu.dot_dimension_numbers<[1], [0], [0], [1], [0, 0, 1, 1], [], []>} : vector<3x12xbf16>, vector<12x3xbf16>, vector<3x3xf32> -> vector<3x3xf32>
    %cst_7 = arith.constant 0.288675129 : f32
    %16 = vector.broadcast %cst_7 : f32 to vector<3x3xf32>
    %17 = arith.mulf %15, %16 : vector<3x3xf32>
    %cst_8 = arith.constant dense<0xFF800000> : vector<3xf32>
    %18 = vector.multi_reduction <maximumf>, %17, %cst_8 [1] : vector<3x3xf32> to vector<3xf32>
    %19 = vector.shape_cast %18 : vector<3xf32> to vector<3x1xf32>
    %20 = vector.broadcast %19 : vector<3x1xf32> to vector<3x3xf32>
    %21 = arith.subf %17, %20 : vector<3x3xf32>
    %22 = math.exp %21 : vector<3x3xf32>
    %cst_9 = arith.constant dense<0.000000e+00> : vector<3xf32>
    %23 = vector.multi_reduction <add>, %22, %cst_9 [1] : vector<3x3xf32> to vector<3xf32>
    %24 = vector.shape_cast %23 : vector<3xf32> to vector<3x1xf32>
    %25 = vector.broadcast %24 : vector<3x1xf32> to vector<3x3xf32>
    %26 = arith.divf %22, %25 : vector<3x3xf32>
    %27 = arith.truncf %26 : vector<3x3xf32> to vector<3x3xbf16>
    %28 = arith.truncf %11 : vector<3x12xf32> to vector<3x12xbf16>
    %cst_10 = arith.constant dense<0.000000e+00> : vector<3x12xf32>
    %29 = tpu.matmul %27, %28, %cst_10 {dimension_numbers = #tpu.dot_dimension_numbers<[1], [0], [0], [1], [0, 0, 1, 1], [], []>} : vector<3x3xbf16>, vector<3x12xbf16>, vector<3x12xf32> -> vector<3x12xf32>
    %30 = vector.extract_strided_slice %8 {offsets = [0, 12], sizes = [3, 12], strides = [1, 1]} : vector<3x144xf32> to vector<3x12xf32>
    %31 = vector.extract_strided_slice %8 {offsets = [0, 60], sizes = [3, 12], strides = [1, 1]} : vector<3x144xf32> to vector<3x12xf32>
    %32 = vector.extract_strided_slice %8 {offsets = [0, 108], sizes = [3, 12], strides = [1, 1]} : vector<3x144xf32> to vector<3x12xf32>
    %33 = arith.truncf %30 : vector<3x12xf32> to vector<3x12xbf16>
    %34 = arith.truncf %31 : vector<3x12xf32> to vector<3x12xbf16>
    %35 = tpu.transpose %34, [1, 0] : vector<3x12xbf16> -> vector<12x3xbf16>
    %cst_11 = arith.constant dense<0.000000e+00> : vector<3x3xf32>
    %36 = tpu.matmul %33, %35, %cst_11 {dimension_numbers = #tpu.dot_dimension_numbers<[1], [0], [0], [1], [0, 0, 1, 1], [], []>} : vector<3x12xbf16>, vector<12x3xbf16>, vector<3x3xf32> -> vector<3x3xf32>
    %cst_12 = arith.constant 0.288675129 : f32
    %37 = vector.broadcast %cst_12 : f32 to vector<3x3xf32>
    %38 = arith.mulf %36, %37 : vector<3x3xf32>
    %cst_13 = arith.constant dense<0xFF800000> : vector<3xf32>
    %39 = vector.multi_reduction <maximumf>, %38, %cst_13 [1] : vector<3x3xf32> to vector<3xf32>
    %40 = vector.shape_cast %39 : vector<3xf32> to vector<3x1xf32>
    %41 = vector.broadcast %40 : vector<3x1xf32> to vector<3x3xf32>
    %42 = arith.subf %38, %41 : vector<3x3xf32>
    %43 = math.exp %42 : vector<3x3xf32>
    %cst_14 = arith.constant dense<0.000000e+00> : vector<3xf32>
    %44 = vector.multi_reduction <add>, %43, %cst_14 [1] : vector<3x3xf32> to vector<3xf32>
    %45 = vector.shape_cast %44 : vector<3xf32> to vector<3x1xf32>
    %46 = vector.broadcast %45 : vector<3x1xf32> to vector<3x3xf32>
    %47 = arith.divf %43, %46 : vector<3x3xf32>
    %48 = arith.truncf %47 : vector<3x3xf32> to vector<3x3xbf16>
    %49 = arith.truncf %32 : vector<3x12xf32> to vector<3x12xbf16>
    %cst_15 = arith.constant dense<0.000000e+00> : vector<3x12xf32>
    %50 = tpu.matmul %48, %49, %cst_15 {dimension_numbers = #tpu.dot_dimension_numbers<[1], [0], [0], [1], [0, 0, 1, 1], [], []>} : vector<3x3xbf16>, vector<3x12xbf16>, vector<3x12xf32> -> vector<3x12xf32>
    %51 = vector.extract_strided_slice %8 {offsets = [0, 24], sizes = [3, 12], strides = [1, 1]} : vector<3x144xf32> to vector<3x12xf32>
    %52 = vector.extract_strided_slice %8 {offsets = [0, 72], sizes = [3, 12], strides = [1, 1]} : vector<3x144xf32> to vector<3x12xf32>
    %53 = vector.extract_strided_slice %8 {offsets = [0, 120], sizes = [3, 12], strides = [1, 1]} : vector<3x144xf32> to vector<3x12xf32>
    %54 = arith.truncf %51 : vector<3x12xf32> to vector<3x12xbf16>
    %55 = arith.truncf %52 : vector<3x12xf32> to vector<3x12xbf16>
    %56 = tpu.transpose %55, [1, 0] : vector<3x12xbf16> -> vector<12x3xbf16>
    %cst_16 = arith.constant dense<0.000000e+00> : vector<3x3xf32>
    %57 = tpu.matmul %54, %56, %cst_16 {dimension_numbers = #tpu.dot_dimension_numbers<[1], [0], [0], [1], [0, 0, 1, 1], [], []>} : vector<3x12xbf16>, vector<12x3xbf16>, vector<3x3xf32> -> vector<3x3xf32>
    %cst_17 = arith.constant 0.288675129 : f32
    %58 = vector.broadcast %cst_17 : f32 to vector<3x3xf32>
    %59 = arith.mulf %57, %58 : vector<3x3xf32>
    %cst_18 = arith.constant dense<0xFF800000> : vector<3xf32>
    %60 = vector.multi_reduction <maximumf>, %59, %cst_18 [1] : vector<3x3xf32> to vector<3xf32>
    %61 = vector.shape_cast %60 : vector<3xf32> to vector<3x1xf32>
    %62 = vector.broadcast %61 : vector<3x1xf32> to vector<3x3xf32>
    %63 = arith.subf %59, %62 : vector<3x3xf32>
    %64 = math.exp %63 : vector<3x3xf32>
    %cst_19 = arith.constant dense<0.000000e+00> : vector<3xf32>
    %65 = vector.multi_reduction <add>, %64, %cst_19 [1] : vector<3x3xf32> to vector<3xf32>
    %66 = vector.shape_cast %65 : vector<3xf32> to vector<3x1xf32>
    %67 = vector.broadcast %66 : vector<3x1xf32> to vector<3x3xf32>
    %68 = arith.divf %64, %67 : vector<3x3xf32>
    %69 = arith.truncf %68 : vector<3x3xf32> to vector<3x3xbf16>
    %70 = arith.truncf %53 : vector<3x12xf32> to vector<3x12xbf16>
    %cst_20 = arith.constant dense<0.000000e+00> : vector<3x12xf32>
    %71 = tpu.matmul %69, %70, %cst_20 {dimension_numbers = #tpu.dot_dimension_numbers<[1], [0], [0], [1], [0, 0, 1, 1], [], []>} : vector<3x3xbf16>, vector<3x12xbf16>, vector<3x12xf32> -> vector<3x12xf32>
    %72 = vector.extract_strided_slice %8 {offsets = [0, 36], sizes = [3, 12], strides = [1, 1]} : vector<3x144xf32> to vector<3x12xf32>
    %73 = vector.extract_strided_slice %8 {offsets = [0, 84], sizes = [3, 12], strides = [1, 1]} : vector<3x144xf32> to vector<3x12xf32>
    %74 = vector.extract_strided_slice %8 {offsets = [0, 132], sizes = [3, 12], strides = [1, 1]} : vector<3x144xf32> to vector<3x12xf32>
    %75 = arith.truncf %72 : vector<3x12xf32> to vector<3x12xbf16>
    %76 = arith.truncf %73 : vector<3x12xf32> to vector<3x12xbf16>
    %77 = tpu.transpose %76, [1, 0] : vector<3x12xbf16> -> vector<12x3xbf16>
    %cst_21 = arith.constant dense<0.000000e+00> : vector<3x3xf32>
    %78 = tpu.matmul %75, %77, %cst_21 {dimension_numbers = #tpu.dot_dimension_numbers<[1], [0], [0], [1], [0, 0, 1, 1], [], []>} : vector<3x12xbf16>, vector<12x3xbf16>, vector<3x3xf32> -> vector<3x3xf32>
    %cst_22 = arith.constant 0.288675129 : f32
    %79 = vector.broadcast %cst_22 : f32 to vector<3x3xf32>
    %80 = arith.mulf %78, %79 : vector<3x3xf32>
    %cst_23 = arith.constant dense<0xFF800000> : vector<3xf32>
    %81 = vector.multi_reduction <maximumf>, %80, %cst_23 [1] : vector<3x3xf32> to vector<3xf32>
    %82 = vector.shape_cast %81 : vector<3xf32> to vector<3x1xf32>
    %83 = vector.broadcast %82 : vector<3x1xf32> to vector<3x3xf32>
    %84 = arith.subf %80, %83 : vector<3x3xf32>
    %85 = math.exp %84 : vector<3x3xf32>
    %cst_24 = arith.constant dense<0.000000e+00> : vector<3xf32>
    %86 = vector.multi_reduction <add>, %85, %cst_24 [1] : vector<3x3xf32> to vector<3xf32>
    %87 = vector.shape_cast %86 : vector<3xf32> to vector<3x1xf32>
    %88 = vector.broadcast %87 : vector<3x1xf32> to vector<3x3xf32>
    %89 = arith.divf %85, %88 : vector<3x3xf32>
    %90 = arith.truncf %89 : vector<3x3xf32> to vector<3x3xbf16>
    %91 = arith.truncf %74 : vector<3x12xf32> to vector<3x12xbf16>
    %cst_25 = arith.constant dense<0.000000e+00> : vector<3x12xf32>
    %92 = tpu.matmul %90, %91, %cst_25 {dimension_numbers = #tpu.dot_dimension_numbers<[1], [0], [0], [1], [0, 0, 1, 1], [], []>} : vector<3x3xbf16>, vector<3x12xbf16>, vector<3x12xf32> -> vector<3x12xf32>
    %93 = tpu.concatenate %29, %50, %71, %92 in 1 : vector<3x12xf32>, vector<3x12xf32>, vector<3x12xf32>, vector<3x12xf32> -> vector<3x48xf32>
    %94 = arith.truncf %93 : vector<3x48xf32> to vector<3x48xbf16>
    %c0_26 = arith.constant 0 : index
    %c0_27 = arith.constant 0 : index
    %95 = vector.load %arg4[%c0_26, %c0_27] : memref<48x48xf32, #tpu.memory_space<vmem>>, vector<48x48xf32>
    %96 = arith.truncf %95 : vector<48x48xf32> to vector<48x48xbf16>
    %cst_28 = arith.constant dense<0.000000e+00> : vector<3x48xf32>
    %97 = tpu.matmul %94, %96, %cst_28 {dimension_numbers = #tpu.dot_dimension_numbers<[1], [0], [0], [1], [0, 0, 1, 1], [], []>} : vector<3x48xbf16>, vector<48x48xbf16>, vector<3x48xf32> -> vector<3x48xf32>
    %c0_29 = arith.constant 0 : index
    %c0_30 = arith.constant 0 : index
    %98 = vector.load %arg5[%c0_29, %c0_30] : memref<1x48xf32, #tpu.memory_space<vmem>>, vector<1x48xf32>
    %99 = vector.broadcast %98 : vector<1x48xf32> to vector<3x48xf32>
    %100 = arith.addf %97, %99 : vector<3x48xf32>
    %101 = arith.addf %1, %100 : vector<3x48xf32>
    %c0_31 = arith.constant 0 : index
    %c0_32 = arith.constant 0 : index
    %102 = vector.load %arg6[%c0_31, %c0_32] : memref<1x48xf32, #tpu.memory_space<vmem>>, vector<1x48xf32>
    %c0_33 = arith.constant 0 : index
    %c0_34 = arith.constant 0 : index
    %103 = vector.load %arg7[%c0_33, %c0_34] : memref<1x48xf32, #tpu.memory_space<vmem>>, vector<1x48xf32>
    %cst_35 = arith.constant dense<0.000000e+00> : vector<3xf32>
    %104 = vector.multi_reduction <add>, %101, %cst_35 [1] : vector<3x48xf32> to vector<3xf32>
    %105 = vector.shape_cast %104 : vector<3xf32> to vector<3x1xf32>
    %cst_36 = arith.constant 4.800000e+01 : f32
    %106 = vector.broadcast %cst_36 : f32 to vector<3x1xf32>
    %107 = arith.divf %105, %106 : vector<3x1xf32>
    %108 = vector.broadcast %107 : vector<3x1xf32> to vector<3x48xf32>
    %109 = arith.subf %101, %108 : vector<3x48xf32>
    %110 = arith.mulf %109, %109 : vector<3x48xf32>
    %cst_37 = arith.constant dense<0.000000e+00> : vector<3xf32>
    %111 = vector.multi_reduction <add>, %110, %cst_37 [1] : vector<3x48xf32> to vector<3xf32>
    %112 = vector.shape_cast %111 : vector<3xf32> to vector<3x1xf32>
    %cst_38 = arith.constant 4.800000e+01 : f32
    %113 = vector.broadcast %cst_38 : f32 to vector<3x1xf32>
    %114 = arith.divf %112, %113 : vector<3x1xf32>
    %115 = vector.broadcast %107 : vector<3x1xf32> to vector<3x48xf32>
    %116 = arith.subf %101, %115 : vector<3x48xf32>
    %cst_39 = arith.constant 9.99999974E-6 : f32
    %117 = vector.broadcast %cst_39 : f32 to vector<3x1xf32>
    %118 = arith.addf %114, %117 : vector<3x1xf32>
    %119 = math.rsqrt %118 : vector<3x1xf32>
    %120 = vector.broadcast %119 : vector<3x1xf32> to vector<3x48xf32>
    %121 = arith.mulf %116, %120 : vector<3x48xf32>
    %122 = vector.broadcast %102 : vector<1x48xf32> to vector<3x48xf32>
    %123 = arith.mulf %121, %122 : vector<3x48xf32>
    %124 = vector.broadcast %103 : vector<1x48xf32> to vector<3x48xf32>
    %125 = arith.addf %123, %124 : vector<3x48xf32>
    %126 = arith.truncf %125 : vector<3x48xf32> to vector<3x48xbf16>
    %c0_40 = arith.constant 0 : index
    %c0_41 = arith.constant 0 : index
    %127 = vector.load %arg8[%c0_40, %c0_41] : memref<48x48xf32, #tpu.memory_space<vmem>>, vector<48x48xf32>
    %128 = arith.truncf %127 : vector<48x48xf32> to vector<48x48xbf16>
    %cst_42 = arith.constant dense<0.000000e+00> : vector<3x48xf32>
    %129 = tpu.matmul %126, %128, %cst_42 {dimension_numbers = #tpu.dot_dimension_numbers<[1], [0], [0], [1], [0, 0, 1, 1], [], []>} : vector<3x48xbf16>, vector<48x48xbf16>, vector<3x48xf32> -> vector<3x48xf32>
    %c0_43 = arith.constant 0 : index
    %c0_44 = arith.constant 0 : index
    %130 = vector.load %arg9[%c0_43, %c0_44] : memref<1x48xf32, #tpu.memory_space<vmem>>, vector<1x48xf32>
    %131 = vector.broadcast %130 : vector<1x48xf32> to vector<3x48xf32>
    %132 = arith.addf %129, %131 : vector<3x48xf32>
    %cst_45 = arith.constant 0.000000e+00 : f32
    %133 = vector.broadcast %cst_45 : f32 to vector<3x48xf32>
    %134 = arith.maximumf %132, %133 : vector<3x48xf32>
    %135 = arith.truncf %134 : vector<3x48xf32> to vector<3x48xbf16>
    %c0_46 = arith.constant 0 : index
    %c0_47 = arith.constant 0 : index
    %136 = vector.load %arg10[%c0_46, %c0_47] : memref<48x48xf32, #tpu.memory_space<vmem>>, vector<48x48xf32>
    %137 = arith.truncf %136 : vector<48x48xf32> to vector<48x48xbf16>
    %cst_48 = arith.constant dense<0.000000e+00> : vector<3x48xf32>
    %138 = tpu.matmul %135, %137, %cst_48 {dimension_numbers = #tpu.dot_dimension_numbers<[1], [0], [0], [1], [0, 0, 1, 1], [], []>} : vector<3x48xbf16>, vector<48x48xbf16>, vector<3x48xf32> -> vector<3x48xf32>
    %c0_49 = arith.constant 0 : index
    %c0_50 = arith.constant 0 : index
    %139 = vector.load %arg11[%c0_49, %c0_50] : memref<1x48xf32, #tpu.memory_space<vmem>>, vector<1x48xf32>
    %140 = vector.broadcast %139 : vector<1x48xf32> to vector<3x48xf32>
    %141 = arith.addf %138, %140 : vector<3x48xf32>
    %142 = arith.addf %125, %141 : vector<3x48xf32>
    %c0_51 = arith.constant 0 : index
    %c0_52 = arith.constant 0 : index
    %143 = vector.load %arg12[%c0_51, %c0_52] : memref<1x48xf32, #tpu.memory_space<vmem>>, vector<1x48xf32>
    %c0_53 = arith.constant 0 : index
    %c0_54 = arith.constant 0 : index
    %144 = vector.load %arg13[%c0_53, %c0_54] : memref<1x48xf32, #tpu.memory_space<vmem>>, vector<1x48xf32>
    %cst_55 = arith.constant dense<0.000000e+00> : vector<3xf32>
    %145 = vector.multi_reduction <add>, %142, %cst_55 [1] : vector<3x48xf32> to vector<3xf32>
    %146 = vector.shape_cast %145 : vector<3xf32> to vector<3x1xf32>
    %cst_56 = arith.constant 4.800000e+01 : f32
    %147 = vector.broadcast %cst_56 : f32 to vector<3x1xf32>
    %148 = arith.divf %146, %147 : vector<3x1xf32>
    %149 = vector.broadcast %148 : vector<3x1xf32> to vector<3x48xf32>
    %150 = arith.subf %142, %149 : vector<3x48xf32>
    %151 = arith.mulf %150, %150 : vector<3x48xf32>
    %cst_57 = arith.constant dense<0.000000e+00> : vector<3xf32>
    %152 = vector.multi_reduction <add>, %151, %cst_57 [1] : vector<3x48xf32> to vector<3xf32>
    %153 = vector.shape_cast %152 : vector<3xf32> to vector<3x1xf32>
    %cst_58 = arith.constant 4.800000e+01 : f32
    %154 = vector.broadcast %cst_58 : f32 to vector<3x1xf32>
    %155 = arith.divf %153, %154 : vector<3x1xf32>
    %156 = vector.broadcast %148 : vector<3x1xf32> to vector<3x48xf32>
    %157 = arith.subf %142, %156 : vector<3x48xf32>
    %cst_59 = arith.constant 9.99999974E-6 : f32
    %158 = vector.broadcast %cst_59 : f32 to vector<3x1xf32>
    %159 = arith.addf %155, %158 : vector<3x1xf32>
    %160 = math.rsqrt %159 : vector<3x1xf32>
    %161 = vector.broadcast %160 : vector<3x1xf32> to vector<3x48xf32>
    %162 = arith.mulf %157, %161 : vector<3x48xf32>
    %163 = vector.broadcast %143 : vector<1x48xf32> to vector<3x48xf32>
    %164 = arith.mulf %162, %163 : vector<3x48xf32>
    %165 = vector.broadcast %144 : vector<1x48xf32> to vector<3x48xf32>
    %166 = arith.addf %164, %165 : vector<3x48xf32>
    %c0_60 = arith.constant 0 : index
    %c0_61 = arith.constant 0 : index
    %c0_62 = arith.constant 0 : index
    %167 = vector.load %arg14[%c0_60, %c0_61, %c0_62] : memref<1x3x48xf32, #tpu.memory_space<vmem>>, vector<1x3x48xf32>
    %168 = vector.shape_cast %167 : vector<1x3x48xf32> to vector<3x48xf32>
    %169 = vector.shape_cast %166 : vector<3x48xf32> to vector<1x3x48xf32>
    tpu.vector_store %arg14[%c0_60, %c0_61, %c0_62], %169 {strides = array<i32>} : memref<1x3x48xf32, #tpu.memory_space<vmem>>, vector<1x3x48xf32>,
    return
  }
  func.func @transform_0(%arg0: i32) -> (i32, i32, i32) {
    %c0_i32 = arith.constant 0 : i32
    %c0_i32_0 = arith.constant 0 : i32
    %c0_i32_1 = arith.constant 0 : i32
    return %arg0, %c0_i32, %c0_i32_0 : i32, i32, i32
  }
  func.func @transform_1(%arg0: i32) -> (i32, i32) {
    %c0_i32 = arith.constant 0 : i32
    %c0_i32_0 = arith.constant 0 : i32
    %c0_i32_1 = arith.constant 0 : i32
    return %c0_i32, %c0_i32_0 : i32, i32
  }
  func.func @transform_2(%arg0: i32) -> (i32, i32) {
    %c0_i32 = arith.constant 0 : i32
    %c0_i32_0 = arith.constant 0 : i32
    %c0_i32_1 = arith.constant 0 : i32
    return %c0_i32, %c0_i32_0 : i32, i32
  }
  func.func @transform_3(%arg0: i32) -> (i32, i32) {
    %c0_i32 = arith.constant 0 : i32
    %c0_i32_0 = arith.constant 0 : i32
    %c0_i32_1 = arith.constant 0 : i32
    return %c0_i32, %c0_i32_0 : i32, i32
  }
  func.func @transform_4(%arg0: i32) -> (i32, i32) {
    %c0_i32 = arith.constant 0 : i32
    %c0_i32_0 = arith.constant 0 : i32
    %c0_i32_1 = arith.constant 0 : i32
    return %c0_i32, %c0_i32_0 : i32, i32
  }
  func.func @transform_5(%arg0: i32) -> (i32, i32) {
    %c0_i32 = arith.constant 0 : i32
    %c0_i32_0 = arith.constant 0 : i32
    %c0_i32_1 = arith.constant 0 : i32
    return %c0_i32, %c0_i32_0 : i32, i32
  }
  func.func @transform_6(%arg0: i32) -> (i32, i32) {
    %c0_i32 = arith.constant 0 : i32
    %c0_i32_0 = arith.constant 0 : i32
    %c0_i32_1 = arith.constant 0 : i32
    return %c0_i32, %c0_i32_0 : i32, i32
  }
  func.func @transform_7(%arg0: i32) -> (i32, i32) {
    %c0_i32 = arith.constant 0 : i32
    %c0_i32_0 = arith.constant 0 : i32
    %c0_i32_1 = arith.constant 0 : i32
    return %c0_i32, %c0_i32_0 : i32, i32
  }
  func.func @transform_8(%arg0: i32) -> (i32, i32) {
    %c0_i32 = arith.constant 0 : i32
    %c0_i32_0 = arith.constant 0 : i32
    %c0_i32_1 = arith.constant 0 : i32
    return %c0_i32, %c0_i32_0 : i32, i32
  }
  func.func @transform_9(%arg0: i32) -> (i32, i32) {
    %c0_i32 = arith.constant 0 : i32
    %c0_i32_0 = arith.constant 0 : i32
    %c0_i32_1 = arith.constant 0 : i32
    return %c0_i32, %c0_i32_0 : i32, i32
  }
  func.func @transform_10(%arg0: i32) -> (i32, i32) {
    %c0_i32 = arith.constant 0 : i32
    %c0_i32_0 = arith.constant 0 : i32
    %c0_i32_1 = arith.constant 0 : i32
    return %c0_i32, %c0_i32_0 : i32, i32
  }
  func.func @transform_11(%arg0: i32) -> (i32, i32) {
    %c0_i32 = arith.constant 0 : i32
    %c0_i32_0 = arith.constant 0 : i32
    %c0_i32_1 = arith.constant 0 : i32
    return %c0_i32, %c0_i32_0 : i32, i32
  }
  func.func @transform_12(%arg0: i32) -> (i32, i32) {
    %c0_i32 = arith.constant 0 : i32
    %c0_i32_0 = arith.constant 0 : i32
    %c0_i32_1 = arith.constant 0 : i32
    return %c0_i32, %c0_i32_0 : i32, i32
  }
  func.func @transform_13(%arg0: i32) -> (i32, i32, i32) {
    %c0_i32 = arith.constant 0 : i32
    %c0_i32_0 = arith.constant 0 : i32
    %c0_i32_1 = arith.constant 0 : i32
    return %arg0, %c0_i32, %c0_i32_0 : i32, i32, i32
  }
}

module attributes {stable_mosaic.version = 11 : i64} {
  func.func @_gru_kernel(%arg0: memref<4x2x48xf32, #tpu.memory_space<vmem>>, %arg1: memref<2x48xf32, #tpu.memory_space<vmem>>, %arg2: memref<48x144xf32, #tpu.memory_space<vmem>>, %arg3: memref<48x144xf32, #tpu.memory_space<vmem>>, %arg4: memref<1x144xf32, #tpu.memory_space<vmem>>, %arg5: memref<1x144xf32, #tpu.memory_space<vmem>>, %arg6: memref<4x2x48xf32, #tpu.memory_space<vmem>>, %arg7: memref<2x48xf32, #tpu.memory_space<vmem>>) attributes {dimension_semantics = [], scalar_prefetch = 0 : i64, scratch_operands = 0 : i64, tpu.core_type = #tpu.core_type<tc>} {
    %c0 = arith.constant 0 : index
    %c0_0 = arith.constant 0 : index
    %0 = vector.load %arg2[%c0, %c0_0] : memref<48x144xf32, #tpu.memory_space<vmem>>, vector<48x144xf32>
    %1 = arith.truncf %0 : vector<48x144xf32> to vector<48x144xbf16>
    %c0_1 = arith.constant 0 : index
    %c0_2 = arith.constant 0 : index
    %2 = vector.load %arg3[%c0_1, %c0_2] : memref<48x144xf32, #tpu.memory_space<vmem>>, vector<48x144xf32>
    %3 = arith.truncf %2 : vector<48x144xf32> to vector<48x144xbf16>
    %c0_3 = arith.constant 0 : index
    %c0_4 = arith.constant 0 : index
    %4 = vector.load %arg4[%c0_3, %c0_4] : memref<1x144xf32, #tpu.memory_space<vmem>>, vector<1x144xf32>
    %c0_5 = arith.constant 0 : index
    %c0_6 = arith.constant 0 : index
    %5 = vector.load %arg5[%c0_5, %c0_6] : memref<1x144xf32, #tpu.memory_space<vmem>>, vector<1x144xf32>
    %c0_7 = arith.constant 0 : index
    %c0_8 = arith.constant 0 : index
    %6 = vector.load %arg1[%c0_7, %c0_8] : memref<2x48xf32, #tpu.memory_space<vmem>>, vector<2x48xf32>
    %c0_9 = arith.constant 0 : index
    %c0_10 = arith.constant 0 : index
    %c0_11 = arith.constant 0 : index
    %7 = vector.load %arg0[%c0_9, %c0_10, %c0_11] : memref<4x2x48xf32, #tpu.memory_space<vmem>>, vector<1x2x48xf32>
    %8 = vector.shape_cast %7 : vector<1x2x48xf32> to vector<2x48xf32>
    %9 = arith.truncf %8 : vector<2x48xf32> to vector<2x48xbf16>
    %cst = arith.constant dense<0.000000e+00> : vector<2x144xf32>
    %10 = tpu.matmul %9, %1, %cst {dimension_numbers = #tpu.dot_dimension_numbers<[1], [0], [0], [1], [0, 0, 1, 1], [], []>} : vector<2x48xbf16>, vector<48x144xbf16>, vector<2x144xf32> -> vector<2x144xf32>
    %11 = vector.broadcast %4 : vector<1x144xf32> to vector<2x144xf32>
    %12 = arith.addf %10, %11 : vector<2x144xf32>
    %13 = arith.truncf %6 : vector<2x48xf32> to vector<2x48xbf16>
    %cst_12 = arith.constant dense<0.000000e+00> : vector<2x144xf32>
    %14 = tpu.matmul %13, %3, %cst_12 {dimension_numbers = #tpu.dot_dimension_numbers<[1], [0], [0], [1], [0, 0, 1, 1], [], []>} : vector<2x48xbf16>, vector<48x144xbf16>, vector<2x144xf32> -> vector<2x144xf32>
    %15 = vector.broadcast %5 : vector<1x144xf32> to vector<2x144xf32>
    %16 = arith.addf %14, %15 : vector<2x144xf32>
    %17 = vector.extract_strided_slice %12 {offsets = [0, 0], sizes = [2, 48], strides = [1, 1]} : vector<2x144xf32> to vector<2x48xf32>
    %18 = vector.extract_strided_slice %16 {offsets = [0, 0], sizes = [2, 48], strides = [1, 1]} : vector<2x144xf32> to vector<2x48xf32>
    %19 = arith.addf %17, %18 : vector<2x48xf32>
    %20 = arith.negf %19 : vector<2x48xf32>
    %21 = math.exp %20 : vector<2x48xf32>
    %cst_13 = arith.constant 1.000000e+00 : f32
    %22 = vector.broadcast %cst_13 : f32 to vector<2x48xf32>
    %23 = arith.addf %22, %21 : vector<2x48xf32>
    %24 = arith.divf %22, %23 : vector<2x48xf32>
    %25 = vector.extract_strided_slice %12 {offsets = [0, 48], sizes = [2, 48], strides = [1, 1]} : vector<2x144xf32> to vector<2x48xf32>
    %26 = vector.extract_strided_slice %16 {offsets = [0, 48], sizes = [2, 48], strides = [1, 1]} : vector<2x144xf32> to vector<2x48xf32>
    %27 = arith.addf %25, %26 : vector<2x48xf32>
    %28 = arith.negf %27 : vector<2x48xf32>
    %29 = math.exp %28 : vector<2x48xf32>
    %cst_14 = arith.constant 1.000000e+00 : f32
    %30 = vector.broadcast %cst_14 : f32 to vector<2x48xf32>
    %31 = arith.addf %30, %29 : vector<2x48xf32>
    %32 = arith.divf %30, %31 : vector<2x48xf32>
    %33 = vector.extract_strided_slice %12 {offsets = [0, 96], sizes = [2, 48], strides = [1, 1]} : vector<2x144xf32> to vector<2x48xf32>
    %34 = vector.extract_strided_slice %16 {offsets = [0, 96], sizes = [2, 48], strides = [1, 1]} : vector<2x144xf32> to vector<2x48xf32>
    %35 = arith.mulf %24, %34 : vector<2x48xf32>
    %36 = arith.addf %33, %35 : vector<2x48xf32>
    %37 = math.tanh %36 : vector<2x48xf32>
    %cst_15 = arith.constant 1.000000e+00 : f32
    %38 = vector.broadcast %cst_15 : f32 to vector<2x48xf32>
    %39 = arith.subf %38, %32 : vector<2x48xf32>
    %40 = arith.mulf %39, %37 : vector<2x48xf32>
    %41 = arith.mulf %32, %6 : vector<2x48xf32>
    %42 = arith.addf %40, %41 : vector<2x48xf32>
    %c0_16 = arith.constant 0 : index
    %c0_17 = arith.constant 0 : index
    %c0_18 = arith.constant 0 : index
    %43 = vector.load %arg6[%c0_16, %c0_17, %c0_18] : memref<4x2x48xf32, #tpu.memory_space<vmem>>, vector<1x2x48xf32>
    %44 = vector.shape_cast %43 : vector<1x2x48xf32> to vector<2x48xf32>
    %45 = vector.shape_cast %42 : vector<2x48xf32> to vector<1x2x48xf32>
    tpu.vector_store %arg6[%c0_16, %c0_17, %c0_18], %45 {strides = array<i32>} : memref<4x2x48xf32, #tpu.memory_space<vmem>>, vector<1x2x48xf32>,
    %c1 = arith.constant 1 : index
    %c0_19 = arith.constant 0 : index
    %c0_20 = arith.constant 0 : index
    %46 = vector.load %arg0[%c1, %c0_19, %c0_20] : memref<4x2x48xf32, #tpu.memory_space<vmem>>, vector<1x2x48xf32>
    %47 = vector.shape_cast %46 : vector<1x2x48xf32> to vector<2x48xf32>
    %48 = arith.truncf %47 : vector<2x48xf32> to vector<2x48xbf16>
    %cst_21 = arith.constant dense<0.000000e+00> : vector<2x144xf32>
    %49 = tpu.matmul %48, %1, %cst_21 {dimension_numbers = #tpu.dot_dimension_numbers<[1], [0], [0], [1], [0, 0, 1, 1], [], []>} : vector<2x48xbf16>, vector<48x144xbf16>, vector<2x144xf32> -> vector<2x144xf32>
    %50 = vector.broadcast %4 : vector<1x144xf32> to vector<2x144xf32>
    %51 = arith.addf %49, %50 : vector<2x144xf32>
    %52 = arith.truncf %42 : vector<2x48xf32> to vector<2x48xbf16>
    %cst_22 = arith.constant dense<0.000000e+00> : vector<2x144xf32>
    %53 = tpu.matmul %52, %3, %cst_22 {dimension_numbers = #tpu.dot_dimension_numbers<[1], [0], [0], [1], [0, 0, 1, 1], [], []>} : vector<2x48xbf16>, vector<48x144xbf16>, vector<2x144xf32> -> vector<2x144xf32>
    %54 = vector.broadcast %5 : vector<1x144xf32> to vector<2x144xf32>
    %55 = arith.addf %53, %54 : vector<2x144xf32>
    %56 = vector.extract_strided_slice %51 {offsets = [0, 0], sizes = [2, 48], strides = [1, 1]} : vector<2x144xf32> to vector<2x48xf32>
    %57 = vector.extract_strided_slice %55 {offsets = [0, 0], sizes = [2, 48], strides = [1, 1]} : vector<2x144xf32> to vector<2x48xf32>
    %58 = arith.addf %56, %57 : vector<2x48xf32>
    %59 = arith.negf %58 : vector<2x48xf32>
    %60 = math.exp %59 : vector<2x48xf32>
    %cst_23 = arith.constant 1.000000e+00 : f32
    %61 = vector.broadcast %cst_23 : f32 to vector<2x48xf32>
    %62 = arith.addf %61, %60 : vector<2x48xf32>
    %63 = arith.divf %61, %62 : vector<2x48xf32>
    %64 = vector.extract_strided_slice %51 {offsets = [0, 48], sizes = [2, 48], strides = [1, 1]} : vector<2x144xf32> to vector<2x48xf32>
    %65 = vector.extract_strided_slice %55 {offsets = [0, 48], sizes = [2, 48], strides = [1, 1]} : vector<2x144xf32> to vector<2x48xf32>
    %66 = arith.addf %64, %65 : vector<2x48xf32>
    %67 = arith.negf %66 : vector<2x48xf32>
    %68 = math.exp %67 : vector<2x48xf32>
    %cst_24 = arith.constant 1.000000e+00 : f32
    %69 = vector.broadcast %cst_24 : f32 to vector<2x48xf32>
    %70 = arith.addf %69, %68 : vector<2x48xf32>
    %71 = arith.divf %69, %70 : vector<2x48xf32>
    %72 = vector.extract_strided_slice %51 {offsets = [0, 96], sizes = [2, 48], strides = [1, 1]} : vector<2x144xf32> to vector<2x48xf32>
    %73 = vector.extract_strided_slice %55 {offsets = [0, 96], sizes = [2, 48], strides = [1, 1]} : vector<2x144xf32> to vector<2x48xf32>
    %74 = arith.mulf %63, %73 : vector<2x48xf32>
    %75 = arith.addf %72, %74 : vector<2x48xf32>
    %76 = math.tanh %75 : vector<2x48xf32>
    %cst_25 = arith.constant 1.000000e+00 : f32
    %77 = vector.broadcast %cst_25 : f32 to vector<2x48xf32>
    %78 = arith.subf %77, %71 : vector<2x48xf32>
    %79 = arith.mulf %78, %76 : vector<2x48xf32>
    %80 = arith.mulf %71, %42 : vector<2x48xf32>
    %81 = arith.addf %79, %80 : vector<2x48xf32>
    %c1_26 = arith.constant 1 : index
    %c0_27 = arith.constant 0 : index
    %c0_28 = arith.constant 0 : index
    %82 = vector.load %arg6[%c1_26, %c0_27, %c0_28] : memref<4x2x48xf32, #tpu.memory_space<vmem>>, vector<1x2x48xf32>
    %83 = vector.shape_cast %82 : vector<1x2x48xf32> to vector<2x48xf32>
    %84 = vector.shape_cast %81 : vector<2x48xf32> to vector<1x2x48xf32>
    tpu.vector_store %arg6[%c1_26, %c0_27, %c0_28], %84 {strides = array<i32>} : memref<4x2x48xf32, #tpu.memory_space<vmem>>, vector<1x2x48xf32>,
    %c2 = arith.constant 2 : index
    %c0_29 = arith.constant 0 : index
    %c0_30 = arith.constant 0 : index
    %85 = vector.load %arg0[%c2, %c0_29, %c0_30] : memref<4x2x48xf32, #tpu.memory_space<vmem>>, vector<1x2x48xf32>
    %86 = vector.shape_cast %85 : vector<1x2x48xf32> to vector<2x48xf32>
    %87 = arith.truncf %86 : vector<2x48xf32> to vector<2x48xbf16>
    %cst_31 = arith.constant dense<0.000000e+00> : vector<2x144xf32>
    %88 = tpu.matmul %87, %1, %cst_31 {dimension_numbers = #tpu.dot_dimension_numbers<[1], [0], [0], [1], [0, 0, 1, 1], [], []>} : vector<2x48xbf16>, vector<48x144xbf16>, vector<2x144xf32> -> vector<2x144xf32>
    %89 = vector.broadcast %4 : vector<1x144xf32> to vector<2x144xf32>
    %90 = arith.addf %88, %89 : vector<2x144xf32>
    %91 = arith.truncf %81 : vector<2x48xf32> to vector<2x48xbf16>
    %cst_32 = arith.constant dense<0.000000e+00> : vector<2x144xf32>
    %92 = tpu.matmul %91, %3, %cst_32 {dimension_numbers = #tpu.dot_dimension_numbers<[1], [0], [0], [1], [0, 0, 1, 1], [], []>} : vector<2x48xbf16>, vector<48x144xbf16>, vector<2x144xf32> -> vector<2x144xf32>
    %93 = vector.broadcast %5 : vector<1x144xf32> to vector<2x144xf32>
    %94 = arith.addf %92, %93 : vector<2x144xf32>
    %95 = vector.extract_strided_slice %90 {offsets = [0, 0], sizes = [2, 48], strides = [1, 1]} : vector<2x144xf32> to vector<2x48xf32>
    %96 = vector.extract_strided_slice %94 {offsets = [0, 0], sizes = [2, 48], strides = [1, 1]} : vector<2x144xf32> to vector<2x48xf32>
    %97 = arith.addf %95, %96 : vector<2x48xf32>
    %98 = arith.negf %97 : vector<2x48xf32>
    %99 = math.exp %98 : vector<2x48xf32>
    %cst_33 = arith.constant 1.000000e+00 : f32
    %100 = vector.broadcast %cst_33 : f32 to vector<2x48xf32>
    %101 = arith.addf %100, %99 : vector<2x48xf32>
    %102 = arith.divf %100, %101 : vector<2x48xf32>
    %103 = vector.extract_strided_slice %90 {offsets = [0, 48], sizes = [2, 48], strides = [1, 1]} : vector<2x144xf32> to vector<2x48xf32>
    %104 = vector.extract_strided_slice %94 {offsets = [0, 48], sizes = [2, 48], strides = [1, 1]} : vector<2x144xf32> to vector<2x48xf32>
    %105 = arith.addf %103, %104 : vector<2x48xf32>
    %106 = arith.negf %105 : vector<2x48xf32>
    %107 = math.exp %106 : vector<2x48xf32>
    %cst_34 = arith.constant 1.000000e+00 : f32
    %108 = vector.broadcast %cst_34 : f32 to vector<2x48xf32>
    %109 = arith.addf %108, %107 : vector<2x48xf32>
    %110 = arith.divf %108, %109 : vector<2x48xf32>
    %111 = vector.extract_strided_slice %90 {offsets = [0, 96], sizes = [2, 48], strides = [1, 1]} : vector<2x144xf32> to vector<2x48xf32>
    %112 = vector.extract_strided_slice %94 {offsets = [0, 96], sizes = [2, 48], strides = [1, 1]} : vector<2x144xf32> to vector<2x48xf32>
    %113 = arith.mulf %102, %112 : vector<2x48xf32>
    %114 = arith.addf %111, %113 : vector<2x48xf32>
    %115 = math.tanh %114 : vector<2x48xf32>
    %cst_35 = arith.constant 1.000000e+00 : f32
    %116 = vector.broadcast %cst_35 : f32 to vector<2x48xf32>
    %117 = arith.subf %116, %110 : vector<2x48xf32>
    %118 = arith.mulf %117, %115 : vector<2x48xf32>
    %119 = arith.mulf %110, %81 : vector<2x48xf32>
    %120 = arith.addf %118, %119 : vector<2x48xf32>
    %c2_36 = arith.constant 2 : index
    %c0_37 = arith.constant 0 : index
    %c0_38 = arith.constant 0 : index
    %121 = vector.load %arg6[%c2_36, %c0_37, %c0_38] : memref<4x2x48xf32, #tpu.memory_space<vmem>>, vector<1x2x48xf32>
    %122 = vector.shape_cast %121 : vector<1x2x48xf32> to vector<2x48xf32>
    %123 = vector.shape_cast %120 : vector<2x48xf32> to vector<1x2x48xf32>
    tpu.vector_store %arg6[%c2_36, %c0_37, %c0_38], %123 {strides = array<i32>} : memref<4x2x48xf32, #tpu.memory_space<vmem>>, vector<1x2x48xf32>,
    %c3 = arith.constant 3 : index
    %c0_39 = arith.constant 0 : index
    %c0_40 = arith.constant 0 : index
    %124 = vector.load %arg0[%c3, %c0_39, %c0_40] : memref<4x2x48xf32, #tpu.memory_space<vmem>>, vector<1x2x48xf32>
    %125 = vector.shape_cast %124 : vector<1x2x48xf32> to vector<2x48xf32>
    %126 = arith.truncf %125 : vector<2x48xf32> to vector<2x48xbf16>
    %cst_41 = arith.constant dense<0.000000e+00> : vector<2x144xf32>
    %127 = tpu.matmul %126, %1, %cst_41 {dimension_numbers = #tpu.dot_dimension_numbers<[1], [0], [0], [1], [0, 0, 1, 1], [], []>} : vector<2x48xbf16>, vector<48x144xbf16>, vector<2x144xf32> -> vector<2x144xf32>
    %128 = vector.broadcast %4 : vector<1x144xf32> to vector<2x144xf32>
    %129 = arith.addf %127, %128 : vector<2x144xf32>
    %130 = arith.truncf %120 : vector<2x48xf32> to vector<2x48xbf16>
    %cst_42 = arith.constant dense<0.000000e+00> : vector<2x144xf32>
    %131 = tpu.matmul %130, %3, %cst_42 {dimension_numbers = #tpu.dot_dimension_numbers<[1], [0], [0], [1], [0, 0, 1, 1], [], []>} : vector<2x48xbf16>, vector<48x144xbf16>, vector<2x144xf32> -> vector<2x144xf32>
    %132 = vector.broadcast %5 : vector<1x144xf32> to vector<2x144xf32>
    %133 = arith.addf %131, %132 : vector<2x144xf32>
    %134 = vector.extract_strided_slice %129 {offsets = [0, 0], sizes = [2, 48], strides = [1, 1]} : vector<2x144xf32> to vector<2x48xf32>
    %135 = vector.extract_strided_slice %133 {offsets = [0, 0], sizes = [2, 48], strides = [1, 1]} : vector<2x144xf32> to vector<2x48xf32>
    %136 = arith.addf %134, %135 : vector<2x48xf32>
    %137 = arith.negf %136 : vector<2x48xf32>
    %138 = math.exp %137 : vector<2x48xf32>
    %cst_43 = arith.constant 1.000000e+00 : f32
    %139 = vector.broadcast %cst_43 : f32 to vector<2x48xf32>
    %140 = arith.addf %139, %138 : vector<2x48xf32>
    %141 = arith.divf %139, %140 : vector<2x48xf32>
    %142 = vector.extract_strided_slice %129 {offsets = [0, 48], sizes = [2, 48], strides = [1, 1]} : vector<2x144xf32> to vector<2x48xf32>
    %143 = vector.extract_strided_slice %133 {offsets = [0, 48], sizes = [2, 48], strides = [1, 1]} : vector<2x144xf32> to vector<2x48xf32>
    %144 = arith.addf %142, %143 : vector<2x48xf32>
    %145 = arith.negf %144 : vector<2x48xf32>
    %146 = math.exp %145 : vector<2x48xf32>
    %cst_44 = arith.constant 1.000000e+00 : f32
    %147 = vector.broadcast %cst_44 : f32 to vector<2x48xf32>
    %148 = arith.addf %147, %146 : vector<2x48xf32>
    %149 = arith.divf %147, %148 : vector<2x48xf32>
    %150 = vector.extract_strided_slice %129 {offsets = [0, 96], sizes = [2, 48], strides = [1, 1]} : vector<2x144xf32> to vector<2x48xf32>
    %151 = vector.extract_strided_slice %133 {offsets = [0, 96], sizes = [2, 48], strides = [1, 1]} : vector<2x144xf32> to vector<2x48xf32>
    %152 = arith.mulf %141, %151 : vector<2x48xf32>
    %153 = arith.addf %150, %152 : vector<2x48xf32>
    %154 = math.tanh %153 : vector<2x48xf32>
    %cst_45 = arith.constant 1.000000e+00 : f32
    %155 = vector.broadcast %cst_45 : f32 to vector<2x48xf32>
    %156 = arith.subf %155, %149 : vector<2x48xf32>
    %157 = arith.mulf %156, %154 : vector<2x48xf32>
    %158 = arith.mulf %149, %120 : vector<2x48xf32>
    %159 = arith.addf %157, %158 : vector<2x48xf32>
    %c3_46 = arith.constant 3 : index
    %c0_47 = arith.constant 0 : index
    %c0_48 = arith.constant 0 : index
    %160 = vector.load %arg6[%c3_46, %c0_47, %c0_48] : memref<4x2x48xf32, #tpu.memory_space<vmem>>, vector<1x2x48xf32>
    %161 = vector.shape_cast %160 : vector<1x2x48xf32> to vector<2x48xf32>
    %162 = vector.shape_cast %159 : vector<2x48xf32> to vector<1x2x48xf32>
    tpu.vector_store %arg6[%c3_46, %c0_47, %c0_48], %162 {strides = array<i32>} : memref<4x2x48xf32, #tpu.memory_space<vmem>>, vector<1x2x48xf32>,
    %c0_49 = arith.constant 0 : index
    %c0_50 = arith.constant 0 : index
    %163 = vector.load %arg7[%c0_49, %c0_50] : memref<2x48xf32, #tpu.memory_space<vmem>>, vector<2x48xf32>
    tpu.vector_store %arg7[%c0_49, %c0_50], %159 {strides = array<i32>} : memref<2x48xf32, #tpu.memory_space<vmem>>, vector<2x48xf32>,
    return
  }
}

</mosaic_0001>

<llo_original>
// kernel: hbp_forward.11
$region0: #{hbp_forward.11}
  #allocation0 [shape = 'u32[]', space=smem, size = 0x4, offset = 0x4, fixed_abs, tag = 'smem constant byte address 0x4 - core index']
  #allocation1 [shape = 'u32[144,128]{1,0:T(1,128)}', space=vmem, size = 0x12000, scoped, tag = 'internal scratch']
  %s0 = inlined_call_operand.vmem [shape: f32[12,16], index: 0, kind: input, shape index: {}]
  %s1 = inlined_call_operand.vmem [shape: f32[16,32], index: 1, kind: input, shape index: {}]
  %s2 = inlined_call_operand.vmem [shape: f32[1,32], index: 2, kind: input, shape index: {}]
  %s3 = inlined_call_operand.vmem [shape: f32[12,32], index: 3, kind: output, shape index: {}]
  %s4 = sld [smem:[#allocation0]]
  $region22: #{hbp_forward.11} parent=0
    _
  %s6 = ssub.s32 1, %s4
  %s7 = scalar_select 0, %s6, %s4
  // Predicated region
  $region2: #{hbp_forward.11} parent=0 // pred_check
    _
  $region3: #{hbp_forward.11} parent=0 // pred_check_branch
    %9 = sbr.rel (0) target = $region5
  $region4: #{hbp_forward.11} parent=0 // pred_region
    _
  $region5: #{hbp_forward.11} parent=0 // pred_fallthru
    _
  // Predicated region
  $region6: #{hbp_forward.11} parent=0 // pred_check
    _
  $region7: #{hbp_forward.11} parent=0 // pred_check_branch
    %11 = sbr.rel (0) target = $region9
  $region8: #{hbp_forward.11} parent=0 // pred_region
    _
  $region9: #{hbp_forward.11} parent=0 // pred_fallthru
    _
  // Predicated region
  $region10: #{hbp_forward.11} parent=0 // pred_check
    _
  $region11: #{hbp_forward.11} parent=0 // pred_check_branch
    %13 = sbr.rel (0) target = $region13
  $region12: #{hbp_forward.11} parent=0 // pred_region
    _
  $region13: #{hbp_forward.11} parent=0 // pred_fallthru
    _
  %v15 = vld [vmem:[%s0] sm:$0xff]
  %v16 = vld [vmem:[%s0 + $0x8] sm:$0xf]
  %v17 = vpack.c.bf16 %v16, %v15
  %v18 = vld [vmem:[%s1] sm:$0xff]
  %v19 = vld [vmem:[%s1 + $0x8] sm:$0xff]
  %v20 = vpack.c.bf16 %v19, %v18
  %v21 = vld [vmem:[%s2] sm:$0x1]
  %v23 = vlaneseq
  %v24 = vshrl.u32 %v23, 7
  %v25 = vsub.s32 0, %v24
  %v26 = vrot.slane %v21, %v25
  %vm28 = vcmask 130048
  %v30 = vsel %vm28, %v17, 0
  %32 = vmatprep.subr.bf16.mxu0 0
  %33 = vmatpush1.bf16.msra.mxu0 %v20
  %34 = vmatprep.subr.bf16.mxu0 0
  %35 = vmatpush1.bf16.msra.mxu0 0
  %36 = vmatprep.subr.bf16.mxu0 0
  %37 = vmatpush1.bf16.msra.mxu0 0
  %38 = vmatprep.subr.bf16.mxu0 0
  %39 = vmatpush1.bf16.msra.mxu0 0
  %40 = vmatprep.subr.bf16.mxu0 0
  %41 = vmatpush1.bf16.msra.mxu0 0
  %42 = vmatprep.subr.bf16.mxu0 0
  %43 = vmatpush1.bf16.msra.mxu0 0
  %44 = vmatprep.subr.bf16.mxu0 0
  %45 = vmatpush1.bf16.msra.mxu0 0
  %46 = vmatprep.subr.bf16.mxu0 0
  %47 = vmatpush1.bf16.msra.mxu0 0
  %48 = vmatprep.subr.bf16.mxu0 0
  %49 = vmatpush1.bf16.msra.mxu0 0
  %50 = vmatprep.subr.bf16.mxu0 0
  %51 = vmatpush1.bf16.msra.mxu0 0
  %52 = vmatprep.subr.bf16.mxu0 0
  %53 = vmatpush1.bf16.msra.mxu0 0
  %54 = vmatprep.subr.bf16.mxu0 0
  %55 = vmatpush1.bf16.msra.mxu0 0
  %56 = vmatprep.subr.bf16.mxu0 0
  %57 = vmatpush1.bf16.msra.mxu0 0
  %58 = vmatprep.subr.bf16.mxu0 0
  %59 = vmatpush1.bf16.msra.mxu0 0
  %60 = vmatprep.subr.bf16.mxu0 0
  %61 = vmatpush1.bf16.msra.mxu0 0
  %62 = vmatprep.subr.bf16.mxu0 0
  %63 = vmatpush1.bf16.msra.mxu0 0
  %64 = vmatprep.mubr.bf16.mxu0 0
  %65 = vmatmul.mubr.bf16.gmra.mrb[0].mxu0 %v30
  %v66 = vpop.f32.mrb[0].mxu0
  %v67 = vadd.f32 %v26, %v66
  %v68 = vpop.f32.mrb[0].mxu0
  %v69 = vpop.f32.mrb[0].mxu0
  %v70 = vadd.f32 %v26, %v69
  %v71 = vpop.f32.mrb[0].mxu0
  %72 = vdwg.mxu0
  %vm73 = vcmask 261120
  %74 = vst.msk [vmem:[%s3] sm:$0xff] %vm73, %v67
  %vm75 = vcmask 257024
  %76 = vst.msk [vmem:[%s3 + $0x8] sm:$0xf] %vm75, %v70
  // Predicated region
  $region14: #{hbp_forward.11} parent=0 // pred_check
    _
  $region15: #{hbp_forward.11} parent=0 // pred_check_branch
    %78 = sbr.rel (0) target = $region17
  $region16: #{hbp_forward.11} parent=0 // pred_region
    _
  $region17: #{hbp_forward.11} parent=0 // pred_fallthru
    _
  // Predicated region
  $region18: #{hbp_forward.11} parent=0 // pred_check
    _
  $region19: #{hbp_forward.11} parent=0 // pred_check_branch
    %80 = sbr.rel (0) target = $region21
  $region20: #{hbp_forward.11} parent=0 // pred_region
    _
  $region21: #{hbp_forward.11} parent=0 // pred_fallthru
    _

// kernel: hbp_forward.12
$region0: #{hbp_forward.12}
  #allocation0 [shape = 'u32[]', space=smem, size = 0x4, offset = 0x4, fixed_abs, tag = 'smem constant byte address 0x4 - core index']
  #allocation1 [shape = 'u32[144,128]{1,0:T(1,128)}', space=vmem, size = 0x12000, scoped, tag = 'internal scratch']
  %s0 = inlined_call_operand.vmem [shape: f32[20,16], index: 0, kind: input, shape index: {}]
  %s1 = inlined_call_operand.vmem [shape: f32[16,32], index: 1, kind: input, shape index: {}]
  %s2 = inlined_call_operand.vmem [shape: f32[1,32], index: 2, kind: input, shape index: {}]
  %s3 = inlined_call_operand.vmem [shape: f32[20,32], index: 3, kind: output, shape index: {}]
  %s4 = sld [smem:[#allocation0]]
  $region22: #{hbp_forward.12} parent=0
    _
  %s6 = ssub.s32 1, %s4
  %s7 = scalar_select 0, %s6, %s4
  // Predicated region
  $region2: #{hbp_forward.12} parent=0 // pred_check
    _
  $region3: #{hbp_forward.12} parent=0 // pred_check_branch
    %9 = sbr.rel (0) target = $region5
  $region4: #{hbp_forward.12} parent=0 // pred_region
    _
  $region5: #{hbp_forward.12} parent=0 // pred_fallthru
    _
  // Predicated region
  $region6: #{hbp_forward.12} parent=0 // pred_check
    _
  $region7: #{hbp_forward.12} parent=0 // pred_check_branch
    %11 = sbr.rel (0) target = $region9
  $region8: #{hbp_forward.12} parent=0 // pred_region
    _
  $region9: #{hbp_forward.12} parent=0 // pred_fallthru
    _
  // Predicated region
  $region10: #{hbp_forward.12} parent=0 // pred_check
    _
  $region11: #{hbp_forward.12} parent=0 // pred_check_branch
    %13 = sbr.rel (0) target = $region13
  $region12: #{hbp_forward.12} parent=0 // pred_region
    _
  $region13: #{hbp_forward.12} parent=0 // pred_fallthru
    _
  %v15 = vld [vmem:[%s0] sm:$0xff]
  %v16 = vld [vmem:[%s0 + $0x8] sm:$0xff]
  %v17 = vld [vmem:[%s0 + $0x10] sm:$0xf]
  %v18 = vpack.c.bf16 %v16, %v15
  %v19 = vpack.c.bf16 %v17, %v17
  %v20 = vld [vmem:[%s1] sm:$0xff]
  %v21 = vld [vmem:[%s1 + $0x8] sm:$0xff]
  %v22 = vpack.c.bf16 %v21, %v20
  %v23 = vld [vmem:[%s2] sm:$0x1]
  %v25 = vlaneseq
  %v26 = vshrl.u32 %v25, 7
  %v27 = vsub.s32 0, %v26
  %v28 = vrot.slane %v23, %v27
  %vm30 = vcmask 130048
  %v32 = vsel %vm30, %v18, 0
  %v35 = vsel %vm30, %v19, 0
  %37 = vmatprep.subr.bf16.mxu0 0
  %38 = vmatpush1.bf16.msra.mxu0 %v22
  %39 = vmatprep.subr.bf16.mxu0 0
  %40 = vmatpush1.bf16.msra.mxu0 0
  %41 = vmatprep.subr.bf16.mxu0 0
  %42 = vmatpush1.bf16.msra.mxu0 0
  %43 = vmatprep.subr.bf16.mxu0 0
  %44 = vmatpush1.bf16.msra.mxu0 0
  %45 = vmatprep.subr.bf16.mxu0 0
  %46 = vmatpush1.bf16.msra.mxu0 0
  %47 = vmatprep.subr.bf16.mxu0 0
  %48 = vmatpush1.bf16.msra.mxu0 0
  %49 = vmatprep.subr.bf16.mxu0 0
  %50 = vmatpush1.bf16.msra.mxu0 0
  %51 = vmatprep.subr.bf16.mxu0 0
  %52 = vmatpush1.bf16.msra.mxu0 0
  %53 = vmatprep.subr.bf16.mxu0 0
  %54 = vmatpush1.bf16.msra.mxu0 0
  %55 = vmatprep.subr.bf16.mxu0 0
  %56 = vmatpush1.bf16.msra.mxu0 0
  %57 = vmatprep.subr.bf16.mxu0 0
  %58 = vmatpush1.bf16.msra.mxu0 0
  %59 = vmatprep.subr.bf16.mxu0 0
  %60 = vmatpush1.bf16.msra.mxu0 0
  %61 = vmatprep.subr.bf16.mxu0 0
  %62 = vmatpush1.bf16.msra.mxu0 0
  %63 = vmatprep.subr.bf16.mxu0 0
  %64 = vmatpush1.bf16.msra.mxu0 0
  %65 = vmatprep.subr.bf16.mxu0 0
  %66 = vmatpush1.bf16.msra.mxu0 0
  %67 = vmatprep.subr.bf16.mxu0 0
  %68 = vmatpush1.bf16.msra.mxu0 0
  %69 = vmatprep.mubr.bf16.mxu0 0
  %70 = vmatmul.mubr.bf16.gmra.mrb[0].mxu0 %v32
  %v71 = vpop.f32.mrb[0].mxu0
  %v72 = vadd.f32 %v28, %v71
  %v73 = vpop.f32.mrb[0].mxu0
  %v74 = vpop.f32.mrb[0].mxu0
  %v75 = vadd.f32 %v28, %v74
  %v76 = vpop.f32.mrb[0].mxu0
  %77 = vmatprep.mubr.bf16.mxu0 0
  %78 = vmatmul.mubr.bf16.gmra.mrb[0].mxu0 %v35
  %v79 = vpop.f32.mrb[0].mxu0
  %v80 = vadd.f32 %v28, %v79
  %v81 = vpop.f32.mrb[0].mxu0
  %v82 = vpop.f32.mrb[0].mxu0
  %v83 = vpop.f32.mrb[0].mxu0
  %84 = vdwg.mxu0
  %vm85 = vcmask 261120
  %86 = vst.msk [vmem:[%s3] sm:$0xff] %vm85, %v72
  %87 = vst.msk [vmem:[%s3 + $0x8] sm:$0xff] %vm85, %v75
  %vm88 = vcmask 257024
  %89 = vst.msk [vmem:[%s3 + $0x10] sm:$0xf] %vm88, %v80
  // Predicated region
  $region14: #{hbp_forward.12} parent=0 // pred_check
    _
  $region15: #{hbp_forward.12} parent=0 // pred_check_branch
    %91 = sbr.rel (0) target = $region17
  $region16: #{hbp_forward.12} parent=0 // pred_region
    _
  $region17: #{hbp_forward.12} parent=0 // pred_fallthru
    _
  // Predicated region
  $region18: #{hbp_forward.12} parent=0 // pred_check
    _
  $region19: #{hbp_forward.12} parent=0 // pred_check_branch
    %93 = sbr.rel (0) target = $region21
  $region20: #{hbp_forward.12} parent=0 // pred_region
    _
  $region21: #{hbp_forward.12} parent=0 // pred_fallthru
    _

// kernel: hbp_forward.13
$region0: #{hbp_forward.13}
  #allocation0 [shape = 'u32[]', space=smem, size = 0x4, offset = 0x4, fixed_abs, tag = 'smem constant byte address 0x4 - core index']
  #allocation1 [shape = 'u32[144,128]{1,0:T(1,128)}', space=vmem, size = 0x12000, scoped, tag = 'internal scratch']
  %s0 = inlined_call_operand.vmem [shape: f32[20,16], index: 0, kind: input, shape index: {}]
  %s1 = inlined_call_operand.vmem [shape: f32[16,64], index: 1, kind: input, shape index: {}]
  %s2 = inlined_call_operand.vmem [shape: f32[1,64], index: 2, kind: input, shape index: {}]
  %s3 = inlined_call_operand.vmem [shape: f32[20,64], index: 3, kind: output, shape index: {}]
  %s4 = sld [smem:[#allocation0]]
  $region22: #{hbp_forward.13} parent=0
    _
  %s6 = ssub.s32 1, %s4
  %s7 = scalar_select 0, %s6, %s4
  // Predicated region
  $region2: #{hbp_forward.13} parent=0 // pred_check
    _
  $region3: #{hbp_forward.13} parent=0 // pred_check_branch
    %9 = sbr.rel (0) target = $region5
  $region4: #{hbp_forward.13} parent=0 // pred_region
    _
  $region5: #{hbp_forward.13} parent=0 // pred_fallthru
    _
  // Predicated region
  $region6: #{hbp_forward.13} parent=0 // pred_check
    _
  $region7: #{hbp_forward.13} parent=0 // pred_check_branch
    %11 = sbr.rel (0) target = $region9
  $region8: #{hbp_forward.13} parent=0 // pred_region
    _
  $region9: #{hbp_forward.13} parent=0 // pred_fallthru
    _
  // Predicated region
  $region10: #{hbp_forward.13} parent=0 // pred_check
    _
  $region11: #{hbp_forward.13} parent=0 // pred_check_branch
    %13 = sbr.rel (0) target = $region13
  $region12: #{hbp_forward.13} parent=0 // pred_region
    _
  $region13: #{hbp_forward.13} parent=0 // pred_fallthru
    _
  %v15 = vld [vmem:[%s0] sm:$0xff]
  %v16 = vld [vmem:[%s0 + $0x8] sm:$0xff]
  %v17 = vld [vmem:[%s0 + $0x10] sm:$0xf]
  %v18 = vpack.c.bf16 %v16, %v15
  %v19 = vpack.c.bf16 %v17, %v17
  %v20 = vld [vmem:[%s1] sm:$0xff]
  %v21 = vld [vmem:[%s1 + $0x8] sm:$0xff]
  %v22 = vpack.c.bf16 %v21, %v20
  %v23 = vld [vmem:[%s2] sm:$0x1]
  %v25 = vlaneseq
  %v26 = vshrl.u32 %v25, 7
  %v27 = vsub.s32 0, %v26
  %v28 = vrot.slane %v23, %v27
  %vm30 = vcmask 130048
  %v32 = vsel %vm30, %v18, 0
  %v35 = vsel %vm30, %v19, 0
  %37 = vmatprep.subr.bf16.mxu0 0
  %38 = vmatpush1.bf16.msra.mxu0 %v22
  %39 = vmatprep.subr.bf16.mxu0 0
  %40 = vmatpush1.bf16.msra.mxu0 0
  %41 = vmatprep.subr.bf16.mxu0 0
  %42 = vmatpush1.bf16.msra.mxu0 0
  %43 = vmatprep.subr.bf16.mxu0 0
  %44 = vmatpush1.bf16.msra.mxu0 0
  %45 = vmatprep.subr.bf16.mxu0 0
  %46 = vmatpush1.bf16.msra.mxu0 0
  %47 = vmatprep.subr.bf16.mxu0 0
  %48 = vmatpush1.bf16.msra.mxu0 0
  %49 = vmatprep.subr.bf16.mxu0 0
  %50 = vmatpush1.bf16.msra.mxu0 0
  %51 = vmatprep.subr.bf16.mxu0 0
  %52 = vmatpush1.bf16.msra.mxu0 0
  %53 = vmatprep.subr.bf16.mxu0 0
  %54 = vmatpush1.bf16.msra.mxu0 0
  %55 = vmatprep.subr.bf16.mxu0 0
  %56 = vmatpush1.bf16.msra.mxu0 0
  %57 = vmatprep.subr.bf16.mxu0 0
  %58 = vmatpush1.bf16.msra.mxu0 0
  %59 = vmatprep.subr.bf16.mxu0 0
  %60 = vmatpush1.bf16.msra.mxu0 0
  %61 = vmatprep.subr.bf16.mxu0 0
  %62 = vmatpush1.bf16.msra.mxu0 0
  %63 = vmatprep.subr.bf16.mxu0 0
  %64 = vmatpush1.bf16.msra.mxu0 0
  %65 = vmatprep.subr.bf16.mxu0 0
  %66 = vmatpush1.bf16.msra.mxu0 0
  %67 = vmatprep.subr.bf16.mxu0 0
  %68 = vmatpush1.bf16.msra.mxu0 0
  %69 = vmatprep.mubr.bf16.mxu0 0
  %70 = vmatmul.mubr.bf16.gmra.mrb[0].mxu0 %v32
  %v71 = vpop.f32.mrb[0].mxu0
  %v72 = vadd.f32 %v28, %v71
  %v73 = vpop.f32.mrb[0].mxu0
  %v74 = vpop.f32.mrb[0].mxu0
  %v75 = vadd.f32 %v28, %v74
  %v76 = vpop.f32.mrb[0].mxu0
  %77 = vmatprep.mubr.bf16.mxu0 0
  %78 = vmatmul.mubr.bf16.gmra.mrb[0].mxu0 %v35
  %v79 = vpop.f32.mrb[0].mxu0
  %v80 = vadd.f32 %v28, %v79
  %v81 = vpop.f32.mrb[0].mxu0
  %v82 = vpop.f32.mrb[0].mxu0
  %v83 = vpop.f32.mrb[0].mxu0
  %84 = vdwg.mxu0
  %vm85 = vcmask 523264
  %86 = vst.msk [vmem:[%s3] sm:$0xff] %vm85, %v72
  %87 = vst.msk [vmem:[%s3 + $0x8] sm:$0xff] %vm85, %v75
  %vm88 = vcmask 519168
  %89 = vst.msk [vmem:[%s3 + $0x10] sm:$0xf] %vm88, %v80
  // Predicated region
  $region14: #{hbp_forward.13} parent=0 // pred_check
    _
  $region15: #{hbp_forward.13} parent=0 // pred_check_branch
    %91 = sbr.rel (0) target = $region17
  $region16: #{hbp_forward.13} parent=0 // pred_region
    _
  $region17: #{hbp_forward.13} parent=0 // pred_fallthru
    _
  // Predicated region
  $region18: #{hbp_forward.13} parent=0 // pred_check
    _
  $region19: #{hbp_forward.13} parent=0 // pred_check_branch
    %93 = sbr.rel (0) target = $region21
  $region20: #{hbp_forward.13} parent=0 // pred_region
    _
  $region21: #{hbp_forward.13} parent=0 // pred_fallthru
    _

// kernel: hbp_forward.21
$region0: #{hbp_forward.21}
  #allocation0 [shape = 'u32[]', space=smem, size = 0x4, offset = 0x4, fixed_abs, tag = 'smem constant byte address 0x4 - core index']
  #allocation1 [shape = 'u32[144,128]{1,0:T(1,128)}', space=vmem, size = 0x12000, scoped, tag = 'internal scratch']
  %s0 = inlined_call_operand.vmem [shape: f32[4,2,48], index: 0, kind: input, shape index: {}]
  %s1 = inlined_call_operand.vmem [shape: f32[2,48], index: 1, kind: input, shape index: {}]
  %s2 = inlined_call_operand.vmem [shape: f32[48,144], index: 2, kind: input, shape index: {}]
  %s3 = inlined_call_operand.vmem [shape: f32[48,144], index: 3, kind: input, shape index: {}]
  %s4 = inlined_call_operand.vmem [shape: f32[1,144], index: 4, kind: input, shape index: {}]
  %s5 = inlined_call_operand.vmem [shape: f32[1,144], index: 5, kind: input, shape index: {}]
  %s6 = inlined_call_operand.vmem [shape: f32[4,2,48], index: 6, kind: output, shape index: {0}]
  %s7 = inlined_call_operand.hbm [shape: f32[2,48], index: 7, kind: output, shape index: {1}]
  %8 = xla_tuple %s6, %s7
  %s9 = sld [smem:[#allocation0]]
  $region42: #{hbp_forward.21} parent=0
    _
  %s11 = ssub.s32 1, %s9
  %s12 = scalar_select 0, %s11, %s9
  $region1: #{hbp_forward.21} parent=0
    #allocation2 [shape = 'u8[1024]{0}', space=vmem, size = 0x400, scoped, tag = 'output window, operand 1, single buffered']
    #allocation3 [shape = 's32[1]{0}', space=sflag, size = 0x4, scoped, tag = 'scoped memory for hbp_forward.21']
    %13 = vsyncpa [#allocation3], 0
    // Predicated region
    $region2: #{hbp_forward.21} parent=1 // pred_check
      _
    $region3: #{hbp_forward.21} parent=1 // pred_check_branch
      %15 = sbr.rel (0) target = $region5
    $region4: #{hbp_forward.21} parent=1 // pred_region
      _
    $region5: #{hbp_forward.21} parent=1 // pred_fallthru
      _
    // Predicated region
    $region6: #{hbp_forward.21} parent=1 // pred_check
      _
    $region7: #{hbp_forward.21} parent=1 // pred_check_branch
      %17 = sbr.rel (0) target = $region9
    $region8: #{hbp_forward.21} parent=1 // pred_region
      _
    $region9: #{hbp_forward.21} parent=1 // pred_fallthru
      _
    // Predicated region
    $region10: #{hbp_forward.21} parent=1 // pred_check
      _
    $region11: #{hbp_forward.21} parent=1 // pred_check_branch
      %19 = sbr.rel (0) target = $region13
    $region12: #{hbp_forward.21} parent=1 // pred_region
      _
    $region13: #{hbp_forward.21} parent=1 // pred_fallthru
      _
    // Predicated region
    $region14: #{hbp_forward.21} parent=1 // pred_check
      _
    $region15: #{hbp_forward.21} parent=1 // pred_check_branch
      %21 = sbr.rel (0) target = $region17
    $region16: #{hbp_forward.21} parent=1 // pred_region
      _
    $region17: #{hbp_forward.21} parent=1 // pred_fallthru
      _
    // Predicated region
    $region18: #{hbp_forward.21} parent=1 // pred_check
      _
    $region19: #{hbp_forward.21} parent=1 // pred_check_branch
      %23 = sbr.rel (0) target = $region21
    $region20: #{hbp_forward.21} parent=1 // pred_region
      _
    $region21: #{hbp_forward.21} parent=1 // pred_fallthru
      _
    // Predicated region
    $region22: #{hbp_forward.21} parent=1 // pred_check
      _
    $region23: #{hbp_forward.21} parent=1 // pred_check_branch
      %25 = sbr.rel (0) target = $region25
    $region24: #{hbp_forward.21} parent=1 // pred_region
      _
    $region25: #{hbp_forward.21} parent=1 // pred_fallthru
      _
    %v27 = vld [vmem:[%s2] sm:$0xff]
    %v28 = vld [vmem:[%s2 + $0x8] sm:$0xff]
    %v29 = vld [vmem:[%s2 + $0x10] sm:$0xff]
    %v30 = vld [vmem:[%s2 + $0x18] sm:$0xff]
    %v31 = vld [vmem:[%s2 + $0x20] sm:$0xff]
    %v32 = vld [vmem:[%s2 + $0x28] sm:$0xff]
    %v33 = vld [vmem:[%s2 + $0x30] sm:$0xff]
    %v34 = vld [vmem:[%s2 + $0x38] sm:$0xff]
    %v35 = vld [vmem:[%s2 + $0x40] sm:$0xff]
    %v36 = vld [vmem:[%s2 + $0x48] sm:$0xff]
    %v37 = vld [vmem:[%s2 + $0x50] sm:$0xff]
    %v38 = vld [vmem:[%s2 + $0x58] sm:$0xff]
    %v39 = vpack.c.bf16 %v29, %v27
    %v40 = vpack.c.bf16 %v30, %v28
    %v41 = vpack.c.bf16 %v33, %v31
    %v42 = vpack.c.bf16 %v34, %v32
    %v43 = vpack.c.bf16 %v37, %v35
    %v44 = vpack.c.bf16 %v38, %v36
    %v45 = vld [vmem:[%s3] sm:$0xff]
    %v46 = vld [vmem:[%s3 + $0x8] sm:$0xff]
    %v47 = vld [vmem:[%s3 + $0x10] sm:$0xff]
    %v48 = vld [vmem:[%s3 + $0x18] sm:$0xff]
    %v49 = vld [vmem:[%s3 + $0x20] sm:$0xff]
    %v50 = vld [vmem:[%s3 + $0x28] sm:$0xff]
    %v51 = vld [vmem:[%s3 + $0x30] sm:$0xff]
    %v52 = vld [vmem:[%s3 + $0x38] sm:$0xff]
    %v53 = vld [vmem:[%s3 + $0x40] sm:$0xff]
    %v54 = vld [vmem:[%s3 + $0x48] sm:$0xff]
    %v55 = vld [vmem:[%s3 + $0x50] sm:$0xff]
    %v56 = vld [vmem:[%s3 + $0x58] sm:$0xff]
    %v57 = vpack.c.bf16 %v47, %v45
    %v58 = vpack.c.bf16 %v48, %v46
    %v59 = vpack.c.bf16 %v51, %v49
    %v60 = vpack.c.bf16 %v52, %v50
    %v61 = vpack.c.bf16 %v55, %v53
    %v62 = vpack.c.bf16 %v56, %v54
    %v63 = vld [vmem:[%s4] sm:$0x3]
    %v64 = vld [vmem:[%s5] sm:$0x3]
    %v65 = vld [vmem:[%s1] sm:$0x3]
    %v66 = vld [vmem:[%s0] sm:$0x3]
    %v67 = vpack.c.bf16 %v66, %v66
    %v69 = vlaneseq
    %v70 = vshrl.u32 %v69, 7
    %v71 = vsub.s32 0, %v70
    %v72 = vrot.slane %v63, %v71
    %v73 = vlaneseq
    %v74 = vshrl.u32 %v73, 7
    %v75 = vsub.s32 1, %v74
    %v76 = vrot.slane %v63, %v75
    %vm79 = vcmask 392192
    %v81 = vsel %vm79, %v67, 0
    %83 = vmatprep.subr.bf16.mxu0 %v40
    %84 = vmatpush1.bf16.msra.mxu0 %v39
    %85 = vmatprep.subr.bf16.mxu0 %v42
    %86 = vmatpush1.bf16.msra.mxu0 %v41
    %87 = vmatprep.subr.bf16.mxu0 %v44
    %88 = vmatpush1.bf16.msra.mxu0 %v43
    %89 = vmatprep.subr.bf16.mxu0 0
    %90 = vmatpush1.bf16.msra.mxu0 0
    %91 = vmatprep.subr.bf16.mxu0 0
    %92 = vmatpush1.bf16.msra.mxu0 0
    %93 = vmatprep.subr.bf16.mxu0 0
    %94 = vmatpush1.bf16.msra.mxu0 0
    %95 = vmatprep.subr.bf16.mxu0 0
    %96 = vmatpush1.bf16.msra.mxu0 0
    %97 = vmatprep.subr.bf16.mxu0 0
    %98 = vmatpush1.bf16.msra.mxu0 0
    %99 = vmatprep.subr.bf16.mxu0 0
    %100 = vmatpush1.bf16.msra.mxu0 0
    %101 = vmatprep.subr.bf16.mxu0 0
    %102 = vmatpush1.bf16.msra.mxu0 0
    %103 = vmatprep.subr.bf16.mxu0 0
    %104 = vmatpush1.bf16.msra.mxu0 0
    %105 = vmatprep.subr.bf16.mxu0 0
    %106 = vmatpush1.bf16.msra.mxu0 0
    %107 = vmatprep.subr.bf16.mxu0 0
    %108 = vmatpush1.bf16.msra.mxu0 0
    %109 = vmatprep.subr.bf16.mxu0 0
    %110 = vmatpush1.bf16.msra.mxu0 0
    %111 = vmatprep.subr.bf16.mxu0 0
    %112 = vmatpush1.bf16.msra.mxu0 0
    %113 = vmatprep.subr.bf16.mxu0 0
    %114 = vmatpush1.bf16.msra.mxu0 0
    %115 = vmatprep.mubr.bf16.mxu0 0
    %116 = vmatmul.mubr.bf16.gmra.mrb[0].mxu0 %v81
    %v117 = vpop.f32.mrb[0].mxu0
    %v118 = vadd.f32 %v72, %v117
    %v119 = vpop.f32.mrb[0].mxu0
    %v120 = vadd.f32 %v76, %v119
    %v121 = vpop.f32.mrb[0].mxu0
    %v122 = vpop.f32.mrb[0].mxu0
    %123 = vdwg.mxu0
    %v124 = vpack.c.bf16 %v65, %v65
    %v126 = vlaneseq
    %v127 = vshrl.u32 %v126, 7
    %v128 = vsub.s32 0, %v127
    %v129 = vrot.slane %v64, %v128
    %v130 = vlaneseq
    %v131 = vshrl.u32 %v130, 7
    %v132 = vsub.s32 1, %v131
    %v133 = vrot.slane %v64, %v132
    %v137 = vsel %vm79, %v124, 0
    %139 = vmatprep.subr.bf16.mxu0 %v58
    %140 = vmatpush1.bf16.msra.mxu0 %v57
    %141 = vmatprep.subr.bf16.mxu0 %v60
    %142 = vmatpush1.bf16.msra.mxu0 %v59
    %143 = vmatprep.subr.bf16.mxu0 %v62
    %144 = vmatpush1.bf16.msra.mxu0 %v61
    %145 = vmatprep.subr.bf16.mxu0 0
    %146 = vmatpush1.bf16.msra.mxu0 0
    %147 = vmatprep.subr.bf16.mxu0 0
    %148 = vmatpush1.bf16.msra.mxu0 0
    %149 = vmatprep.subr.bf16.mxu0 0
    %150 = vmatpush1.bf16.msra.mxu0 0
    %151 = vmatprep.subr.bf16.mxu0 0
    %152 = vmatpush1.bf16.msra.mxu0 0
    %153 = vmatprep.subr.bf16.mxu0 0
    %154 = vmatpush1.bf16.msra.mxu0 0
    %155 = vmatprep.subr.bf16.mxu0 0
    %156 = vmatpush1.bf16.msra.mxu0 0
    %157 = vmatprep.subr.bf16.mxu0 0
    %158 = vmatpush1.bf16.msra.mxu0 0
    %159 = vmatprep.subr.bf16.mxu0 0
    %160 = vmatpush1.bf16.msra.mxu0 0
    %161 = vmatprep.subr.bf16.mxu0 0
    %162 = vmatpush1.bf16.msra.mxu0 0
    %163 = vmatprep.subr.bf16.mxu0 0
    %164 = vmatpush1.bf16.msra.mxu0 0
    %165 = vmatprep.subr.bf16.mxu0 0
    %166 = vmatpush1.bf16.msra.mxu0 0
    %167 = vmatprep.subr.bf16.mxu0 0
    %168 = vmatpush1.bf16.msra.mxu0 0
    %169 = vmatprep.subr.bf16.mxu0 0
    %170 = vmatpush1.bf16.msra.mxu0 0
    %171 = vmatprep.mubr.bf16.mxu0 0
    %172 = vmatmul.mubr.bf16.gmra.mrb[0].mxu0 %v137
    %v173 = vpop.f32.mrb[0].mxu0
    %v174 = vadd.f32 %v129, %v173
    %v175 = vpop.f32.mrb[0].mxu0
    %v176 = vadd.f32 %v133, %v175
    %v177 = vpop.f32.mrb[0].mxu0
    %v178 = vpop.f32.mrb[0].mxu0
    %179 = vdwg.mxu0
    %v180 = vadd.f32 %v118, %v174
    %v181 = vxor.u32 %v180, 2147483648
    %v182 = vmul.f32 %v181, 1.442695
    %v183 = vpow.pop %v182
    %v184 = vadd.f32 %v183, 1.0
    %v185 = vrcp.pop %v184
    %v186 = vmul.f32 1.0, %v185
    %189 = vrot.lane.b32.xlu0 %v174, 32
    %v190 = vpop.permute.xlu0 %189
    %191 = vrot.lane.b32.xlu0 %v176, 32
    %v192 = vpop.permute.xlu0 %191
    %vm193 = vcmask 261120
    %v194 = vsel %vm193, %v190, %v192
    %v196 = vmul.f32 %v186, %v194
    %198 = vrot.lane.b32.xlu0 %v196, 96
    %v199 = vpop.permute.xlu0 %198
    %v201 = vadd.f32 %v118, %v199
    %v202 = vadd.f32 %v120, %v199
    %v203 = vtanh.pop %v201
    %v204 = vtanh.pop %v202
    %v205 = vsub.f32 1.0, %v186
    %208 = vrot.lane.b32.xlu0 %v203, 80
    %v209 = vpop.permute.xlu0 %208
    %210 = vrot.lane.b32.xlu0 %v204, 80
    %v211 = vpop.permute.xlu0 %210
    %vm212 = vcmask 654336
    %v213 = vsel %vm212, %v209, %v211
    %v215 = vmul.f32 %v205, %v213
    %217 = vrot.lane.b32.xlu0 %v65, 48
    %v218 = vpop.permute.xlu0 %217
    %v220 = vmul.f32 %v186, %v218
    %v221 = vadd.f32 %v215, %v220
    %223 = vrot.lane.b32.xlu0 %v221, 80
    %v224 = vpop.permute.xlu0 %223
    %vm226 = vcmask 386048
    %227 = vst.msk [vmem:[%s6] sm:$0x3] %vm226, %v224
    %s228 = scalar_lea.vmem %s0, 2
    %v229 = vld [vmem:[%s228] sm:$0x3]
    %v230 = vpack.c.bf16 %v229, %v229
    %v232 = vsel %vm79, %v230, 0
    %234 = vmatprep.subr.bf16.mxu0 %v40
    %235 = vmatpush1.bf16.msra.mxu0 %v39
    %236 = vmatprep.subr.bf16.mxu0 %v42
    %237 = vmatpush1.bf16.msra.mxu0 %v41
    %238 = vmatprep.subr.bf16.mxu0 %v44
    %239 = vmatpush1.bf16.msra.mxu0 %v43
    %240 = vmatprep.subr.bf16.mxu0 0
    %241 = vmatpush1.bf16.msra.mxu0 0
    %242 = vmatprep.subr.bf16.mxu0 0
    %243 = vmatpush1.bf16.msra.mxu0 0
    %244 = vmatprep.subr.bf16.mxu0 0
    %245 = vmatpush1.bf16.msra.mxu0 0
    %246 = vmatprep.subr.bf16.mxu0 0
    %247 = vmatpush1.bf16.msra.mxu0 0
    %248 = vmatprep.subr.bf16.mxu0 0
    %249 = vmatpush1.bf16.msra.mxu0 0
    %250 = vmatprep.subr.bf16.mxu0 0
    %251 = vmatpush1.bf16.msra.mxu0 0
    %252 = vmatprep.subr.bf16.mxu0 0
    %253 = vmatpush1.bf16.msra.mxu0 0
    %254 = vmatprep.subr.bf16.mxu0 0
    %255 = vmatpush1.bf16.msra.mxu0 0
    %256 = vmatprep.subr.bf16.mxu0 0
    %257 = vmatpush1.bf16.msra.mxu0 0
    %258 = vmatprep.subr.bf16.mxu0 0
    %259 = vmatpush1.bf16.msra.mxu0 0
    %260 = vmatprep.subr.bf16.mxu0 0
    %261 = vmatpush1.bf16.msra.mxu0 0
    %262 = vmatprep.subr.bf16.mxu0 0
    %263 = vmatpush1.bf16.msra.mxu0 0
    %264 = vmatprep.subr.bf16.mxu0 0
    %265 = vmatpush1.bf16.msra.mxu0 0
    %266 = vmatprep.mubr.bf16.mxu0 0
    %267 = vmatmul.mubr.bf16.gmra.mrb[0].mxu0 %v232
    %v268 = vpop.f32.mrb[0].mxu0
    %v269 = vadd.f32 %v72, %v268
    %v270 = vpop.f32.mrb[0].mxu0
    %v271 = vadd.f32 %v76, %v270
    %v272 = vpop.f32.mrb[0].mxu0
    %v273 = vpop.f32.mrb[0].mxu0
    %274 = vdwg.mxu0
    %v275 = vpack.c.bf16 %v221, %v221
    %277 = vrot.lane.b32.xlu0 %v275, 80
    %v278 = vpop.permute.xlu0 %277
    %v280 = vsel %vm79, %v278, 0
    %282 = vmatprep.subr.bf16.mxu0 %v58
    %283 = vmatpush1.bf16.msra.mxu0 %v57
    %284 = vmatprep.subr.bf16.mxu0 %v60
    %285 = vmatpush1.bf16.msra.mxu0 %v59
    %286 = vmatprep.subr.bf16.mxu0 %v62
    %287 = vmatpush1.bf16.msra.mxu0 %v61
    %288 = vmatprep.subr.bf16.mxu0 0
    %289 = vmatpush1.bf16.msra.mxu0 0
    %290 = vmatprep.subr.bf16.mxu0 0
    %291 = vmatpush1.bf16.msra.mxu0 0
    %292 = vmatprep.subr.bf16.mxu0 0
    %293 = vmatpush1.bf16.msra.mxu0 0
    %294 = vmatprep.subr.bf16.mxu0 0
    %295 = vmatpush1.bf16.msra.mxu0 0
    %296 = vmatprep.subr.bf16.mxu0 0
    %297 = vmatpush1.bf16.msra.mxu0 0
    %298 = vmatprep.subr.bf16.mxu0 0
    %299 = vmatpush1.bf16.msra.mxu0 0
    %300 = vmatprep.subr.bf16.mxu0 0
    %301 = vmatpush1.bf16.msra.mxu0 0
    %302 = vmatprep.subr.bf16.mxu0 0
    %303 = vmatpush1.bf16.msra.mxu0 0
    %304 = vmatprep.subr.bf16.mxu0 0
    %305 = vmatpush1.bf16.msra.mxu0 0
    %306 = vmatprep.subr.bf16.mxu0 0
    %307 = vmatpush1.bf16.msra.mxu0 0
    %308 = vmatprep.subr.bf16.mxu0 0
    %309 = vmatpush1.bf16.msra.mxu0 0
    %310 = vmatprep.subr.bf16.mxu0 0
    %311 = vmatpush1.bf16.msra.mxu0 0
    %312 = vmatprep.subr.bf16.mxu0 0
    %313 = vmatpush1.bf16.msra.mxu0 0
    %314 = vmatprep.mubr.bf16.mxu0 0
    %315 = vmatmul.mubr.bf16.gmra.mrb[0].mxu0 %v280
    %v316 = vpop.f32.mrb[0].mxu0
    %v317 = vadd.f32 %v129, %v316
    %v318 = vpop.f32.mrb[0].mxu0
    %v319 = vadd.f32 %v133, %v318
    %v320 = vpop.f32.mrb[0].mxu0
    %v321 = vpop.f32.mrb[0].mxu0
    %322 = vdwg.mxu0
    %v323 = vadd.f32 %v269, %v317
    %v324 = vxor.u32 %v323, 2147483648
    %v325 = vmul.f32 %v324, 1.442695
    %v326 = vpow.pop %v325
    %v327 = vadd.f32 %v326, 1.0
    %v328 = vrcp.pop %v327
    %v329 = vmul.f32 1.0, %v328
    %332 = vrot.lane.b32.xlu0 %v317, 32
    %v333 = vpop.permute.xlu0 %332
    %334 = vrot.lane.b32.xlu0 %v319, 32
    %v335 = vpop.permute.xlu0 %334
    %v336 = vsel %vm193, %v333, %v335
    %v338 = vmul.f32 %v329, %v336
    %340 = vrot.lane.b32.xlu0 %v338, 96
    %v341 = vpop.permute.xlu0 %340
    %v343 = vadd.f32 %v269, %v341
    %v344 = vadd.f32 %v271, %v341
    %v345 = vtanh.pop %v343
    %v346 = vtanh.pop %v344
    %v347 = vsub.f32 1.0, %v329
    %350 = vrot.lane.b32.xlu0 %v345, 80
    %v351 = vpop.permute.xlu0 %350
    %352 = vrot.lane.b32.xlu0 %v346, 80
    %v353 = vpop.permute.xlu0 %352
    %v354 = vsel %vm212, %v351, %v353
    %v356 = vmul.f32 %v347, %v354
    %v357 = vmul.f32 %v329, %v221
    %v358 = vadd.f32 %v356, %v357
    %360 = vrot.lane.b32.xlu0 %v358, 80
    %v361 = vpop.permute.xlu0 %360
    %s363 = scalar_lea.vmem %s6, 2
    %364 = vst.msk [vmem:[%s363] sm:$0x3] %vm226, %v361
    %s365 = scalar_lea.vmem %s0, 4
    %v366 = vld [vmem:[%s365] sm:$0x3]
    %v367 = vpack.c.bf16 %v366, %v366
    %v369 = vsel %vm79, %v367, 0
    %371 = vmatprep.subr.bf16.mxu0 %v40
    %372 = vmatpush1.bf16.msra.mxu0 %v39
    %373 = vmatprep.subr.bf16.mxu0 %v42
    %374 = vmatpush1.bf16.msra.mxu0 %v41
    %375 = vmatprep.subr.bf16.mxu0 %v44
    %376 = vmatpush1.bf16.msra.mxu0 %v43
    %377 = vmatprep.subr.bf16.mxu0 0
    %378 = vmatpush1.bf16.msra.mxu0 0
    %379 = vmatprep.subr.bf16.mxu0 0
    %380 = vmatpush1.bf16.msra.mxu0 0
    %381 = vmatprep.subr.bf16.mxu0 0
    %382 = vmatpush1.bf16.msra.mxu0 0
    %383 = vmatprep.subr.bf16.mxu0 0
    %384 = vmatpush1.bf16.msra.mxu0 0
    %385 = vmatprep.subr.bf16.mxu0 0
    %386 = vmatpush1.bf16.msra.mxu0 0
    %387 = vmatprep.subr.bf16.mxu0 0
    %388 = vmatpush1.bf16.msra.mxu0 0
    %389 = vmatprep.subr.bf16.mxu0 0
    %390 = vmatpush1.bf16.msra.mxu0 0
    %391 = vmatprep.subr.bf16.mxu0 0
    %392 = vmatpush1.bf16.msra.mxu0 0
    %393 = vmatprep.subr.bf16.mxu0 0
    %394 = vmatpush1.bf16.msra.mxu0 0
    %395 = vmatprep.subr.bf16.mxu0 0
    %396 = vmatpush1.bf16.msra.mxu0 0
    %397 = vmatprep.subr.bf16.mxu0 0
    %398 = vmatpush1.bf16.msra.mxu0 0
    %399 = vmatprep.subr.bf16.mxu0 0
    %400 = vmatpush1.bf16.msra.mxu0 0
    %401 = vmatprep.subr.bf16.mxu0 0
    %402 = vmatpush1.bf16.msra.mxu0 0
    %403 = vmatprep.mubr.bf16.mxu0 0
    %404 = vmatmul.mubr.bf16.gmra.mrb[0].mxu0 %v369
    %v405 = vpop.f32.mrb[0].mxu0
    %v406 = vadd.f32 %v72, %v405
    %v407 = vpop.f32.mrb[0].mxu0
    %v408 = vadd.f32 %v76, %v407
    %v409 = vpop.f32.mrb[0].mxu0
    %v410 = vpop.f32.mrb[0].mxu0
    %411 = vdwg.mxu0
    %v412 = vpack.c.bf16 %v358, %v358
    %414 = vrot.lane.b32.xlu0 %v412, 80
    %v415 = vpop.permute.xlu0 %414
    %v417 = vsel %vm79, %v415, 0
    %419 = vmatprep.subr.bf16.mxu0 %v58
    %420 = vmatpush1.bf16.msra.mxu0 %v57
    %421 = vmatprep.subr.bf16.mxu0 %v60
    %422 = vmatpush1.bf16.msra.mxu0 %v59
    %423 = vmatprep.subr.bf16.mxu0 %v62
    %424 = vmatpush1.bf16.msra.mxu0 %v61
    %425 = vmatprep.subr.bf16.mxu0 0
    %426 = vmatpush1.bf16.msra.mxu0 0
    %427 = vmatprep.subr.bf16.mxu0 0
    %428 = vmatpush1.bf16.msra.mxu0 0
    %429 = vmatprep.subr.bf16.mxu0 0
    %430 = vmatpush1.bf16.msra.mxu0 0
    %431 = vmatprep.subr.bf16.mxu0 0
    %432 = vmatpush1.bf16.msra.mxu0 0
    %433 = vmatprep.subr.bf16.mxu0 0
    %434 = vmatpush1.bf16.msra.mxu0 0
    %435 = vmatprep.subr.bf16.mxu0 0
    %436 = vmatpush1.bf16.msra.mxu0 0
    %437 = vmatprep.subr.bf16.mxu0 0
    %438 = vmatpush1.bf16.msra.mxu0 0
    %439 = vmatprep.subr.bf16.mxu0 0
    %440 = vmatpush1.bf16.msra.mxu0 0
    %441 = vmatprep.subr.bf16.mxu0 0
    %442 = vmatpush1.bf16.msra.mxu0 0
    %443 = vmatprep.subr.bf16.mxu0 0
    %444 = vmatpush1.bf16.msra.mxu0 0
    %445 = vmatprep.subr.bf16.mxu0 0
    %446 = vmatpush1.bf16.msra.mxu0 0
    %447 = vmatprep.subr.bf16.mxu0 0
    %448 = vmatpush1.bf16.msra.mxu0 0
    %449 = vmatprep.subr.bf16.mxu0 0
    %450 = vmatpush1.bf16.msra.mxu0 0
    %451 = vmatprep.mubr.bf16.mxu0 0
    %452 = vmatmul.mubr.bf16.gmra.mrb[0].mxu0 %v417
    %v453 = vpop.f32.mrb[0].mxu0
    %v454 = vadd.f32 %v129, %v453
    %v455 = vpop.f32.mrb[0].mxu0
    %v456 = vadd.f32 %v133, %v455
    %v457 = vpop.f32.mrb[0].mxu0
    %v458 = vpop.f32.mrb[0].mxu0
    %459 = vdwg.mxu0
    %v460 = vadd.f32 %v406, %v454
    %v461 = vxor.u32 %v460, 2147483648
    %v462 = vmul.f32 %v461, 1.442695
    %v463 = vpow.pop %v462
    %v464 = vadd.f32 %v463, 1.0
    %v465 = vrcp.pop %v464
    %v466 = vmul.f32 1.0, %v465
    %469 = vrot.lane.b32.xlu0 %v454, 32
    %v470 = vpop.permute.xlu0 %469
    %471 = vrot.lane.b32.xlu0 %v456, 32
    %v472 = vpop.permute.xlu0 %471
    %v473 = vsel %vm193, %v470, %v472
    %v475 = vmul.f32 %v466, %v473
    %477 = vrot.lane.b32.xlu0 %v475, 96
    %v478 = vpop.permute.xlu0 %477
    %v480 = vadd.f32 %v406, %v478
    %v481 = vadd.f32 %v408, %v478
    %v482 = vtanh.pop %v480
    %v483 = vtanh.pop %v481
    %v484 = vsub.f32 1.0, %v466
    %487 = vrot.lane.b32.xlu0 %v482, 80
    %v488 = vpop.permute.xlu0 %487
    %489 = vrot.lane.b32.xlu0 %v483, 80
    %v490 = vpop.permute.xlu0 %489
    %v491 = vsel %vm212, %v488, %v490
    %v493 = vmul.f32 %v484, %v491
    %v494 = vmul.f32 %v466, %v358
    %v495 = vadd.f32 %v493, %v494
    %497 = vrot.lane.b32.xlu0 %v495, 80
    %v498 = vpop.permute.xlu0 %497
    %s500 = scalar_lea.vmem %s6, 4
    %501 = vst.msk [vmem:[%s500] sm:$0x3] %vm226, %v498
    %s502 = scalar_lea.vmem %s0, 6
    %v503 = vld [vmem:[%s502] sm:$0x3]
    %v504 = vpack.c.bf16 %v503, %v503
    %v506 = vsel %vm79, %v504, 0
    %508 = vmatprep.subr.bf16.mxu0 %v40
    %509 = vmatpush1.bf16.msra.mxu0 %v39
    %510 = vmatprep.subr.bf16.mxu0 %v42
    %511 = vmatpush1.bf16.msra.mxu0 %v41
    %512 = vmatprep.subr.bf16.mxu0 %v44
    %513 = vmatpush1.bf16.msra.mxu0 %v43
    %514 = vmatprep.subr.bf16.mxu0 0
    %515 = vmatpush1.bf16.msra.mxu0 0
    %516 = vmatprep.subr.bf16.mxu0 0
    %517 = vmatpush1.bf16.msra.mxu0 0
    %518 = vmatprep.subr.bf16.mxu0 0
    %519 = vmatpush1.bf16.msra.mxu0 0
    %520 = vmatprep.subr.bf16.mxu0 0
    %521 = vmatpush1.bf16.msra.mxu0 0
    %522 = vmatprep.subr.bf16.mxu0 0
    %523 = vmatpush1.bf16.msra.mxu0 0
    %524 = vmatprep.subr.bf16.mxu0 0
    %525 = vmatpush1.bf16.msra.mxu0 0
    %526 = vmatprep.subr.bf16.mxu0 0
    %527 = vmatpush1.bf16.msra.mxu0 0
    %528 = vmatprep.subr.bf16.mxu0 0
    %529 = vmatpush1.bf16.msra.mxu0 0
    %530 = vmatprep.subr.bf16.mxu0 0
    %531 = vmatpush1.bf16.msra.mxu0 0
    %532 = vmatprep.subr.bf16.mxu0 0
    %533 = vmatpush1.bf16.msra.mxu0 0
    %534 = vmatprep.subr.bf16.mxu0 0
    %535 = vmatpush1.bf16.msra.mxu0 0
    %536 = vmatprep.subr.bf16.mxu0 0
    %537 = vmatpush1.bf16.msra.mxu0 0
    %538 = vmatprep.subr.bf16.mxu0 0
    %539 = vmatpush1.bf16.msra.mxu0 0
    %540 = vmatprep.mubr.bf16.mxu0 0
    %541 = vmatmul.mubr.bf16.gmra.mrb[0].mxu0 %v506
    %v542 = vpop.f32.mrb[0].mxu0
    %v543 = vadd.f32 %v72, %v542
    %v544 = vpop.f32.mrb[0].mxu0
    %v545 = vadd.f32 %v76, %v544
    %v546 = vpop.f32.mrb[0].mxu0
    %v547 = vpop.f32.mrb[0].mxu0
    %548 = vdwg.mxu0
    %v549 = vpack.c.bf16 %v495, %v495
    %551 = vrot.lane.b32.xlu0 %v549, 80
    %v552 = vpop.permute.xlu0 %551
    %v554 = vsel %vm79, %v552, 0
    %556 = vmatprep.subr.bf16.mxu0 %v58
    %557 = vmatpush1.bf16.msra.mxu0 %v57
    %558 = vmatprep.subr.bf16.mxu0 %v60
    %559 = vmatpush1.bf16.msra.mxu0 %v59
    %560 = vmatprep.subr.bf16.mxu0 %v62
    %561 = vmatpush1.bf16.msra.mxu0 %v61
    %562 = vmatprep.subr.bf16.mxu0 0
    %563 = vmatpush1.bf16.msra.mxu0 0
    %564 = vmatprep.subr.bf16.mxu0 0
    %565 = vmatpush1.bf16.msra.mxu0 0
    %566 = vmatprep.subr.bf16.mxu0 0
    %567 = vmatpush1.bf16.msra.mxu0 0
    %568 = vmatprep.subr.bf16.mxu0 0
    %569 = vmatpush1.bf16.msra.mxu0 0
    %570 = vmatprep.subr.bf16.mxu0 0
    %571 = vmatpush1.bf16.msra.mxu0 0
    %572 = vmatprep.subr.bf16.mxu0 0
    %573 = vmatpush1.bf16.msra.mxu0 0
    %574 = vmatprep.subr.bf16.mxu0 0
    %575 = vmatpush1.bf16.msra.mxu0 0
    %576 = vmatprep.subr.bf16.mxu0 0
    %577 = vmatpush1.bf16.msra.mxu0 0
    %578 = vmatprep.subr.bf16.mxu0 0
    %579 = vmatpush1.bf16.msra.mxu0 0
    %580 = vmatprep.subr.bf16.mxu0 0
    %581 = vmatpush1.bf16.msra.mxu0 0
    %582 = vmatprep.subr.bf16.mxu0 0
    %583 = vmatpush1.bf16.msra.mxu0 0
    %584 = vmatprep.subr.bf16.mxu0 0
    %585 = vmatpush1.bf16.msra.mxu0 0
    %586 = vmatprep.subr.bf16.mxu0 0
    %587 = vmatpush1.bf16.msra.mxu0 0
    %588 = vmatprep.mubr.bf16.mxu0 0
    %589 = vmatmul.mubr.bf16.gmra.mrb[0].mxu0 %v554
    %v590 = vpop.f32.mrb[0].mxu0
    %v591 = vadd.f32 %v129, %v590
    %v592 = vpop.f32.mrb[0].mxu0
    %v593 = vadd.f32 %v133, %v592
    %v594 = vpop.f32.mrb[0].mxu0
    %v595 = vpop.f32.mrb[0].mxu0
    %596 = vdwg.mxu0
    %v597 = vadd.f32 %v543, %v591
    %v598 = vxor.u32 %v597, 2147483648
    %v599 = vmul.f32 %v598, 1.442695
    %v600 = vpow.pop %v599
    %v601 = vadd.f32 %v600, 1.0
    %v602 = vrcp.pop %v601
    %v603 = vmul.f32 1.0, %v602
    %606 = vrot.lane.b32.xlu0 %v591, 32
    %v607 = vpop.permute.xlu0 %606
    %608 = vrot.lane.b32.xlu0 %v593, 32
    %v609 = vpop.permute.xlu0 %608
    %v610 = vsel %vm193, %v607, %v609
    %v612 = vmul.f32 %v603, %v610
    %614 = vrot.lane.b32.xlu0 %v612, 96
    %v615 = vpop.permute.xlu0 %614
    %v617 = vadd.f32 %v543, %v615
    %v618 = vadd.f32 %v545, %v615
    %v619 = vtanh.pop %v617
    %v620 = vtanh.pop %v618
    %v621 = vsub.f32 1.0, %v603
    %624 = vrot.lane.b32.xlu0 %v619, 80
    %v625 = vpop.permute.xlu0 %624
    %626 = vrot.lane.b32.xlu0 %v620, 80
    %v627 = vpop.permute.xlu0 %626
    %v628 = vsel %vm212, %v625, %v627
    %v630 = vmul.f32 %v621, %v628
    %v631 = vmul.f32 %v603, %v495
    %v632 = vadd.f32 %v630, %v631
    %634 = vrot.lane.b32.xlu0 %v632, 80
    %v635 = vpop.permute.xlu0 %634
    %s637 = scalar_lea.vmem %s6, 6
    %638 = vst.msk [vmem:[%s637] sm:$0x3] %vm226, %v635
    %639 = vst.msk [vmem:[#allocation2] sm:$0x3] %vm226, %v635
    // Predicated region
    $region26: #{hbp_forward.21} parent=1 // pred_check
      _
    $region27: #{hbp_forward.21} parent=1 // pred_check_branch
      %641 = sbr.rel (0) target = $region29
    $region28: #{hbp_forward.21} parent=1 // pred_region
      _
    $region29: #{hbp_forward.21} parent=1 // pred_fallthru
      _
    // Predicated region
    $region30: #{hbp_forward.21} parent=1 // pred_check
      _
    $region31: #{hbp_forward.21} parent=1 // pred_check_branch
      %643 = sbr.rel (0) target = $region33
    $region32: #{hbp_forward.21} parent=1 // pred_region
      %s645 = ssub.s32 32, 32
      %646 = vsyncadd [#allocation3], %s645
      %s648 = sshll.u32 [#allocation2], 4
      %s649 = int_to_ptr.vmem [resolvable:$true] %s648
      %651 = dma.vmem_to_hbm [thread:$0]  %s649, 32, %s7, [#allocation3]
    $region33: #{hbp_forward.21} parent=1 // pred_fallthru
      _
    // Predicated region
    $region34: #{hbp_forward.21} parent=1 // pred_check
      _
    $region35: #{hbp_forward.21} parent=1 // pred_check_branch
      %653 = sbr.rel (0) target = $region37
    $region36: #{hbp_forward.21} parent=1 // pred_region
      _
    $region37: #{hbp_forward.21} parent=1 // pred_fallthru
      _
    // Predicated region
    $region38: #{hbp_forward.21} parent=1 // pred_check
      _
    $region39: #{hbp_forward.21} parent=1 // pred_check_branch
      %655 = sbr.rel (0) target = $region41
    $region40: #{hbp_forward.21} parent=1 // pred_region
      %656 = dma.done [#allocation3], 32
    $region41: #{hbp_forward.21} parent=1 // pred_fallthru
      _
    %657 = vsyncpa [#allocation3], 1

// kernel: hbp_forward.18
$region0: #{hbp_forward.18}
  #allocation0 [shape = 'u32[]', space=smem, size = 0x4, offset = 0x4, fixed_abs, tag = 'smem constant byte address 0x4 - core index']
  #allocation1 [shape = 'u32[144,128]{1,0:T(1,128)}', space=vmem, size = 0x12000, scoped, tag = 'internal scratch']
  %s0 = inlined_call_operand.vmem [shape: f32[8,3,48], index: 0, kind: input, shape index: {}]
  %s1 = inlined_call_operand.vmem [shape: f32[48,144], index: 1, kind: input, shape index: {}]
  %s2 = inlined_call_operand.vmem [shape: f32[1,144], index: 2, kind: input, shape index: {}]
  %s3 = inlined_call_operand.vmem [shape: f32[48,48], index: 3, kind: input, shape index: {}]
  %s4 = inlined_call_operand.vmem [shape: f32[1,48], index: 4, kind: input, shape index: {}]
  %s5 = inlined_call_operand.vmem [shape: f32[1,48], index: 5, kind: input, shape index: {}]
  %s6 = inlined_call_operand.vmem [shape: f32[1,48], index: 6, kind: input, shape index: {}]
  %s7 = inlined_call_operand.vmem [shape: f32[48,48], index: 7, kind: input, shape index: {}]
  %s8 = inlined_call_operand.vmem [shape: f32[1,48], index: 8, kind: input, shape index: {}]
  %s9 = inlined_call_operand.vmem [shape: f32[48,48], index: 9, kind: input, shape index: {}]
  %s10 = inlined_call_operand.vmem [shape: f32[1,48], index: 10, kind: input, shape index: {}]
  %s11 = inlined_call_operand.vmem [shape: f32[1,48], index: 11, kind: input, shape index: {}]
  %s12 = inlined_call_operand.vmem [shape: f32[1,48], index: 12, kind: input, shape index: {}]
  %s13 = inlined_call_operand.vmem [shape: f32[8,3,48], index: 13, kind: output, shape index: {}]
  %s14 = sld [smem:[#allocation0]]
  $region85: #{hbp_forward.18} parent=0
    _
  %s16 = ssub.s32 1, %s14
  %s17 = scalar_select 0, %s16, %s14
  loop: start=0, step=1, limit=10
  $region2: #{hbp_forward.18} parent=0 // loop_pre_header
    _
  $region3: #{hbp_forward.18} parent=0 // loop_header
    %s19 = sphi 0, %s23
    %p20 = scmp.ge.s32.totalorder %s19, 10
    %s29 = sphi 0, %s31
    %s32 = sphi 0, %s29
    %s33 = sphi 0, %s32
    %s49 = sphi 0, %s33
    %s53 = sphi 0, %s53
    %s55 = sphi 0, %s53
    %s56 = sphi 0, %s55
    %s70 = sphi 0, %s56
    %s74 = sphi 0, %s74
    %s76 = sphi 0, %s74
    %s77 = sphi 0, %s76
    %s91 = sphi 0, %s77
    %s95 = sphi 0, %s95
    %s97 = sphi 0, %s95
    %s98 = sphi 0, %s97
    %s112 = sphi 0, %s98
    %s116 = sphi 0, %s116
    %s118 = sphi 0, %s116
    %s119 = sphi 0, %s118
    %s133 = sphi 0, %s119
    %s137 = sphi 0, %s137
    %s139 = sphi 0, %s137
    %s140 = sphi 0, %s139
    %s154 = sphi 0, %s140
    %s158 = sphi 0, %s158
    %s160 = sphi 0, %s158
    %s161 = sphi 0, %s160
    %s175 = sphi 0, %s161
    %s179 = sphi 0, %s179
    %s181 = sphi 0, %s179
    %s182 = sphi 0, %s181
    %s196 = sphi 0, %s182
    %s200 = sphi 0, %s200
    %s202 = sphi 0, %s200
    %s203 = sphi 0, %s202
    %s217 = sphi 0, %s203
    %s221 = sphi 0, %s221
    %s223 = sphi 0, %s221
    %s224 = sphi 0, %s223
    %s238 = sphi 0, %s224
    %s242 = sphi 0, %s242
    %s244 = sphi 0, %s242
    %s245 = sphi 0, %s244
    %s259 = sphi 0, %s245
    %s263 = sphi 0, %s263
    %s265 = sphi 0, %s263
    %s266 = sphi 0, %s265
    %s280 = sphi 0, %s266
    %s284 = sphi 0, %s284
    %s286 = sphi 0, %s284
    %s287 = sphi 0, %s286
    %s301 = sphi 0, %s287
    %s307 = sphi 0, %s309
    %s310 = sphi 0, %s307
    %s311 = sphi 0, %s310
    %s327 = sphi 0, %s311
  $region4: #{hbp_forward.18} parent=0 // loop_header_branch
    %22 = sbr.rel (%p20) target = $region8
  $region5: #{hbp_forward.18} parent=0 // loop_body
    %s24 = ssub.s32 %s19, 1
    %s25 = ssub.s32 %s19, 2
    %s26 = sadd.s32 %s19, 1
    %s27 = ssub.s32 %s19, %s26
    %p28 = scmp.eq.s32.totalorder %s27, 0
    %s30 = sadd.s32 %s29, 1
    %s31 = scalar_select %p28, %s29, %s30
    %p34 = pneg %p28
    %p35 = scmp.eq.s32.totalorder %s19, 7
    %p36 = por %p34, %p35
    %p37 = scmp.ne.s32.totalorder %s29, %s32
    %p38 = scmp.eq.s32.totalorder %s19, 0
    %p39 = por %p37, %p38
    %p40 = scmp.ne.s32.totalorder %s29, %s32
    %p41 = scmp.eq.s32.totalorder %s24, 7
    %p42 = por %p40, %p41
    %p43 = scmp.ne.s32.totalorder %s32, %s33
    %p44 = scmp.eq.s32.totalorder %s24, 0
    %p45 = por %p43, %p44
    %p46 = scmp.ne.s32.totalorder %s32, %s33
    %p47 = scmp.eq.s32.totalorder %s25, 7
    %p48 = por %p46, %p47
    %p50 = scmp.ne.s32.totalorder %s33, %s49
    %p51 = scmp.eq.s32.totalorder %s25, 0
    %p52 = por %p50, %p51
    %s54 = sadd.s32 %s53, 1
    %p57 = scmp.eq.s32.totalorder %s19, 7
    %p58 = scmp.ne.s32.totalorder %s53, %s55
    %p59 = scmp.eq.s32.totalorder %s19, 0
    %p60 = por %p58, %p59
    %p61 = scmp.ne.s32.totalorder %s53, %s55
    %p62 = scmp.eq.s32.totalorder %s24, 7
    %p63 = por %p61, %p62
    %p64 = scmp.ne.s32.totalorder %s55, %s56
    %p65 = scmp.eq.s32.totalorder %s24, 0
    %p66 = por %p64, %p65
    %p67 = scmp.ne.s32.totalorder %s55, %s56
    %p68 = scmp.eq.s32.totalorder %s25, 7
    %p69 = por %p67, %p68
    %p71 = scmp.ne.s32.totalorder %s56, %s70
    %p72 = scmp.eq.s32.totalorder %s25, 0
    %p73 = por %p71, %p72
    %s75 = sadd.s32 %s74, 1
    %p78 = scmp.eq.s32.totalorder %s19, 7
    %p79 = scmp.ne.s32.totalorder %s74, %s76
    %p80 = scmp.eq.s32.totalorder %s19, 0
    %p81 = por %p79, %p80
    %p82 = scmp.ne.s32.totalorder %s74, %s76
    %p83 = scmp.eq.s32.totalorder %s24, 7
    %p84 = por %p82, %p83
    %p85 = scmp.ne.s32.totalorder %s76, %s77
    %p86 = scmp.eq.s32.totalorder %s24, 0
    %p87 = por %p85, %p86
    %p88 = scmp.ne.s32.totalorder %s76, %s77
    %p89 = scmp.eq.s32.totalorder %s25, 7
    %p90 = por %p88, %p89
    %p92 = scmp.ne.s32.totalorder %s77, %s91
    %p93 = scmp.eq.s32.totalorder %s25, 0
    %p94 = por %p92, %p93
    %s96 = sadd.s32 %s95, 1
    %p99 = scmp.eq.s32.totalorder %s19, 7
    %p100 = scmp.ne.s32.totalorder %s95, %s97
    %p101 = scmp.eq.s32.totalorder %s19, 0
    %p102 = por %p100, %p101
    %p103 = scmp.ne.s32.totalorder %s95, %s97
    %p104 = scmp.eq.s32.totalorder %s24, 7
    %p105 = por %p103, %p104
    %p106 = scmp.ne.s32.totalorder %s97, %s98
    %p107 = scmp.eq.s32.totalorder %s24, 0
    %p108 = por %p106, %p107
    %p109 = scmp.ne.s32.totalorder %s97, %s98
    %p110 = scmp.eq.s32.totalorder %s25, 7
    %p111 = por %p109, %p110
    %p113 = scmp.ne.s32.totalorder %s98, %s112
    %p114 = scmp.eq.s32.totalorder %s25, 0
    %p115 = por %p113, %p114
    %s117 = sadd.s32 %s116, 1
    %p120 = scmp.eq.s32.totalorder %s19, 7
    %p121 = scmp.ne.s32.totalorder %s116, %s118
    %p122 = scmp.eq.s32.totalorder %s19, 0
    %p123 = por %p121, %p122
    %p124 = scmp.ne.s32.totalorder %s116, %s118
    %p125 = scmp.eq.s32.totalorder %s24, 7
    %p126 = por %p124, %p125
    %p127 = scmp.ne.s32.totalorder %s118, %s119
    %p128 = scmp.eq.s32.totalorder %s24, 0
    %p129 = por %p127, %p128
    %p130 = scmp.ne.s32.totalorder %s118, %s119
    %p131 = scmp.eq.s32.totalorder %s25, 7
    %p132 = por %p130, %p131
    %p134 = scmp.ne.s32.totalorder %s119, %s133
    %p135 = scmp.eq.s32.totalorder %s25, 0
    %p136 = por %p134, %p135
    %s138 = sadd.s32 %s137, 1
    %p141 = scmp.eq.s32.totalorder %s19, 7
    %p142 = scmp.ne.s32.totalorder %s137, %s139
    %p143 = scmp.eq.s32.totalorder %s19, 0
    %p144 = por %p142, %p143
    %p145 = scmp.ne.s32.totalorder %s137, %s139
    %p146 = scmp.eq.s32.totalorder %s24, 7
    %p147 = por %p145, %p146
    %p148 = scmp.ne.s32.totalorder %s139, %s140
    %p149 = scmp.eq.s32.totalorder %s24, 0
    %p150 = por %p148, %p149
    %p151 = scmp.ne.s32.totalorder %s139, %s140
    %p152 = scmp.eq.s32.totalorder %s25, 7
    %p153 = por %p151, %p152
    %p155 = scmp.ne.s32.totalorder %s140, %s154
    %p156 = scmp.eq.s32.totalorder %s25, 0
    %p157 = por %p155, %p156
    %s159 = sadd.s32 %s158, 1
    %p162 = scmp.eq.s32.totalorder %s19, 7
    %p163 = scmp.ne.s32.totalorder %s158, %s160
    %p164 = scmp.eq.s32.totalorder %s19, 0
    %p165 = por %p163, %p164
    %p166 = scmp.ne.s32.totalorder %s158, %s160
    %p167 = scmp.eq.s32.totalorder %s24, 7
    %p168 = por %p166, %p167
    %p169 = scmp.ne.s32.totalorder %s160, %s161
    %p170 = scmp.eq.s32.totalorder %s24, 0
    %p171 = por %p169, %p170
    %p172 = scmp.ne.s32.totalorder %s160, %s161
    %p173 = scmp.eq.s32.totalorder %s25, 7
    %p174 = por %p172, %p173
    %p176 = scmp.ne.s32.totalorder %s161, %s175
    %p177 = scmp.eq.s32.totalorder %s25, 0
    %p178 = por %p176, %p177
    %s180 = sadd.s32 %s179, 1
    %p183 = scmp.eq.s32.totalorder %s19, 7
    %p184 = scmp.ne.s32.totalorder %s179, %s181
    %p185 = scmp.eq.s32.totalorder %s19, 0
    %p186 = por %p184, %p185
    %p187 = scmp.ne.s32.totalorder %s179, %s181
    %p188 = scmp.eq.s32.totalorder %s24, 7
    %p189 = por %p187, %p188
    %p190 = scmp.ne.s32.totalorder %s181, %s182
    %p191 = scmp.eq.s32.totalorder %s24, 0
    %p192 = por %p190, %p191
    %p193 = scmp.ne.s32.totalorder %s181, %s182
    %p194 = scmp.eq.s32.totalorder %s25, 7
    %p195 = por %p193, %p194
    %p197 = scmp.ne.s32.totalorder %s182, %s196
    %p198 = scmp.eq.s32.totalorder %s25, 0
    %p199 = por %p197, %p198
    %s201 = sadd.s32 %s200, 1
    %p204 = scmp.eq.s32.totalorder %s19, 7
    %p205 = scmp.ne.s32.totalorder %s200, %s202
    %p206 = scmp.eq.s32.totalorder %s19, 0
    %p207 = por %p205, %p206
    %p208 = scmp.ne.s32.totalorder %s200, %s202
    %p209 = scmp.eq.s32.totalorder %s24, 7
    %p210 = por %p208, %p209
    %p211 = scmp.ne.s32.totalorder %s202, %s203
    %p212 = scmp.eq.s32.totalorder %s24, 0
    %p213 = por %p211, %p212
    %p214 = scmp.ne.s32.totalorder %s202, %s203
    %p215 = scmp.eq.s32.totalorder %s25, 7
    %p216 = por %p214, %p215
    %p218 = scmp.ne.s32.totalorder %s203, %s217
    %p219 = scmp.eq.s32.totalorder %s25, 0
    %p220 = por %p218, %p219
    %s222 = sadd.s32 %s221, 1
    %p225 = scmp.eq.s32.totalorder %s19, 7
    %p226 = scmp.ne.s32.totalorder %s221, %s223
    %p227 = scmp.eq.s32.totalorder %s19, 0
    %p228 = por %p226, %p227
    %p229 = scmp.ne.s32.totalorder %s221, %s223
    %p230 = scmp.eq.s32.totalorder %s24, 7
    %p231 = por %p229, %p230
    %p232 = scmp.ne.s32.totalorder %s223, %s224
    %p233 = scmp.eq.s32.totalorder %s24, 0
    %p234 = por %p232, %p233
    %p235 = scmp.ne.s32.totalorder %s223, %s224
    %p236 = scmp.eq.s32.totalorder %s25, 7
    %p237 = por %p235, %p236
    %p239 = scmp.ne.s32.totalorder %s224, %s238
    %p240 = scmp.eq.s32.totalorder %s25, 0
    %p241 = por %p239, %p240
    %s243 = sadd.s32 %s242, 1
    %p246 = scmp.eq.s32.totalorder %s19, 7
    %p247 = scmp.ne.s32.totalorder %s242, %s244
    %p248 = scmp.eq.s32.totalorder %s19, 0
    %p249 = por %p247, %p248
    %p250 = scmp.ne.s32.totalorder %s242, %s244
    %p251 = scmp.eq.s32.totalorder %s24, 7
    %p252 = por %p250, %p251
    %p253 = scmp.ne.s32.totalorder %s244, %s245
    %p254 = scmp.eq.s32.totalorder %s24, 0
    %p255 = por %p253, %p254
    %p256 = scmp.ne.s32.totalorder %s244, %s245
    %p257 = scmp.eq.s32.totalorder %s25, 7
    %p258 = por %p256, %p257
    %p260 = scmp.ne.s32.totalorder %s245, %s259
    %p261 = scmp.eq.s32.totalorder %s25, 0
    %p262 = por %p260, %p261
    %s264 = sadd.s32 %s263, 1
    %p267 = scmp.eq.s32.totalorder %s19, 7
    %p268 = scmp.ne.s32.totalorder %s263, %s265
    %p269 = scmp.eq.s32.totalorder %s19, 0
    %p270 = por %p268, %p269
    %p271 = scmp.ne.s32.totalorder %s263, %s265
    %p272 = scmp.eq.s32.totalorder %s24, 7
    %p273 = por %p271, %p272
    %p274 = scmp.ne.s32.totalorder %s265, %s266
    %p275 = scmp.eq.s32.totalorder %s24, 0
    %p276 = por %p274, %p275
    %p277 = scmp.ne.s32.totalorder %s265, %s266
    %p278 = scmp.eq.s32.totalorder %s25, 7
    %p279 = por %p277, %p278
    %p281 = scmp.ne.s32.totalorder %s266, %s280
    %p282 = scmp.eq.s32.totalorder %s25, 0
    %p283 = por %p281, %p282
    %s285 = sadd.s32 %s284, 1
    %p288 = scmp.eq.s32.totalorder %s19, 7
    %p289 = scmp.ne.s32.totalorder %s284, %s286
    %p290 = scmp.eq.s32.totalorder %s19, 0
    %p291 = por %p289, %p290
    %p292 = scmp.ne.s32.totalorder %s284, %s286
    %p293 = scmp.eq.s32.totalorder %s24, 7
    %p294 = por %p292, %p293
    %p295 = scmp.ne.s32.totalorder %s286, %s287
    %p296 = scmp.eq.s32.totalorder %s24, 0
    %p297 = por %p295, %p296
    %p298 = scmp.ne.s32.totalorder %s286, %s287
    %p299 = scmp.eq.s32.totalorder %s25, 7
    %p300 = por %p298, %p299
    %p302 = scmp.ne.s32.totalorder %s287, %s301
    %p303 = scmp.eq.s32.totalorder %s25, 0
    %p304 = por %p302, %p303
    %s305 = ssub.s32 %s19, %s26
    %p306 = scmp.eq.s32.totalorder %s305, 0
    %s308 = sadd.s32 %s307, 1
    %s309 = scalar_select %p306, %s307, %s308
    %p312 = pneg %p306
    %p313 = scmp.eq.s32.totalorder %s19, 7
    %p314 = por %p312, %p313
    %p315 = scmp.ne.s32.totalorder %s307, %s310
    %p316 = scmp.eq.s32.totalorder %s19, 0
    %p317 = por %p315, %p316
    %p318 = scmp.ne.s32.totalorder %s307, %s310
    %p319 = scmp.eq.s32.totalorder %s24, 7
    %p320 = por %p318, %p319
    %p321 = scmp.ne.s32.totalorder %s310, %s311
    %p322 = scmp.eq.s32.totalorder %s24, 0
    %p323 = por %p321, %p322
    %p324 = scmp.ne.s32.totalorder %s310, %s311
    %p325 = scmp.eq.s32.totalorder %s25, 7
    %p326 = por %p324, %p325
    %p328 = scmp.ne.s32.totalorder %s311, %s327
    %p329 = scmp.eq.s32.totalorder %s25, 0
    %p330 = por %p328, %p329
    %p331 = scmp.le.s32.totalorder 1, %s19
    %p332 = scmp.lt.s32.totalorder %s19, 9
    %p333 = pnand %p331, %p332
    %p334 = pneg %p333
    // Predicated region
    $region9: #{hbp_forward.18} parent=5 // pred_check
      _
    $region10: #{hbp_forward.18} parent=5 // pred_check_branch
      %336 = sbr.rel (%p333) target = $region12
    $region11: #{hbp_forward.18} parent=5 // pred_region
      %s337 = ssub.s32 %s19, 1
      // Predicated region
      $region13: #{hbp_forward.18} parent=11 // pred_check
        %p338 = pneg %p66
      $region14: #{hbp_forward.18} parent=11 // pred_check_branch
        %340 = sbr.rel (%p338) target = $region16
      $region15: #{hbp_forward.18} parent=11 // pred_region
        _
      $region16: #{hbp_forward.18} parent=11 // pred_fallthru
        _
      // Predicated region
      $region17: #{hbp_forward.18} parent=11 // pred_check
        %p341 = pneg %p87
      $region18: #{hbp_forward.18} parent=11 // pred_check_branch
        %343 = sbr.rel (%p341) target = $region20
      $region19: #{hbp_forward.18} parent=11 // pred_region
        _
      $region20: #{hbp_forward.18} parent=11 // pred_fallthru
        _
      // Predicated region
      $region21: #{hbp_forward.18} parent=11 // pred_check
        %p344 = pneg %p108
      $region22: #{hbp_forward.18} parent=11 // pred_check_branch
        %346 = sbr.rel (%p344) target = $region24
      $region23: #{hbp_forward.18} parent=11 // pred_region
        _
      $region24: #{hbp_forward.18} parent=11 // pred_fallthru
        _
      // Predicated region
      $region25: #{hbp_forward.18} parent=11 // pred_check
        %p347 = pneg %p129
      $region26: #{hbp_forward.18} parent=11 // pred_check_branch
        %349 = sbr.rel (%p347) target = $region28
      $region27: #{hbp_forward.18} parent=11 // pred_region
        _
      $region28: #{hbp_forward.18} parent=11 // pred_fallthru
        _
      // Predicated region
      $region29: #{hbp_forward.18} parent=11 // pred_check
        %p350 = pneg %p150
      $region30: #{hbp_forward.18} parent=11 // pred_check_branch
        %352 = sbr.rel (%p350) target = $region32
      $region31: #{hbp_forward.18} parent=11 // pred_region
        _
      $region32: #{hbp_forward.18} parent=11 // pred_fallthru
        _
      // Predicated region
      $region33: #{hbp_forward.18} parent=11 // pred_check
        %p353 = pneg %p171
      $region34: #{hbp_forward.18} parent=11 // pred_check_branch
        %355 = sbr.rel (%p353) target = $region36
      $region35: #{hbp_forward.18} parent=11 // pred_region
        _
      $region36: #{hbp_forward.18} parent=11 // pred_fallthru
        _
      // Predicated region
      $region37: #{hbp_forward.18} parent=11 // pred_check
        %p356 = pneg %p192
      $region38: #{hbp_forward.18} parent=11 // pred_check_branch
        %358 = sbr.rel (%p356) target = $region40
      $region39: #{hbp_forward.18} parent=11 // pred_region
        _
      $region40: #{hbp_forward.18} parent=11 // pred_fallthru
        _
      // Predicated region
      $region41: #{hbp_forward.18} parent=11 // pred_check
        %p359 = pneg %p213
      $region42: #{hbp_forward.18} parent=11 // pred_check_branch
        %361 = sbr.rel (%p359) target = $region44
      $region43: #{hbp_forward.18} parent=11 // pred_region
        _
      $region44: #{hbp_forward.18} parent=11 // pred_fallthru
        _
      // Predicated region
      $region45: #{hbp_forward.18} parent=11 // pred_check
        %p362 = pneg %p234
      $region46: #{hbp_forward.18} parent=11 // pred_check_branch
        %364 = sbr.rel (%p362) target = $region48
      $region47: #{hbp_forward.18} parent=11 // pred_region
        _
      $region48: #{hbp_forward.18} parent=11 // pred_fallthru
        _
      // Predicated region
      $region49: #{hbp_forward.18} parent=11 // pred_check
        %p365 = pneg %p255
      $region50: #{hbp_forward.18} parent=11 // pred_check_branch
        %367 = sbr.rel (%p365) target = $region52
      $region51: #{hbp_forward.18} parent=11 // pred_region
        _
      $region52: #{hbp_forward.18} parent=11 // pred_fallthru
        _
      // Predicated region
      $region53: #{hbp_forward.18} parent=11 // pred_check
        %p368 = pneg %p276
      $region54: #{hbp_forward.18} parent=11 // pred_check_branch
        %370 = sbr.rel (%p368) target = $region56
      $region55: #{hbp_forward.18} parent=11 // pred_region
        _
      $region56: #{hbp_forward.18} parent=11 // pred_fallthru
        _
      // Predicated region
      $region57: #{hbp_forward.18} parent=11 // pred_check
        %p371 = pneg %p297
      $region58: #{hbp_forward.18} parent=11 // pred_check_branch
        %373 = sbr.rel (%p371) target = $region60
      $region59: #{hbp_forward.18} parent=11 // pred_region
        _
      $region60: #{hbp_forward.18} parent=11 // pred_fallthru
        _
    $region12: #{hbp_forward.18} parent=5 // pred_fallthru
      _
    %p374 = scmp.lt.s32.totalorder %s19, 8
    // Predicated region
    $region61: #{hbp_forward.18} parent=5 // pred_check
      %p375 = pneg %p374
    $region62: #{hbp_forward.18} parent=5 // pred_check_branch
      %377 = sbr.rel (%p375) target = $region64
    $region63: #{hbp_forward.18} parent=5 // pred_region
      // Predicated region
      $region65: #{hbp_forward.18} parent=63 // pred_check
        %p378 = pneg %p39
      $region66: #{hbp_forward.18} parent=63 // pred_check_branch
        %380 = sbr.rel (%p378) target = $region68
      $region67: #{hbp_forward.18} parent=63 // pred_region
        %p381 = scmp.lt.s32.totalorder %s19, 7
        %s382 = scalar_select %p381, %s19, 7
        %s383 = smul.addr %s382, 4
        %s384 = scalar_lea.vmem %s0, %s383
      $region68: #{hbp_forward.18} parent=63 // pred_fallthru
        _
    $region64: #{hbp_forward.18} parent=5 // pred_fallthru
      _
    %p385 = scmp.le.s32.totalorder 1, %s19
    %p386 = scmp.lt.s32.totalorder %s19, 9
    %p387 = pnand %p385, %p386
    %p388 = pneg %p387
    // Predicated region
    $region69: #{hbp_forward.18} parent=5 // pred_check
      _
    $region70: #{hbp_forward.18} parent=5 // pred_check_branch
      %390 = sbr.rel (%p387) target = $region72
    $region71: #{hbp_forward.18} parent=5 // pred_region
      %s391 = ssub.s32 %s19, 1
      %p392 = scmp.lt.s32.totalorder %s24, 7
      %s393 = scalar_select %p392, %s24, 7
      %s394 = smul.addr %s393, 4
      %s395 = scalar_lea.vmem %s0, %s394
      %p396 = pneg %p45
      %p397 = pneg %p42
      %p398 = pneg %p66
      %p399 = pneg %p63
      %p400 = pneg %p87
      %p401 = pneg %p84
      %p402 = pneg %p108
      %p403 = pneg %p105
      %p404 = pneg %p129
      %p405 = pneg %p126
      %p406 = pneg %p150
      %p407 = pneg %p147
      %p408 = pneg %p171
      %p409 = pneg %p168
      %p410 = pneg %p192
      %p411 = pneg %p189
      %p412 = pneg %p213
      %p413 = pneg %p210
      %p414 = pneg %p234
      %p415 = pneg %p231
      %p416 = pneg %p255
      %p417 = pneg %p252
      %p418 = pneg %p276
      %p419 = pneg %p273
      %p420 = pneg %p297
      %p421 = pneg %p294
      %p422 = pneg %p323
      %p423 = pneg %p320
      %p424 = scmp.lt.s32.totalorder %s24, 7
      %s425 = scalar_select %p424, %s24, 7
      %s426 = smul.addr %s425, 4
      %s427 = scalar_lea.vmem %s13, %s426
      %p428 = scmp.lt.s32.totalorder %s24, 7
      %s429 = scalar_select %p428, %s24, 7
      %s430 = smul.addr %s429, 4
      %s431 = scalar_lea.vmem %s0, %s430
      %p432 = scmp.lt.s32.totalorder %s24, 7
      %s433 = scalar_select %p432, %s24, 7
      %s434 = smul.addr %s433, 4
      %s435 = scalar_lea.vmem %s13, %s434
      %v437 = vld [vmem:[%s431] sm:$0x7]
      %v438 = vpack.c.bf16 %v437, %v437
      %v439 = vld [vmem:[%s1] sm:$0xff]
      %v440 = vld [vmem:[%s1 + $0x8] sm:$0xff]
      %v441 = vld [vmem:[%s1 + $0x10] sm:$0xff]
      %v442 = vld [vmem:[%s1 + $0x18] sm:$0xff]
      %v443 = vld [vmem:[%s1 + $0x20] sm:$0xff]
      %v444 = vld [vmem:[%s1 + $0x28] sm:$0xff]
      %v445 = vld [vmem:[%s1 + $0x30] sm:$0xff]
      %v446 = vld [vmem:[%s1 + $0x38] sm:$0xff]
      %v447 = vld [vmem:[%s1 + $0x40] sm:$0xff]
      %v448 = vld [vmem:[%s1 + $0x48] sm:$0xff]
      %v449 = vld [vmem:[%s1 + $0x50] sm:$0xff]
      %v450 = vld [vmem:[%s1 + $0x58] sm:$0xff]
      %v451 = vpack.c.bf16 %v441, %v439
      %v452 = vpack.c.bf16 %v442, %v440
      %v453 = vpack.c.bf16 %v445, %v443
      %v454 = vpack.c.bf16 %v446, %v444
      %v455 = vpack.c.bf16 %v449, %v447
      %v456 = vpack.c.bf16 %v450, %v448
      %v457 = vld [vmem:[%s2] sm:$0x3]
      %v459 = vlaneseq
      %v460 = vshrl.u32 %v459, 7
      %v461 = vsub.s32 0, %v460
      %v462 = vrot.slane %v457, %v461
      %v463 = vlaneseq
      %v464 = vshrl.u32 %v463, 7
      %v465 = vsub.s32 1, %v464
      %v466 = vrot.slane %v457, %v465
      %vm469 = vcmask 392192
      %v471 = vsel %vm469, %v438, 0
      %473 = vmatprep.subr.bf16.mxu0 %v452
      %474 = vmatpush1.bf16.msra.mxu0 %v451
      %475 = vmatprep.subr.bf16.mxu0 %v454
      %476 = vmatpush1.bf16.msra.mxu0 %v453
      %477 = vmatprep.subr.bf16.mxu0 %v456
      %478 = vmatpush1.bf16.msra.mxu0 %v455
      %479 = vmatprep.subr.bf16.mxu0 0
      %480 = vmatpush1.bf16.msra.mxu0 0
      %481 = vmatprep.subr.bf16.mxu0 0
      %482 = vmatpush1.bf16.msra.mxu0 0
      %483 = vmatprep.subr.bf16.mxu0 0
      %484 = vmatpush1.bf16.msra.mxu0 0
      %485 = vmatprep.subr.bf16.mxu0 0
      %486 = vmatpush1.bf16.msra.mxu0 0
      %487 = vmatprep.subr.bf16.mxu0 0
      %488 = vmatpush1.bf16.msra.mxu0 0
      %489 = vmatprep.subr.bf16.mxu0 0
      %490 = vmatpush1.bf16.msra.mxu0 0
      %491 = vmatprep.subr.bf16.mxu0 0
      %492 = vmatpush1.bf16.msra.mxu0 0
      %493 = vmatprep.subr.bf16.mxu0 0
      %494 = vmatpush1.bf16.msra.mxu0 0
      %495 = vmatprep.subr.bf16.mxu0 0
      %496 = vmatpush1.bf16.msra.mxu0 0
      %497 = vmatprep.subr.bf16.mxu0 0
      %498 = vmatpush1.bf16.msra.mxu0 0
      %499 = vmatprep.subr.bf16.mxu0 0
      %500 = vmatpush1.bf16.msra.mxu0 0
      %501 = vmatprep.subr.bf16.mxu0 0
      %502 = vmatpush1.bf16.msra.mxu0 0
      %503 = vmatprep.subr.bf16.mxu0 0
      %504 = vmatpush1.bf16.msra.mxu0 0
      %505 = vmatprep.mubr.bf16.mxu0 0
      %506 = vmatmul.mubr.bf16.gmra.mrb[0].mxu0 %v471
      %v507 = vpop.f32.mrb[0].mxu0
      %v508 = vadd.f32 %v462, %v507
      %v509 = vpop.f32.mrb[0].mxu0
      %v510 = vadd.f32 %v466, %v509
      %v511 = vpop.f32.mrb[0].mxu0
      %v512 = vpop.f32.mrb[0].mxu0
      %513 = vdwg.mxu0
      %v514 = vpack.c.bf16 %v508, %v508
      %516 = vrot.lane.b32.xlu0 %v514, 80
      %v517 = vpop.permute.xlu0 %516
      %vm518 = vcmask 97280
      %v520 = vsel %vm518, %v514, 0
      %v523 = vsel %vm518, %v517, 0
      %525 = vmatprep.subr.bf16.mxu0 0
      %526 = vmatpush1.bf16.xpose.msra.mxu0 %v523
      %527 = vmatprep.subr.bf16.mxu0 0
      %528 = vmatpush1.bf16.xpose.msra.mxu0 0
      %529 = vmatprep.subr.bf16.mxu0 0
      %530 = vmatpush1.bf16.xpose.msra.mxu0 0
      %531 = vmatprep.subr.bf16.mxu0 0
      %532 = vmatpush1.bf16.xpose.msra.mxu0 0
      %533 = vmatprep.subr.bf16.mxu0 0
      %534 = vmatpush1.bf16.xpose.msra.mxu0 0
      %535 = vmatprep.subr.bf16.mxu0 0
      %536 = vmatpush1.bf16.xpose.msra.mxu0 0
      %537 = vmatprep.subr.bf16.mxu0 0
      %538 = vmatpush1.bf16.xpose.msra.mxu0 0
      %539 = vmatprep.subr.bf16.mxu0 0
      %540 = vmatpush1.bf16.xpose.msra.mxu0 0
      %541 = vmatprep.subr.bf16.mxu0 0
      %542 = vmatpush1.bf16.xpose.msra.mxu0 0
      %543 = vmatprep.subr.bf16.mxu0 0
      %544 = vmatpush1.bf16.xpose.msra.mxu0 0
      %545 = vmatprep.subr.bf16.mxu0 0
      %546 = vmatpush1.bf16.xpose.msra.mxu0 0
      %547 = vmatprep.subr.bf16.mxu0 0
      %548 = vmatpush1.bf16.xpose.msra.mxu0 0
      %549 = vmatprep.subr.bf16.mxu0 0
      %550 = vmatpush1.bf16.xpose.msra.mxu0 0
      %551 = vmatprep.subr.bf16.mxu0 0
      %552 = vmatpush1.bf16.xpose.msra.mxu0 0
      %553 = vmatprep.subr.bf16.mxu0 0
      %554 = vmatpush1.bf16.xpose.msra.mxu0 0
      %555 = vmatprep.subr.bf16.mxu0 0
      %556 = vmatpush1.bf16.xpose.msra.mxu0 0
      %557 = vmatprep.mubr.bf16.mxu0 0
      %558 = vmatmul.mubr.bf16.gmra.mrb[0].mxu0 %v520
      %v559 = vpop.f32.mrb[0].mxu0
      %v560 = vadd.f32 0.0, %v559
      %v561 = vpop.f32.mrb[0].mxu0
      %v562 = vpop.f32.mrb[0].mxu0
      %v563 = vpop.f32.mrb[0].mxu0
      %564 = vdwg.mxu0
      %v565 = vmul.f32 %v560, 0.28867513
      %vm566 = vcmask 18432
      %v567 = vsel %vm566, %v565, -inf
      %568 = vmax.xlane.f32.xlu0 %v567
      %v569 = vpop.xlane.xlu0 %568
      %v570 = vsub.f32 %v565, %v569
      %v571 = vmul.f32 %v570, 1.442695
      %v572 = vpow.pop %v571
      %v573 = vsel %vm566, %v572, 0.0
      %574 = vadd.xlane.f32.xlu0 %v573
      %v575 = vpop.xlane.xlu0 %574
      %v576 = vrcp.pop %v575
      %v577 = vmul.f32 %v572, %v576
      %v578 = vpack.c.bf16 %v577, %v577
      %579 = vrot.lane.b32.xlu0 %v514, 32
      %v580 = vpop.permute.xlu0 %579
      %vm581 = vcmask 23552
      %v583 = vsel %vm581, %v578, 0
      %vm585 = vcmask 1040384
      %vm586 = vcmask 1041408
      %v587 = vsel %vm585, 4294967295, 65535
      %v588 = vsel %vm586, %v587, 0
      %v590 = vand.u32 %v580, %v588
      %592 = vmatprep.subr.bf16.mxu0 0
      %593 = vmatpush1.bf16.msra.mxu0 %v590
      %594 = vmatprep.subr.bf16.mxu0 0
      %595 = vmatpush1.bf16.msra.mxu0 0
      %596 = vmatprep.subr.bf16.mxu0 0
      %597 = vmatpush1.bf16.msra.mxu0 0
      %598 = vmatprep.subr.bf16.mxu0 0
      %599 = vmatpush1.bf16.msra.mxu0 0
      %600 = vmatprep.subr.bf16.mxu0 0
      %601 = vmatpush1.bf16.msra.mxu0 0
      %602 = vmatprep.subr.bf16.mxu0 0
      %603 = vmatpush1.bf16.msra.mxu0 0
      %604 = vmatprep.subr.bf16.mxu0 0
      %605 = vmatpush1.bf16.msra.mxu0 0
      %606 = vmatprep.subr.bf16.mxu0 0
      %607 = vmatpush1.bf16.msra.mxu0 0
      %608 = vmatprep.subr.bf16.mxu0 0
      %609 = vmatpush1.bf16.msra.mxu0 0
      %610 = vmatprep.subr.bf16.mxu0 0
      %611 = vmatpush1.bf16.msra.mxu0 0
      %612 = vmatprep.subr.bf16.mxu0 0
      %613 = vmatpush1.bf16.msra.mxu0 0
      %614 = vmatprep.subr.bf16.mxu0 0
      %615 = vmatpush1.bf16.msra.mxu0 0
      %616 = vmatprep.subr.bf16.mxu0 0
      %617 = vmatpush1.bf16.msra.mxu0 0
      %618 = vmatprep.subr.bf16.mxu0 0
      %619 = vmatpush1.bf16.msra.mxu0 0
      %620 = vmatprep.subr.bf16.mxu0 0
      %621 = vmatpush1.bf16.msra.mxu0 0
      %622 = vmatprep.subr.bf16.mxu0 0
      %623 = vmatpush1.bf16.msra.mxu0 0
      %624 = vmatprep.mubr.bf16.mxu0 0
      %625 = vmatmul.mubr.bf16.gmra.mrb[0].mxu0 %v583
      %v626 = vpop.f32.mrb[0].mxu0
      %v627 = vadd.f32 0.0, %v626
      %v628 = vpop.f32.mrb[0].mxu0
      %v629 = vpop.f32.mrb[0].mxu0
      %v630 = vpop.f32.mrb[0].mxu0
      %631 = vdwg.mxu0
      %632 = vrot.lane.b32.xlu0 %v514, 116
      %v633 = vpop.permute.xlu0 %632
      %634 = vrot.lane.b32.xlu0 %v514, 68
      %v635 = vpop.permute.xlu0 %634
      %v637 = vsel %vm518, %v633, 0
      %v640 = vsel %vm518, %v635, 0
      %642 = vmatprep.subr.bf16.mxu0 0
      %643 = vmatpush1.bf16.xpose.msra.mxu0 %v640
      %644 = vmatprep.subr.bf16.mxu0 0
      %645 = vmatpush1.bf16.xpose.msra.mxu0 0
      %646 = vmatprep.subr.bf16.mxu0 0
      %647 = vmatpush1.bf16.xpose.msra.mxu0 0
      %648 = vmatprep.subr.bf16.mxu0 0
      %649 = vmatpush1.bf16.xpose.msra.mxu0 0
      %650 = vmatprep.subr.bf16.mxu0 0
      %651 = vmatpush1.bf16.xpose.msra.mxu0 0
      %652 = vmatprep.subr.bf16.mxu0 0
      %653 = vmatpush1.bf16.xpose.msra.mxu0 0
      %654 = vmatprep.subr.bf16.mxu0 0
      %655 = vmatpush1.bf16.xpose.msra.mxu0 0
      %656 = vmatprep.subr.bf16.mxu0 0
      %657 = vmatpush1.bf16.xpose.msra.mxu0 0
      %658 = vmatprep.subr.bf16.mxu0 0
      %659 = vmatpush1.bf16.xpose.msra.mxu0 0
      %660 = vmatprep.subr.bf16.mxu0 0
      %661 = vmatpush1.bf16.xpose.msra.mxu0 0
      %662 = vmatprep.subr.bf16.mxu0 0
      %663 = vmatpush1.bf16.xpose.msra.mxu0 0
      %664 = vmatprep.subr.bf16.mxu0 0
      %665 = vmatpush1.bf16.xpose.msra.mxu0 0
      %666 = vmatprep.subr.bf16.mxu0 0
      %667 = vmatpush1.bf16.xpose.msra.mxu0 0
      %668 = vmatprep.subr.bf16.mxu0 0
      %669 = vmatpush1.bf16.xpose.msra.mxu0 0
      %670 = vmatprep.subr.bf16.mxu0 0
      %671 = vmatpush1.bf16.xpose.msra.mxu0 0
      %672 = vmatprep.subr.bf16.mxu0 0
      %673 = vmatpush1.bf16.xpose.msra.mxu0 0
      %674 = vmatprep.mubr.bf16.mxu0 0
      %675 = vmatmul.mubr.bf16.gmra.mrb[0].mxu0 %v637
      %v676 = vpop.f32.mrb[0].mxu0
      %v677 = vadd.f32 0.0, %v676
      %v678 = vpop.f32.mrb[0].mxu0
      %v679 = vpop.f32.mrb[0].mxu0
      %v680 = vpop.f32.mrb[0].mxu0
      %681 = vdwg.mxu0
      %v682 = vmul.f32 %v677, 0.28867513
      %v683 = vsel %vm566, %v682, -inf
      %684 = vmax.xlane.f32.xlu0 %v683
      %v685 = vpop.xlane.xlu0 %684
      %v686 = vsub.f32 %v682, %v685
      %v687 = vmul.f32 %v686, 1.442695
      %v688 = vpow.pop %v687
      %v689 = vsel %vm566, %v688, 0.0
      %690 = vadd.xlane.f32.xlu0 %v689
      %v691 = vpop.xlane.xlu0 %690
      %v692 = vrcp.pop %v691
      %v693 = vmul.f32 %v688, %v692
      %v694 = vpack.c.bf16 %v693, %v693
      %695 = vrot.lane.b32.xlu0 %v514, 20
      %v696 = vpop.permute.xlu0 %695
      %v698 = vsel %vm581, %v694, 0
      %v701 = vand.u32 %v696, %v588
      %703 = vmatprep.subr.bf16.mxu0 0
      %704 = vmatpush1.bf16.msra.mxu0 %v701
      %705 = vmatprep.subr.bf16.mxu0 0
      %706 = vmatpush1.bf16.msra.mxu0 0
      %707 = vmatprep.subr.bf16.mxu0 0
      %708 = vmatpush1.bf16.msra.mxu0 0
      %709 = vmatprep.subr.bf16.mxu0 0
      %710 = vmatpush1.bf16.msra.mxu0 0
      %711 = vmatprep.subr.bf16.mxu0 0
      %712 = vmatpush1.bf16.msra.mxu0 0
      %713 = vmatprep.subr.bf16.mxu0 0
      %714 = vmatpush1.bf16.msra.mxu0 0
      %715 = vmatprep.subr.bf16.mxu0 0
      %716 = vmatpush1.bf16.msra.mxu0 0
      %717 = vmatprep.subr.bf16.mxu0 0
      %718 = vmatpush1.bf16.msra.mxu0 0
      %719 = vmatprep.subr.bf16.mxu0 0
      %720 = vmatpush1.bf16.msra.mxu0 0
      %721 = vmatprep.subr.bf16.mxu0 0
      %722 = vmatpush1.bf16.msra.mxu0 0
      %723 = vmatprep.subr.bf16.mxu0 0
      %724 = vmatpush1.bf16.msra.mxu0 0
      %725 = vmatprep.subr.bf16.mxu0 0
      %726 = vmatpush1.bf16.msra.mxu0 0
      %727 = vmatprep.subr.bf16.mxu0 0
      %728 = vmatpush1.bf16.msra.mxu0 0
      %729 = vmatprep.subr.bf16.mxu0 0
      %730 = vmatpush1.bf16.msra.mxu0 0
      %731 = vmatprep.subr.bf16.mxu0 0
      %732 = vmatpush1.bf16.msra.mxu0 0
      %733 = vmatprep.subr.bf16.mxu0 0
      %734 = vmatpush1.bf16.msra.mxu0 0
      %735 = vmatprep.mubr.bf16.mxu0 0
      %736 = vmatmul.mubr.bf16.gmra.mrb[0].mxu0 %v698
      %v737 = vpop.f32.mrb[0].mxu0
      %v738 = vadd.f32 0.0, %v737
      %v739 = vpop.f32.mrb[0].mxu0
      %v740 = vpop.f32.mrb[0].mxu0
      %v741 = vpop.f32.mrb[0].mxu0
      %742 = vdwg.mxu0
      %743 = vrot.lane.b32.xlu0 %v514, 104
      %v744 = vpop.permute.xlu0 %743
      %745 = vrot.lane.b32.xlu0 %v514, 56
      %v746 = vpop.permute.xlu0 %745
      %v748 = vsel %vm518, %v744, 0
      %v751 = vsel %vm518, %v746, 0
      %753 = vmatprep.subr.bf16.mxu0 0
      %754 = vmatpush1.bf16.xpose.msra.mxu0 %v751
      %755 = vmatprep.subr.bf16.mxu0 0
      %756 = vmatpush1.bf16.xpose.msra.mxu0 0
      %757 = vmatprep.subr.bf16.mxu0 0
      %758 = vmatpush1.bf16.xpose.msra.mxu0 0
      %759 = vmatprep.subr.bf16.mxu0 0
      %760 = vmatpush1.bf16.xpose.msra.mxu0 0
      %761 = vmatprep.subr.bf16.mxu0 0
      %762 = vmatpush1.bf16.xpose.msra.mxu0 0
      %763 = vmatprep.subr.bf16.mxu0 0
      %764 = vmatpush1.bf16.xpose.msra.mxu0 0
      %765 = vmatprep.subr.bf16.mxu0 0
      %766 = vmatpush1.bf16.xpose.msra.mxu0 0
      %767 = vmatprep.subr.bf16.mxu0 0
      %768 = vmatpush1.bf16.xpose.msra.mxu0 0
      %769 = vmatprep.subr.bf16.mxu0 0
      %770 = vmatpush1.bf16.xpose.msra.mxu0 0
      %771 = vmatprep.subr.bf16.mxu0 0
      %772 = vmatpush1.bf16.xpose.msra.mxu0 0
      %773 = vmatprep.subr.bf16.mxu0 0
      %774 = vmatpush1.bf16.xpose.msra.mxu0 0
      %775 = vmatprep.subr.bf16.mxu0 0
      %776 = vmatpush1.bf16.xpose.msra.mxu0 0
      %777 = vmatprep.subr.bf16.mxu0 0
      %778 = vmatpush1.bf16.xpose.msra.mxu0 0
      %779 = vmatprep.subr.bf16.mxu0 0
      %780 = vmatpush1.bf16.xpose.msra.mxu0 0
      %781 = vmatprep.subr.bf16.mxu0 0
      %782 = vmatpush1.bf16.xpose.msra.mxu0 0
      %783 = vmatprep.subr.bf16.mxu0 0
      %784 = vmatpush1.bf16.xpose.msra.mxu0 0
      %785 = vmatprep.mubr.bf16.mxu0 0
      %786 = vmatmul.mubr.bf16.gmra.mrb[0].mxu0 %v748
      %v787 = vpop.f32.mrb[0].mxu0
      %v788 = vadd.f32 0.0, %v787
      %v789 = vpop.f32.mrb[0].mxu0
      %v790 = vpop.f32.mrb[0].mxu0
      %v791 = vpop.f32.mrb[0].mxu0
      %792 = vdwg.mxu0
      %v793 = vmul.f32 %v788, 0.28867513
      %v794 = vsel %vm566, %v793, -inf
      %795 = vmax.xlane.f32.xlu0 %v794
      %v796 = vpop.xlane.xlu0 %795
      %v797 = vsub.f32 %v793, %v796
      %v798 = vmul.f32 %v797, 1.442695
      %v799 = vpow.pop %v798
      %v800 = vsel %vm566, %v799, 0.0
      %801 = vadd.xlane.f32.xlu0 %v800
      %v802 = vpop.xlane.xlu0 %801
      %v803 = vrcp.pop %v802
      %v804 = vmul.f32 %v799, %v803
      %v805 = vpack.c.bf16 %v804, %v804
      %v806 = vpack.c.bf16 %v510, %v510
      %808 = vrot.lane.b32.xlu0 %v514, 8
      %v809 = vpop.permute.xlu0 %808
      %810 = vrot.lane.b32.xlu0 %v806, 8
      %v811 = vpop.permute.xlu0 %810
      %vm812 = vcmask 64512
      %v813 = vsel %vm812, %v809, %v811
      %v815 = vsel %vm581, %v805, 0
      %v818 = vand.u32 %v813, %v588
      %820 = vmatprep.subr.bf16.mxu0 0
      %821 = vmatpush1.bf16.msra.mxu0 %v818
      %822 = vmatprep.subr.bf16.mxu0 0
      %823 = vmatpush1.bf16.msra.mxu0 0
      %824 = vmatprep.subr.bf16.mxu0 0
      %825 = vmatpush1.bf16.msra.mxu0 0
      %826 = vmatprep.subr.bf16.mxu0 0
      %827 = vmatpush1.bf16.msra.mxu0 0
      %828 = vmatprep.subr.bf16.mxu0 0
      %829 = vmatpush1.bf16.msra.mxu0 0
      %830 = vmatprep.subr.bf16.mxu0 0
      %831 = vmatpush1.bf16.msra.mxu0 0
      %832 = vmatprep.subr.bf16.mxu0 0
      %833 = vmatpush1.bf16.msra.mxu0 0
      %834 = vmatprep.subr.bf16.mxu0 0
      %835 = vmatpush1.bf16.msra.mxu0 0
      %836 = vmatprep.subr.bf16.mxu0 0
      %837 = vmatpush1.bf16.msra.mxu0 0
      %838 = vmatprep.subr.bf16.mxu0 0
      %839 = vmatpush1.bf16.msra.mxu0 0
      %840 = vmatprep.subr.bf16.mxu0 0
      %841 = vmatpush1.bf16.msra.mxu0 0
      %842 = vmatprep.subr.bf16.mxu0 0
      %843 = vmatpush1.bf16.msra.mxu0 0
      %844 = vmatprep.subr.bf16.mxu0 0
      %845 = vmatpush1.bf16.msra.mxu0 0
      %846 = vmatprep.subr.bf16.mxu0 0
      %847 = vmatpush1.bf16.msra.mxu0 0
      %848 = vmatprep.subr.bf16.mxu0 0
      %849 = vmatpush1.bf16.msra.mxu0 0
      %850 = vmatprep.subr.bf16.mxu0 0
      %851 = vmatpush1.bf16.msra.mxu0 0
      %852 = vmatprep.mubr.bf16.mxu0 0
      %853 = vmatmul.mubr.bf16.gmra.mrb[0].mxu0 %v815
      %v854 = vpop.f32.mrb[0].mxu0
      %v855 = vadd.f32 0.0, %v854
      %v856 = vpop.f32.mrb[0].mxu0
      %v857 = vpop.f32.mrb[0].mxu0
      %v858 = vpop.f32.mrb[0].mxu0
      %859 = vdwg.mxu0
      %860 = vrot.lane.b32.xlu0 %v514, 92
      %v861 = vpop.permute.xlu0 %860
      %862 = vrot.lane.b32.xlu0 %v514, 44
      %v863 = vpop.permute.xlu0 %862
      %v865 = vsel %vm518, %v861, 0
      %v868 = vsel %vm518, %v863, 0
      %870 = vmatprep.subr.bf16.mxu0 0
      %871 = vmatpush1.bf16.xpose.msra.mxu0 %v868
      %872 = vmatprep.subr.bf16.mxu0 0
      %873 = vmatpush1.bf16.xpose.msra.mxu0 0
      %874 = vmatprep.subr.bf16.mxu0 0
      %875 = vmatpush1.bf16.xpose.msra.mxu0 0
      %876 = vmatprep.subr.bf16.mxu0 0
      %877 = vmatpush1.bf16.xpose.msra.mxu0 0
      %878 = vmatprep.subr.bf16.mxu0 0
      %879 = vmatpush1.bf16.xpose.msra.mxu0 0
      %880 = vmatprep.subr.bf16.mxu0 0
      %881 = vmatpush1.bf16.xpose.msra.mxu0 0
      %882 = vmatprep.subr.bf16.mxu0 0
      %883 = vmatpush1.bf16.xpose.msra.mxu0 0
      %884 = vmatprep.subr.bf16.mxu0 0
      %885 = vmatpush1.bf16.xpose.msra.mxu0 0
      %886 = vmatprep.subr.bf16.mxu0 0
      %887 = vmatpush1.bf16.xpose.msra.mxu0 0
      %888 = vmatprep.subr.bf16.mxu0 0
      %889 = vmatpush1.bf16.xpose.msra.mxu0 0
      %890 = vmatprep.subr.bf16.mxu0 0
      %891 = vmatpush1.bf16.xpose.msra.mxu0 0
      %892 = vmatprep.subr.bf16.mxu0 0
      %893 = vmatpush1.bf16.xpose.msra.mxu0 0
      %894 = vmatprep.subr.bf16.mxu0 0
      %895 = vmatpush1.bf16.xpose.msra.mxu0 0
      %896 = vmatprep.subr.bf16.mxu0 0
      %897 = vmatpush1.bf16.xpose.msra.mxu0 0
      %898 = vmatprep.subr.bf16.mxu0 0
      %899 = vmatpush1.bf16.xpose.msra.mxu0 0
      %900 = vmatprep.subr.bf16.mxu0 0
      %901 = vmatpush1.bf16.xpose.msra.mxu0 0
      %902 = vmatprep.mubr.bf16.mxu0 0
      %903 = vmatmul.mubr.bf16.gmra.mrb[0].mxu0 %v865
      %v904 = vpop.f32.mrb[0].mxu0
      %v905 = vadd.f32 0.0, %v904
      %v906 = vpop.f32.mrb[0].mxu0
      %v907 = vpop.f32.mrb[0].mxu0
      %v908 = vpop.f32.mrb[0].mxu0
      %909 = vdwg.mxu0
      %v910 = vmul.f32 %v905, 0.28867513
      %v911 = vsel %vm566, %v910, -inf
      %912 = vmax.xlane.f32.xlu0 %v911
      %v913 = vpop.xlane.xlu0 %912
      %v914 = vsub.f32 %v910, %v913
      %v915 = vmul.f32 %v914, 1.442695
      %v916 = vpow.pop %v915
      %v917 = vsel %vm566, %v916, 0.0
      %918 = vadd.xlane.f32.xlu0 %v917
      %v919 = vpop.xlane.xlu0 %918
      %v920 = vrcp.pop %v919
      %v921 = vmul.f32 %v916, %v920
      %v922 = vpack.c.bf16 %v921, %v921
      %923 = vrot.lane.b32.xlu0 %v806, 124
      %v924 = vpop.permute.xlu0 %923
      %v926 = vsel %vm581, %v922, 0
      %v929 = vand.u32 %v924, %v588
      %931 = vmatprep.subr.bf16.mxu0 0
      %932 = vmatpush1.bf16.msra.mxu0 %v929
      %933 = vmatprep.subr.bf16.mxu0 0
      %934 = vmatpush1.bf16.msra.mxu0 0
      %935 = vmatprep.subr.bf16.mxu0 0
      %936 = vmatpush1.bf16.msra.mxu0 0
      %937 = vmatprep.subr.bf16.mxu0 0
      %938 = vmatpush1.bf16.msra.mxu0 0
      %939 = vmatprep.subr.bf16.mxu0 0
      %940 = vmatpush1.bf16.msra.mxu0 0
      %941 = vmatprep.subr.bf16.mxu0 0
      %942 = vmatpush1.bf16.msra.mxu0 0
      %943 = vmatprep.subr.bf16.mxu0 0
      %944 = vmatpush1.bf16.msra.mxu0 0
      %945 = vmatprep.subr.bf16.mxu0 0
      %946 = vmatpush1.bf16.msra.mxu0 0
      %947 = vmatprep.subr.bf16.mxu0 0
      %948 = vmatpush1.bf16.msra.mxu0 0
      %949 = vmatprep.subr.bf16.mxu0 0
      %950 = vmatpush1.bf16.msra.mxu0 0
      %951 = vmatprep.subr.bf16.mxu0 0
      %952 = vmatpush1.bf16.msra.mxu0 0
      %953 = vmatprep.subr.bf16.mxu0 0
      %954 = vmatpush1.bf16.msra.mxu0 0
      %955 = vmatprep.subr.bf16.mxu0 0
      %956 = vmatpush1.bf16.msra.mxu0 0
      %957 = vmatprep.subr.bf16.mxu0 0
      %958 = vmatpush1.bf16.msra.mxu0 0
      %959 = vmatprep.subr.bf16.mxu0 0
      %960 = vmatpush1.bf16.msra.mxu0 0
      %961 = vmatprep.subr.bf16.mxu0 0
      %962 = vmatpush1.bf16.msra.mxu0 0
      %963 = vmatprep.mubr.bf16.mxu0 0
      %964 = vmatmul.mubr.bf16.gmra.mrb[0].mxu0 %v926
      %v965 = vpop.f32.mrb[0].mxu0
      %v966 = vadd.f32 0.0, %v965
      %v967 = vpop.f32.mrb[0].mxu0
      %v968 = vpop.f32.mrb[0].mxu0
      %v969 = vpop.f32.mrb[0].mxu0
      %970 = vdwg.mxu0
      %972 = vrot.lane.b32.xlu0 %v738, 12
      %v973 = vpop.permute.xlu0 %972
      %976 = vrot.lane.b32.xlu0 %v855, 24
      %v977 = vpop.permute.xlu0 %976
      %980 = vrot.lane.b32.xlu0 %v966, 36
      %v981 = vpop.permute.xlu0 %980
      %v983 = vsel %vm518, %v627, %v973
      %vm984 = vcmask 195584
      %v985 = vsel %vm984, %v983, %v977
      %vm986 = vcmask 293888
      %v987 = vsel %vm986, %v985, %v981
      %v988 = vpack.c.bf16 %v987, %v987
      %v989 = vld [vmem:[%s3] sm:$0xff]
      %v990 = vld [vmem:[%s3 + $0x8] sm:$0xff]
      %v991 = vld [vmem:[%s3 + $0x10] sm:$0xff]
      %v992 = vld [vmem:[%s3 + $0x18] sm:$0xff]
      %v993 = vld [vmem:[%s3 + $0x20] sm:$0xff]
      %v994 = vld [vmem:[%s3 + $0x28] sm:$0xff]
      %v995 = vpack.c.bf16 %v990, %v989
      %v996 = vpack.c.bf16 %v992, %v991
      %v997 = vpack.c.bf16 %v994, %v993
      %v998 = vld [vmem:[%s4] sm:$0x1]
      %v1000 = vlaneseq
      %v1001 = vshrl.u32 %v1000, 7
      %v1002 = vsub.s32 0, %v1001
      %v1003 = vrot.slane %v998, %v1002
      %v1006 = vsel %vm469, %v988, 0
      %1008 = vmatprep.subr.bf16.mxu0 0
      %1009 = vmatpush1.bf16.msra.mxu0 %v995
      %1010 = vmatprep.subr.bf16.mxu0 0
      %1011 = vmatpush1.bf16.msra.mxu0 %v996
      %1012 = vmatprep.subr.bf16.mxu0 0
      %1013 = vmatpush1.bf16.msra.mxu0 %v997
      %1014 = vmatprep.subr.bf16.mxu0 0
      %1015 = vmatpush1.bf16.msra.mxu0 0
      %1016 = vmatprep.subr.bf16.mxu0 0
      %1017 = vmatpush1.bf16.msra.mxu0 0
      %1018 = vmatprep.subr.bf16.mxu0 0
      %1019 = vmatpush1.bf16.msra.mxu0 0
      %1020 = vmatprep.subr.bf16.mxu0 0
      %1021 = vmatpush1.bf16.msra.mxu0 0
      %1022 = vmatprep.subr.bf16.mxu0 0
      %1023 = vmatpush1.bf16.msra.mxu0 0
      %1024 = vmatprep.subr.bf16.mxu0 0
      %1025 = vmatpush1.bf16.msra.mxu0 0
      %1026 = vmatprep.subr.bf16.mxu0 0
      %1027 = vmatpush1.bf16.msra.mxu0 0
      %1028 = vmatprep.subr.bf16.mxu0 0
      %1029 = vmatpush1.bf16.msra.mxu0 0
      %1030 = vmatprep.subr.bf16.mxu0 0
      %1031 = vmatpush1.bf16.msra.mxu0 0
      %1032 = vmatprep.subr.bf16.mxu0 0
      %1033 = vmatpush1.bf16.msra.mxu0 0
      %1034 = vmatprep.subr.bf16.mxu0 0
      %1035 = vmatpush1.bf16.msra.mxu0 0
      %1036 = vmatprep.subr.bf16.mxu0 0
      %1037 = vmatpush1.bf16.msra.mxu0 0
      %1038 = vmatprep.subr.bf16.mxu0 0
      %1039 = vmatpush1.bf16.msra.mxu0 0
      %1040 = vmatprep.mubr.bf16.mxu0 0
      %1041 = vmatmul.mubr.bf16.gmra.mrb[0].mxu0 %v1006
      %v1042 = vpop.f32.mrb[0].mxu0
      %v1043 = vadd.f32 %v1003, %v1042
      %v1044 = vpop.f32.mrb[0].mxu0
      %v1045 = vpop.f32.mrb[0].mxu0
      %v1046 = vpop.f32.mrb[0].mxu0
      %1047 = vdwg.mxu0
      %v1048 = vadd.f32 %v437, %v1043
      %v1049 = vld [vmem:[%s5] sm:$0x1]
      %v1050 = vld [vmem:[%s6] sm:$0x1]
      %vm1051 = vcmask 387072
      %v1052 = vsel %vm1051, %v1048, 0.0
      %1053 = vadd.xlane.f32.xlu0 %v1052
      %v1054 = vpop.xlane.xlu0 %1053
      %v1055 = vrcp.pop 48.0
      %v1056 = vmul.f32 %v1054, %v1055
      %v1057 = vsub.f32 %v1048, %v1056
      %v1058 = vmul.f32 %v1057, %v1057
      %v1059 = vsel %vm1051, %v1058, 0.0
      %1060 = vadd.xlane.f32.xlu0 %v1059
      %v1061 = vpop.xlane.xlu0 %1060
      %v1062 = vmul.f32 %v1061, %v1055
      %v1063 = vadd.f32 %v1062, 1e-05
      %v1064 = vrsqrt.pop %v1063
      %v1065 = vmul.f32 %v1057, %v1064
      %v1067 = vlaneseq
      %v1068 = vshrl.u32 %v1067, 7
      %v1069 = vsub.s32 0, %v1068
      %v1070 = vrot.slane %v1049, %v1069
      %v1072 = vmul.f32 %v1065, %v1070
      %v1074 = vlaneseq
      %v1075 = vshrl.u32 %v1074, 7
      %v1076 = vsub.s32 0, %v1075
      %v1077 = vrot.slane %v1050, %v1076
      %v1079 = vadd.f32 %v1072, %v1077
      %v1080 = vpack.c.bf16 %v1079, %v1079
      %v1081 = vld [vmem:[%s7] sm:$0xff]
      %v1082 = vld [vmem:[%s7 + $0x8] sm:$0xff]
      %v1083 = vld [vmem:[%s7 + $0x10] sm:$0xff]
      %v1084 = vld [vmem:[%s7 + $0x18] sm:$0xff]
      %v1085 = vld [vmem:[%s7 + $0x20] sm:$0xff]
      %v1086 = vld [vmem:[%s7 + $0x28] sm:$0xff]
      %v1087 = vpack.c.bf16 %v1082, %v1081
      %v1088 = vpack.c.bf16 %v1084, %v1083
      %v1089 = vpack.c.bf16 %v1086, %v1085
      %v1090 = vld [vmem:[%s8] sm:$0x1]
      %v1092 = vlaneseq
      %v1093 = vshrl.u32 %v1092, 7
      %v1094 = vsub.s32 0, %v1093
      %v1095 = vrot.slane %v1090, %v1094
      %v1098 = vsel %vm469, %v1080, 0
      %1100 = vmatprep.subr.bf16.mxu0 0
      %1101 = vmatpush1.bf16.msra.mxu0 %v1087
      %1102 = vmatprep.subr.bf16.mxu0 0
      %1103 = vmatpush1.bf16.msra.mxu0 %v1088
      %1104 = vmatprep.subr.bf16.mxu0 0
      %1105 = vmatpush1.bf16.msra.mxu0 %v1089
      %1106 = vmatprep.subr.bf16.mxu0 0
      %1107 = vmatpush1.bf16.msra.mxu0 0
      %1108 = vmatprep.subr.bf16.mxu0 0
      %1109 = vmatpush1.bf16.msra.mxu0 0
      %1110 = vmatprep.subr.bf16.mxu0 0
      %1111 = vmatpush1.bf16.msra.mxu0 0
      %1112 = vmatprep.subr.bf16.mxu0 0
      %1113 = vmatpush1.bf16.msra.mxu0 0
      %1114 = vmatprep.subr.bf16.mxu0 0
      %1115 = vmatpush1.bf16.msra.mxu0 0
      %1116 = vmatprep.subr.bf16.mxu0 0
      %1117 = vmatpush1.bf16.msra.mxu0 0
      %1118 = vmatprep.subr.bf16.mxu0 0
      %1119 = vmatpush1.bf16.msra.mxu0 0
      %1120 = vmatprep.subr.bf16.mxu0 0
      %1121 = vmatpush1.bf16.msra.mxu0 0
      %1122 = vmatprep.subr.bf16.mxu0 0
      %1123 = vmatpush1.bf16.msra.mxu0 0
      %1124 = vmatprep.subr.bf16.mxu0 0
      %1125 = vmatpush1.bf16.msra.mxu0 0
      %1126 = vmatprep.subr.bf16.mxu0 0
      %1127 = vmatpush1.bf16.msra.mxu0 0
      %1128 = vmatprep.subr.bf16.mxu0 0
      %1129 = vmatpush1.bf16.msra.mxu0 0
      %1130 = vmatprep.subr.bf16.mxu0 0
      %1131 = vmatpush1.bf16.msra.mxu0 0
      %1132 = vmatprep.mubr.bf16.mxu0 0
      %1133 = vmatmul.mubr.bf16.gmra.mrb[0].mxu0 %v1098
      %v1134 = vpop.f32.mrb[0].mxu0
      %v1135 = vadd.f32 %v1095, %v1134
      %v1136 = vpop.f32.mrb[0].mxu0
      %v1137 = vpop.f32.mrb[0].mxu0
      %v1138 = vpop.f32.mrb[0].mxu0
      %1139 = vdwg.mxu0
      %v1140 = vmax.f32 %v1135, 0.0
      %v1141 = vpack.c.bf16 %v1140, %v1140
      %v1142 = vld [vmem:[%s9] sm:$0xff]
      %v1143 = vld [vmem:[%s9 + $0x8] sm:$0xff]
      %v1144 = vld [vmem:[%s9 + $0x10] sm:$0xff]
      %v1145 = vld [vmem:[%s9 + $0x18] sm:$0xff]
      %v1146 = vld [vmem:[%s9 + $0x20] sm:$0xff]
      %v1147 = vld [vmem:[%s9 + $0x28] sm:$0xff]
      %v1148 = vpack.c.bf16 %v1143, %v1142
      %v1149 = vpack.c.bf16 %v1145, %v1144
      %v1150 = vpack.c.bf16 %v1147, %v1146
      %v1151 = vld [vmem:[%s10] sm:$0x1]
      %v1153 = vlaneseq
      %v1154 = vshrl.u32 %v1153, 7
      %v1155 = vsub.s32 0, %v1154
      %v1156 = vrot.slane %v1151, %v1155
      %v1159 = vsel %vm469, %v1141, 0
      %1161 = vmatprep.subr.bf16.mxu0 0
      %1162 = vmatpush1.bf16.msra.mxu0 %v1148
      %1163 = vmatprep.subr.bf16.mxu0 0
      %1164 = vmatpush1.bf16.msra.mxu0 %v1149
      %1165 = vmatprep.subr.bf16.mxu0 0
      %1166 = vmatpush1.bf16.msra.mxu0 %v1150
      %1167 = vmatprep.subr.bf16.mxu0 0
      %1168 = vmatpush1.bf16.msra.mxu0 0
      %1169 = vmatprep.subr.bf16.mxu0 0
      %1170 = vmatpush1.bf16.msra.mxu0 0
      %1171 = vmatprep.subr.bf16.mxu0 0
      %1172 = vmatpush1.bf16.msra.mxu0 0
      %1173 = vmatprep.subr.bf16.mxu0 0
      %1174 = vmatpush1.bf16.msra.mxu0 0
      %1175 = vmatprep.subr.bf16.mxu0 0
      %1176 = vmatpush1.bf16.msra.mxu0 0
      %1177 = vmatprep.subr.bf16.mxu0 0
      %1178 = vmatpush1.bf16.msra.mxu0 0
      %1179 = vmatprep.subr.bf16.mxu0 0
      %1180 = vmatpush1.bf16.msra.mxu0 0
      %1181 = vmatprep.subr.bf16.mxu0 0
      %1182 = vmatpush1.bf16.msra.mxu0 0
      %1183 = vmatprep.subr.bf16.mxu0 0
      %1184 = vmatpush1.bf16.msra.mxu0 0
      %1185 = vmatprep.subr.bf16.mxu0 0
      %1186 = vmatpush1.bf16.msra.mxu0 0
      %1187 = vmatprep.subr.bf16.mxu0 0
      %1188 = vmatpush1.bf16.msra.mxu0 0
      %1189 = vmatprep.subr.bf16.mxu0 0
      %1190 = vmatpush1.bf16.msra.mxu0 0
      %1191 = vmatprep.subr.bf16.mxu0 0
      %1192 = vmatpush1.bf16.msra.mxu0 0
      %1193 = vmatprep.mubr.bf16.mxu0 0
      %1194 = vmatmul.mubr.bf16.gmra.mrb[0].mxu0 %v1159
      %v1195 = vpop.f32.mrb[0].mxu0
      %v1196 = vadd.f32 %v1156, %v1195
      %v1197 = vpop.f32.mrb[0].mxu0
      %v1198 = vpop.f32.mrb[0].mxu0
      %v1199 = vpop.f32.mrb[0].mxu0
      %1200 = vdwg.mxu0
      %v1201 = vadd.f32 %v1079, %v1196
      %v1202 = vld [vmem:[%s11] sm:$0x1]
      %v1203 = vld [vmem:[%s12] sm:$0x1]
      %v1204 = vsel %vm1051, %v1201, 0.0
      %1205 = vadd.xlane.f32.xlu0 %v1204
      %v1206 = vpop.xlane.xlu0 %1205
      %v1207 = vmul.f32 %v1206, %v1055
      %v1208 = vsub.f32 %v1201, %v1207
      %v1209 = vmul.f32 %v1208, %v1208
      %v1210 = vsel %vm1051, %v1209, 0.0
      %1211 = vadd.xlane.f32.xlu0 %v1210
      %v1212 = vpop.xlane.xlu0 %1211
      %v1213 = vmul.f32 %v1212, %v1055
      %v1214 = vadd.f32 %v1213, 1e-05
      %v1215 = vrsqrt.pop %v1214
      %v1216 = vmul.f32 %v1208, %v1215
      %v1218 = vlaneseq
      %v1219 = vshrl.u32 %v1218, 7
      %v1220 = vsub.s32 0, %v1219
      %v1221 = vrot.slane %v1202, %v1220
      %v1223 = vmul.f32 %v1216, %v1221
      %v1225 = vlaneseq
      %v1226 = vshrl.u32 %v1225, 7
      %v1227 = vsub.s32 0, %v1226
      %v1228 = vrot.slane %v1203, %v1227
      %v1230 = vadd.f32 %v1223, %v1228
      %1231 = vst.msk [vmem:[%s435] sm:$0x7] %vm1051, %v1230
      %p1232 = scmp.lt.s32.totalorder %s24, 7
      %s1233 = scalar_select %p1232, %s24, 7
      %s1234 = smul.addr %s1233, 4
      %s1235 = scalar_lea.vmem %s13, %s1234
      // Predicated region
      $region73: #{hbp_forward.18} parent=71 // pred_check
        %p1236 = pneg %p320
      $region74: #{hbp_forward.18} parent=71 // pred_check_branch
        %1238 = sbr.rel (%p1236) target = $region76
      $region75: #{hbp_forward.18} parent=71 // pred_region
        _
      $region76: #{hbp_forward.18} parent=71 // pred_fallthru
        _
    $region72: #{hbp_forward.18} parent=5 // pred_fallthru
      _
    %p1239 = scmp.le.s32.totalorder 2, %s19
    // Predicated region
    $region77: #{hbp_forward.18} parent=5 // pred_check
      %p1240 = pneg %p1239
    $region78: #{hbp_forward.18} parent=5 // pred_check_branch
      %1242 = sbr.rel (%p1240) target = $region80
    $region79: #{hbp_forward.18} parent=5 // pred_region
      %s1243 = ssub.s32 %s19, 2
      // Predicated region
      $region81: #{hbp_forward.18} parent=79 // pred_check
        %p1244 = pneg %p326
      $region82: #{hbp_forward.18} parent=79 // pred_check_branch
        %1246 = sbr.rel (%p1244) target = $region84
      $region83: #{hbp_forward.18} parent=79 // pred_region
        %p1247 = scmp.lt.s32.totalorder %s25, 7
        %s1248 = scalar_select %p1247, %s25, 7
        %s1249 = smul.addr %s1248, 4
        %s1250 = scalar_lea.vmem %s13, %s1249
      $region84: #{hbp_forward.18} parent=79 // pred_fallthru
        _
    $region80: #{hbp_forward.18} parent=5 // pred_fallthru
      _
  $region6: #{hbp_forward.18} parent=0 // loop_footer
    %s23 = sadd.s32 1, %s19
  $region7: #{hbp_forward.18} parent=0 // loop_footer_branch
    %18 = sbr.rel target = $region3
  $region8: #{hbp_forward.18} parent=0 // loop_exit
    _

</llo_original>
